<compile_context>
chip_gen: v5e
topology: v5e:2x2
jax: 0.10.0
libtpu: 0.0.40
codegen_flags: <defaults>
</compile_context>

<pallas_src>
import functools

import jax
import jax.numpy as jnp
from jax.experimental import pallas as pl
from jax.experimental.pallas import tpu as pltpu

LANE = 128   # channel / packed-K dims padded to a multiple of this (dense vst / MXU lanes)
SUB = 8      # row dims padded to a multiple of this (sublane)

_LAYER_CFG = ((1, 0, "relu"), (2, 1, "relu"), (2, 1, "tanh"))   # (stride, padding, activation)


def _round_up(x, m):
    return (x + m - 1) // m * m


# ----------------------------- Pallas kernel -----------------------------

def _conv1_affine_act_kernel(n_taps, wp, act, x_ref, w_ref, ss_ref, o_ref):
    """Fused stride-1 conv row tile: KH shifted-slice matmuls (K packed as KW*Cin in lanes),
    f32 accumulation, per-channel affine (bias+BN folded), activation.

    x_ref : (1, Rin, Kp)       bf16 slab; lane dim packs (kw, cin); resident per batch element
    w_ref : (KH, Kp, Cout_p)   bf16 per-kernel-row weight slabs
    ss_ref: (8, Cout_p)        f32; row 0 = scale, row 1 = shift
    o_ref : (1, TR, Cout_p)    bf16 lane-dense output row tile
    """
    tr = o_ref.shape[1]
    base = pl.program_id(1) * tr                      # first output row of this tile (mult of 8)

    # tap 0 seeds the accumulator (no zeros init + extra VPU add)
    start = pl.multiple_of(base, SUB)
    acc = jnp.dot(x_ref[0, pl.ds(start, tr), :], w_ref[0],
                  preferred_element_type=jnp.float32)
    for kh in range(1, n_taps):                       # unrolled KH-tap accumulation (in-VMEM)
        start = pl.multiple_of(base + kh * wp, SUB)   # wp % 8 == 0 -> sublane-aligned slices
        acc = acc + jnp.dot(x_ref[0, pl.ds(start, tr), :], w_ref[kh],
                            preferred_element_type=jnp.float32)

    z = acc * ss_ref[0:1, :] + ss_ref[1:2, :]
    if act == "relu":
        z = jnp.maximum(z, 0.0)
    elif act == "tanh":
        z = jnp.tanh(z)
    o_ref[0] = z.astype(o_ref.dtype)


# --------------------------- generic stride-1 conv wrapper ----------------------------

def _conv_stride1_pallas(buf, w_taps, scale, shift, *, act, w_valid, tr_target=512):
    """Fused stride-1 conv (+ per-channel affine + activation).

    buf    : (N, Hp, Wfull, Cin)  zero-padded input, Wfull = Wp + KW - 1 with Wp % 8 == 0
    w_taps : (KH, KW, Cin, Cout)  equivalent stride-1 conv weights (already flipped / phase-folded)
    returns: (N, Hout, w_valid, Cout) bf16 with Hout = Hp - KH + 1
    """
    N, Hp, Wfull, Cin = buf.shape
    KH, KW, _, Cout = w_taps.shape
    Wp = Wfull - (KW - 1)
    assert Wp % SUB == 0
    Hout = Hp - (KH - 1)

    Kp = _round_up(KW * Cin, LANE)
    Cout_p = _round_up(Cout, LANE)

    # glue: lane-pack the KW taps next to the channels (no full k*k im2col, no zero dilation):
    #   slab[n, y*Wp + x, kw*Cin + c] = buf[n, y, x + kw, c]
    buf = buf.astype(jnp.bfloat16)
    slab = jnp.concatenate([buf[:, :, kw:kw + Wp, :] for kw in range(KW)], axis=-1)
    slab = slab.reshape(N, Hp * Wp, KW * Cin)

    # adaptive row tiling: one tile unless M is large enough to be worth pipelining
    M = Hout * Wp
    n_tiles = max(1, -(-M // tr_target))
    TR = _round_up(-(-M // n_tiles), SUB)
    M_pad = TR * n_tiles
    Rin = _round_up(M_pad + (KH - 1) * Wp, SUB)

    slab = jnp.pad(slab, ((0, 0), (0, Rin - Hp * Wp), (0, Kp - KW * Cin)))

    w2 = w_taps.astype(jnp.bfloat16).reshape(KH, KW * Cin, Cout)
    w2 = jnp.pad(w2, ((0, 0), (0, Kp - KW * Cin), (0, Cout_p - Cout)))

    ss = jnp.zeros((SUB, Cout_p), jnp.float32)
    ss = ss.at[0, :Cout].set(scale.astype(jnp.float32))
    ss = ss.at[1, :Cout].set(shift.astype(jnp.float32))

    kfn = functools.partial(_conv1_affine_act_kernel, KH, Wp, act)

    out_flat = pl.pallas_call(
        kfn,
        out_shape=jax.ShapeDtypeStruct((N, M_pad, Cout_p), jnp.bfloat16),
        grid=(N, n_tiles),
        in_specs=[
            # per-batch slab; index map constant in t -> stays resident across row tiles
            pl.BlockSpec((1, Rin, Kp), lambda n, t: (n, 0, 0)),
            # weights / scale-shift broadcast across the whole grid
            pl.BlockSpec((KH, Kp, Cout_p), lambda n, t: (0, 0, 0)),
            pl.BlockSpec((SUB, Cout_p), lambda n, t: (0, 0)),
        ],
        out_specs=pl.BlockSpec((1, TR, Cout_p), lambda n, t: (n, t, 0)),
        compiler_params=pltpu.CompilerParams(
            dimension_semantics=("parallel", "arbitrary")),   # v7x megacore splits on batch
    )(slab, w2, ss)

    out = out_flat[:, :M, :].reshape(N, Hout, Wp, Cout_p)
    return out[:, :, :w_valid, :Cout]


# --------------------------- per-layer glue ----------------------------

def _pad_into(x, hp, wfull, top, left):
    """Place x (N,H,W,C) into a zero (N, hp, wfull, C) buffer at row `top`, column `left`."""
    N, H, W, C = x.shape
    return jnp.pad(x, ((0, 0), (top, hp - top - H), (left, wfull - left - W), (0, 0)))


def _layer_plain(x, w, scale, shift, act):
    """ConvTranspose2d(kernel k, stride 1, padding 0) == stride-1 conv of the (k-1)-padded
    input with the spatially flipped, channel-transposed kernel."""
    N, H, W, Cin = x.shape
    _, Cout, KH, KW = w.shape
    pe = KH - 1                                           # k - 1 - p, with p = 0
    Hp = H + 2 * pe
    Wp = _round_up(W + 2 * pe, SUB)                       # sublane-aligned row pitch
    Wfull = Wp + KW - 1
    buf = _pad_into(x, Hp, Wfull, pe, pe)
    w_taps = jnp.transpose(w[:, :, ::-1, ::-1], (2, 3, 0, 1))   # (KH, KW, Cin, Cout), flipped
    Wout = W + 2 * pe - (KW - 1)
    return _conv_stride1_pallas(buf, w_taps, scale, shift, act=act, w_valid=Wout)


def _layer_phase2(x, w, scale, shift, act):
    """ConvTranspose2d(k=4, s=2, p=1) + affine + act via sub-pixel (phase) decomposition:
    one 3x3 stride-1 conv over the UNdilated 1-padded input producing 4*Cout phase channels,
    then a depth-to-space interleave in glue (no zero-dilated slab anywhere)."""
    N, H, W, Cin = x.shape
    _, Cout, KH, KW = w.shape
    assert (KH, KW) == (4, 4)

    # Folded 3x3 weights: tap (a, b) (input offset a-1, b-1) feeds output phase (dy, dx)
    # through kernel element (kh, kw) = (dy + 1 - 2*(a-1), dx + 1 - 2*(b-1)) when in range.
    w3 = jnp.zeros((3, 3, Cin, 4 * Cout), w.dtype)
    for a in range(3):
        for b in range(3):
            for dy in range(2):
                for dx in range(2):
                    kh = dy + 1 - 2 * (a - 1)
                    kw = dx + 1 - 2 * (b - 1)
                    if 0 <= kh < 4 and 0 <= kw < 4:
                        g = (dy * 2 + dx) * Cout
                        w3 = w3.at[a, b, :, g:g + Cout].set(w[:, :, kh, kw])

    Hp = H + 2
    Wp = _round_up(W + 2, SUB)
    Wfull = Wp + 2                                        # KW' - 1 = 2
    buf = _pad_into(x, Hp, Wfull, 1, 1)

    scale4 = jnp.tile(scale, 4)                           # phases share the per-channel affine
    shift4 = jnp.tile(shift, 4)
    z = _conv_stride1_pallas(buf, w3, scale4, shift4, act=act, w_valid=W)   # (N, H, W, 4*Cout)

    # depth-to-space: out[2m+dy, 2n+dx, co] = z[m, n, (2*dy+dx)*Cout + co]
    z = z.reshape(N, H, W, 2, 2, Cout)
    z = jnp.transpose(z, (0, 1, 3, 2, 4, 5)).reshape(N, 2 * H, 2 * W, Cout)
    return z


# ------------------------------- Generator --------------------------------

def generator_forward(params, x, *, eps=1e-5):
    """x: (N, embedded_dim, H, W) NCHW  ->  (N, channels_img, H', W') NCHW."""
    y = jnp.transpose(x, (0, 2, 3, 1)).astype(jnp.bfloat16)        # NHWC, bf16 hand-off
    kinds = ("plain", "phase", "phase")
    for i, (stride, padding, act) in enumerate(_LAYER_CFG):
        lp = params[f"layer{i}"]
        if act == "relu":
            # Fold ConvT bias + eval-mode BatchNorm into one per-channel affine.
            # TODO(synk): training-mode BatchNorm (batch statistics) is not fused here.
            inv = lp["gamma"] / jnp.sqrt(lp["var"] + eps)
            scale = inv
            shift = (lp["b"] - lp["mean"]) * inv + lp["beta"]
        else:
            scale = jnp.ones_like(lp["b"])
            shift = lp["b"]
        if kinds[i] == "plain":
            y = _layer_plain(y, lp["w"], scale, shift, act)
        else:
            y = _layer_phase2(y, lp["w"], scale, shift, act)
    return jnp.transpose(y.astype(jnp.float32), (0, 3, 1, 2))


def init_params(key, embedded_dim, channels_img, features_g):
    dims = [(embedded_dim, features_g * 2, 7),
            (features_g * 2, features_g, 4),
            (features_g, channels_img, 4)]
    keys = jax.random.split(key, len(dims) * 6)
    params = {}
    for i, (cin, cout, k) in enumerate(dims):
        kk = keys[i * 6:(i + 1) * 6]
        lp = dict(
            w=jax.random.normal(kk[0], (cin, cout, k, k), jnp.float32) * 0.05,
            b=jax.random.normal(kk[1], (cout,), jnp.float32) * 0.05,
        )
        if i < 2:   # layers followed by BatchNorm
            lp.update(
                gamma=1.0 + 0.1 * jax.random.normal(kk[2], (cout,), jnp.float32),
                beta=0.1 * jax.random.normal(kk[3], (cout,), jnp.float32),
                mean=0.1 * jax.random.normal(kk[4], (cout,), jnp.float32),
                var=jnp.abs(jax.random.normal(kk[5], (cout,), jnp.float32)) * 0.1 + 0.5,
            )
        params[f"layer{i}"] = lp
    return params


# ------------------- pure-JAX reference (mirrors PyTorch) ------------------

def _conv_transpose2d_ref(x, w, b, stride, padding):
    """Direct scatter definition of ConvTranspose2d.  x: (N,Cin,H,W); w: (Cin,Cout,k,k)."""
    N, Cin, H, W = x.shape
    _, Cout, KH, KW = w.shape
    s, p = stride, padding
    Hfull = (H - 1) * s + KH
    Wfull = (W - 1) * s + KW
    y = jnp.zeros((N, Cout, Hfull, Wfull), jnp.float32)
    for i in range(KH):
        for j in range(KW):
            contrib = jnp.einsum('nchw,cd->ndhw', x, w[:, :, i, j],
                                 precision=jax.lax.Precision.HIGHEST)
            y = y.at[:, :, i:i + (H - 1) * s + 1:s, j:j + (W - 1) * s + 1:s].add(contrib)
    Hout = (H - 1) * s - 2 * p + KH
    Wout = (W - 1) * s - 2 * p + KW
    y = y[:, :, p:p + Hout, p:p + Wout]
    return y + b.reshape(1, -1, 1, 1)


def reference_forward(params, x, *, eps=1e-5):
    def bn(y, lp):
        inv = (lp["gamma"] / jnp.sqrt(lp["var"] + eps)).reshape(1, -1, 1, 1)
        return (y - lp["mean"].reshape(1, -1, 1, 1)) * inv + lp["beta"].reshape(1, -1, 1, 1)

    y = x
    for i, (stride, padding, act) in enumerate(_LAYER_CFG):
        lp = params[f"layer{i}"]
        y = _conv_transpose2d_ref(y, lp["w"], lp["b"], stride, padding)
        if act == "relu":
            y = jax.nn.relu(bn(y, lp))
        else:
            y = jnp.tanh(y)
    return y


if __name__ == "__main__":
    key = jax.random.PRNGKey(0)
    kp, kx = jax.random.split(key)

    N, embedded_dim, channels_img, features_g = 2, 8, 3, 8
    H = W = 4
    params = init_params(kp, embedded_dim, channels_img, features_g)
    x = jax.random.normal(kx, (N, embedded_dim, H, W), jnp.float32)

    out = jax.jit(generator_forward)(params, x)
    out = jax.block_until_ready(out)

    ref = reference_forward(params, x)

    hh = (H + 6) * 4          # k7 s1 p0, then two k4 s2 p1
    assert out.shape == (N, channels_img, hh, hh), out.shape
    max_err = float(jnp.max(jnp.abs(out - ref)))
    # bf16 matmul operands (f32 accumulation) -> slightly looser tolerance than pure f32
    assert jnp.allclose(out, ref, atol=7.5e-2), max_err

    print("KERNEL_OK")
</pallas_src>

<mosaic_0001>
module attributes {stable_mosaic.version = 11 : i64} {
  func.func @_conv1_affine_act_kernel(%arg0: i32, %arg1: i32, %arg2: memref<1x256x128xbf16, #tpu.memory_space<vmem>>, %arg3: memref<7x128x128xbf16, #tpu.memory_space<vmem>>, %arg4: memref<8x128xf32, #tpu.memory_space<vmem>>, %arg5: memref<1x160x128xbf16, #tpu.memory_space<vmem>>) attributes {dimension_semantics = [#tpu.dimension_semantics<parallel>, #tpu.dimension_semantics<arbitrary>], iteration_bounds = array<i64: 2, 1>, scalar_prefetch = 0 : i64, scratch_operands = 0 : i64, tpu.core_type = #tpu.core_type<tc>, window_params = [{transform_indices = @transform_0, window_bounds = array<i64: 1, 256, 128>}, {pipeline_mode = #tpu.pipeline_mode<synchronous>, transform_indices = @transform_1, window_bounds = array<i64: 7, 128, 128>}, {pipeline_mode = #tpu.pipeline_mode<synchronous>, transform_indices = @transform_2, window_bounds = array<i64: 8, 128>}, {transform_indices = @transform_3, window_bounds = array<i64: 1, 160, 128>}]} {
    %c160_i32 = arith.constant 160 : i32
    %0 = arith.muli %arg1, %c160_i32 : i32
    %1 = tpu.assume_multiple %0, 8 : i32
    %c0 = arith.constant 0 : index
    %2 = arith.index_cast %1 : i32 to index
    %c0_0 = arith.constant 0 : index
    %3 = vector.load %arg2[%c0, %2, %c0_0] : memref<1x256x128xbf16, #tpu.memory_space<vmem>>, vector<1x160x128xbf16>
    %4 = vector.shape_cast %3 : vector<1x160x128xbf16> to vector<160x128xbf16>
    %c0_1 = arith.constant 0 : index
    %c0_2 = arith.constant 0 : index
    %c0_3 = arith.constant 0 : index
    %5 = vector.load %arg3[%c0_1, %c0_2, %c0_3] : memref<7x128x128xbf16, #tpu.memory_space<vmem>>, vector<1x128x128xbf16>
    %6 = vector.shape_cast %5 : vector<1x128x128xbf16> to vector<128x128xbf16>
    %cst = arith.constant dense<0.000000e+00> : vector<160x128xf32>
    %7 = tpu.matmul %4, %6, %cst {dimension_numbers = #tpu.dot_dimension_numbers<[1], [0], [0], [1], [0, 0, 1, 1], [], []>} : vector<160x128xbf16>, vector<128x128xbf16>, vector<160x128xf32> -> vector<160x128xf32>
    %c16_i32 = arith.constant 16 : i32
    %8 = arith.addi %0, %c16_i32 : i32
    %9 = tpu.assume_multiple %8, 8 : i32
    %c0_4 = arith.constant 0 : index
    %10 = arith.index_cast %9 : i32 to index
    %c0_5 = arith.constant 0 : index
    %11 = vector.load %arg2[%c0_4, %10, %c0_5] : memref<1x256x128xbf16, #tpu.memory_space<vmem>>, vector<1x160x128xbf16>
    %12 = vector.shape_cast %11 : vector<1x160x128xbf16> to vector<160x128xbf16>
    %c1 = arith.constant 1 : index
    %c0_6 = arith.constant 0 : index
    %c0_7 = arith.constant 0 : index
    %13 = vector.load %arg3[%c1, %c0_6, %c0_7] : memref<7x128x128xbf16, #tpu.memory_space<vmem>>, vector<1x128x128xbf16>
    %14 = vector.shape_cast %13 : vector<1x128x128xbf16> to vector<128x128xbf16>
    %cst_8 = arith.constant dense<0.000000e+00> : vector<160x128xf32>
    %15 = tpu.matmul %12, %14, %cst_8 {dimension_numbers = #tpu.dot_dimension_numbers<[1], [0], [0], [1], [0, 0, 1, 1], [], []>} : vector<160x128xbf16>, vector<128x128xbf16>, vector<160x128xf32> -> vector<160x128xf32>
    %16 = arith.addf %7, %15 : vector<160x128xf32>
    %c32_i32 = arith.constant 32 : i32
    %17 = arith.addi %0, %c32_i32 : i32
    %18 = tpu.assume_multiple %17, 8 : i32
    %c0_9 = arith.constant 0 : index
    %19 = arith.index_cast %18 : i32 to index
    %c0_10 = arith.constant 0 : index
    %20 = vector.load %arg2[%c0_9, %19, %c0_10] : memref<1x256x128xbf16, #tpu.memory_space<vmem>>, vector<1x160x128xbf16>
    %21 = vector.shape_cast %20 : vector<1x160x128xbf16> to vector<160x128xbf16>
    %c2 = arith.constant 2 : index
    %c0_11 = arith.constant 0 : index
    %c0_12 = arith.constant 0 : index
    %22 = vector.load %arg3[%c2, %c0_11, %c0_12] : memref<7x128x128xbf16, #tpu.memory_space<vmem>>, vector<1x128x128xbf16>
    %23 = vector.shape_cast %22 : vector<1x128x128xbf16> to vector<128x128xbf16>
    %cst_13 = arith.constant dense<0.000000e+00> : vector<160x128xf32>
    %24 = tpu.matmul %21, %23, %cst_13 {dimension_numbers = #tpu.dot_dimension_numbers<[1], [0], [0], [1], [0, 0, 1, 1], [], []>} : vector<160x128xbf16>, vector<128x128xbf16>, vector<160x128xf32> -> vector<160x128xf32>
    %25 = arith.addf %16, %24 : vector<160x128xf32>
    %c48_i32 = arith.constant 48 : i32
    %26 = arith.addi %0, %c48_i32 : i32
    %27 = tpu.assume_multiple %26, 8 : i32
    %c0_14 = arith.constant 0 : index
    %28 = arith.index_cast %27 : i32 to index
    %c0_15 = arith.constant 0 : index
    %29 = vector.load %arg2[%c0_14, %28, %c0_15] : memref<1x256x128xbf16, #tpu.memory_space<vmem>>, vector<1x160x128xbf16>
    %30 = vector.shape_cast %29 : vector<1x160x128xbf16> to vector<160x128xbf16>
    %c3 = arith.constant 3 : index
    %c0_16 = arith.constant 0 : index
    %c0_17 = arith.constant 0 : index
    %31 = vector.load %arg3[%c3, %c0_16, %c0_17] : memref<7x128x128xbf16, #tpu.memory_space<vmem>>, vector<1x128x128xbf16>
    %32 = vector.shape_cast %31 : vector<1x128x128xbf16> to vector<128x128xbf16>
    %cst_18 = arith.constant dense<0.000000e+00> : vector<160x128xf32>
    %33 = tpu.matmul %30, %32, %cst_18 {dimension_numbers = #tpu.dot_dimension_numbers<[1], [0], [0], [1], [0, 0, 1, 1], [], []>} : vector<160x128xbf16>, vector<128x128xbf16>, vector<160x128xf32> -> vector<160x128xf32>
    %34 = arith.addf %25, %33 : vector<160x128xf32>
    %c64_i32 = arith.constant 64 : i32
    %35 = arith.addi %0, %c64_i32 : i32
    %36 = tpu.assume_multiple %35, 8 : i32
    %c0_19 = arith.constant 0 : index
    %37 = arith.index_cast %36 : i32 to index
    %c0_20 = arith.constant 0 : index
    %38 = vector.load %arg2[%c0_19, %37, %c0_20] : memref<1x256x128xbf16, #tpu.memory_space<vmem>>, vector<1x160x128xbf16>
    %39 = vector.shape_cast %38 : vector<1x160x128xbf16> to vector<160x128xbf16>
    %c4 = arith.constant 4 : index
    %c0_21 = arith.constant 0 : index
    %c0_22 = arith.constant 0 : index
    %40 = vector.load %arg3[%c4, %c0_21, %c0_22] : memref<7x128x128xbf16, #tpu.memory_space<vmem>>, vector<1x128x128xbf16>
    %41 = vector.shape_cast %40 : vector<1x128x128xbf16> to vector<128x128xbf16>
    %cst_23 = arith.constant dense<0.000000e+00> : vector<160x128xf32>
    %42 = tpu.matmul %39, %41, %cst_23 {dimension_numbers = #tpu.dot_dimension_numbers<[1], [0], [0], [1], [0, 0, 1, 1], [], []>} : vector<160x128xbf16>, vector<128x128xbf16>, vector<160x128xf32> -> vector<160x128xf32>
    %43 = arith.addf %34, %42 : vector<160x128xf32>
    %c80_i32 = arith.constant 80 : i32
    %44 = arith.addi %0, %c80_i32 : i32
    %45 = tpu.assume_multiple %44, 8 : i32
    %c0_24 = arith.constant 0 : index
    %46 = arith.index_cast %45 : i32 to index
    %c0_25 = arith.constant 0 : index
    %47 = vector.load %arg2[%c0_24, %46, %c0_25] : memref<1x256x128xbf16, #tpu.memory_space<vmem>>, vector<1x160x128xbf16>
    %48 = vector.shape_cast %47 : vector<1x160x128xbf16> to vector<160x128xbf16>
    %c5 = arith.constant 5 : index
    %c0_26 = arith.constant 0 : index
    %c0_27 = arith.constant 0 : index
    %49 = vector.load %arg3[%c5, %c0_26, %c0_27] : memref<7x128x128xbf16, #tpu.memory_space<vmem>>, vector<1x128x128xbf16>
    %50 = vector.shape_cast %49 : vector<1x128x128xbf16> to vector<128x128xbf16>
    %cst_28 = arith.constant dense<0.000000e+00> : vector<160x128xf32>
    %51 = tpu.matmul %48, %50, %cst_28 {dimension_numbers = #tpu.dot_dimension_numbers<[1], [0], [0], [1], [0, 0, 1, 1], [], []>} : vector<160x128xbf16>, vector<128x128xbf16>, vector<160x128xf32> -> vector<160x128xf32>
    %52 = arith.addf %43, %51 : vector<160x128xf32>
    %c96_i32 = arith.constant 96 : i32
    %53 = arith.addi %0, %c96_i32 : i32
    %54 = tpu.assume_multiple %53, 8 : i32
    %c0_29 = arith.constant 0 : index
    %55 = arith.index_cast %54 : i32 to index
    %c0_30 = arith.constant 0 : index
    %56 = vector.load %arg2[%c0_29, %55, %c0_30] : memref<1x256x128xbf16, #tpu.memory_space<vmem>>, vector<1x160x128xbf16>
    %57 = vector.shape_cast %56 : vector<1x160x128xbf16> to vector<160x128xbf16>
    %c6 = arith.constant 6 : index
    %c0_31 = arith.constant 0 : index
    %c0_32 = arith.constant 0 : index
    %58 = vector.load %arg3[%c6, %c0_31, %c0_32] : memref<7x128x128xbf16, #tpu.memory_space<vmem>>, vector<1x128x128xbf16>
    %59 = vector.shape_cast %58 : vector<1x128x128xbf16> to vector<128x128xbf16>
    %cst_33 = arith.constant dense<0.000000e+00> : vector<160x128xf32>
    %60 = tpu.matmul %57, %59, %cst_33 {dimension_numbers = #tpu.dot_dimension_numbers<[1], [0], [0], [1], [0, 0, 1, 1], [], []>} : vector<160x128xbf16>, vector<128x128xbf16>, vector<160x128xf32> -> vector<160x128xf32>
    %61 = arith.addf %52, %60 : vector<160x128xf32>
    %c0_34 = arith.constant 0 : index
    %c0_35 = arith.constant 0 : index
    %62 = vector.load %arg4[%c0_34, %c0_35] : memref<8x128xf32, #tpu.memory_space<vmem>>, vector<1x128xf32>
    %63 = vector.broadcast %62 : vector<1x128xf32> to vector<160x128xf32>
    %64 = arith.mulf %61, %63 : vector<160x128xf32>
    %c1_36 = arith.constant 1 : index
    %c0_37 = arith.constant 0 : index
    %65 = vector.load %arg4[%c1_36, %c0_37] : memref<8x128xf32, #tpu.memory_space<vmem>>, vector<1x128xf32>
    %66 = vector.broadcast %65 : vector<1x128xf32> to vector<160x128xf32>
    %67 = arith.addf %64, %66 : vector<160x128xf32>
    %cst_38 = arith.constant 0.000000e+00 : f32
    %68 = vector.broadcast %cst_38 : f32 to vector<160x128xf32>
    %69 = arith.maximumf %67, %68 : vector<160x128xf32>
    %70 = arith.truncf %69 : vector<160x128xf32> to vector<160x128xbf16>
    %c0_39 = arith.constant 0 : index
    %c0_40 = arith.constant 0 : index
    %c0_41 = arith.constant 0 : index
    %71 = vector.load %arg5[%c0_39, %c0_40, %c0_41] : memref<1x160x128xbf16, #tpu.memory_space<vmem>>, vector<1x160x128xbf16>
    %72 = vector.shape_cast %71 : vector<1x160x128xbf16> to vector<160x128xbf16>
    %73 = vector.shape_cast %70 : vector<160x128xbf16> to vector<1x160x128xbf16>
    tpu.vector_store %arg5[%c0_39, %c0_40, %c0_41], %73 {strides = array<i32>} : memref<1x160x128xbf16, #tpu.memory_space<vmem>>, vector<1x160x128xbf16>,
    return
  }
  func.func @transform_0(%arg0: i32, %arg1: i32) -> (i32, i32, i32) {
    %c0_i32 = arith.constant 0 : i32
    %c0_i32_0 = arith.constant 0 : i32
    %c0_i32_1 = arith.constant 0 : i32
    return %arg0, %c0_i32, %c0_i32_0 : i32, i32, i32
  }
  func.func @transform_1(%arg0: i32, %arg1: i32) -> (i32, i32, i32) {
    %c0_i32 = arith.constant 0 : i32
    %c0_i32_0 = arith.constant 0 : i32
    %c0_i32_1 = arith.constant 0 : i32
    %c0_i32_2 = arith.constant 0 : i32
    return %c0_i32, %c0_i32_0, %c0_i32_1 : i32, i32, i32
  }
  func.func @transform_2(%arg0: i32, %arg1: i32) -> (i32, i32) {
    %c0_i32 = arith.constant 0 : i32
    %c0_i32_0 = arith.constant 0 : i32
    %c0_i32_1 = arith.constant 0 : i32
    return %c0_i32, %c0_i32_0 : i32, i32
  }
  func.func @transform_3(%arg0: i32, %arg1: i32) -> (i32, i32, i32) {
    %c0_i32 = arith.constant 0 : i32
    %c0_i32_0 = arith.constant 0 : i32
    return %arg0, %arg1, %c0_i32 : i32, i32, i32
  }
}

module attributes {stable_mosaic.version = 11 : i64} {
  func.func @_conv1_affine_act_kernel(%arg0: i32, %arg1: i32, %arg2: memref<1x192x128xbf16, #tpu.memory_space<vmem>>, %arg3: memref<3x128x128xbf16, #tpu.memory_space<vmem>>, %arg4: memref<8x128xf32, #tpu.memory_space<vmem>>, %arg5: memref<1x160x128xbf16, #tpu.memory_space<vmem>>) attributes {dimension_semantics = [#tpu.dimension_semantics<parallel>, #tpu.dimension_semantics<arbitrary>], iteration_bounds = array<i64: 2, 1>, scalar_prefetch = 0 : i64, scratch_operands = 0 : i64, tpu.core_type = #tpu.core_type<tc>, window_params = [{transform_indices = @transform_0, window_bounds = array<i64: 1, 192, 128>}, {pipeline_mode = #tpu.pipeline_mode<synchronous>, transform_indices = @transform_1, window_bounds = array<i64: 3, 128, 128>}, {pipeline_mode = #tpu.pipeline_mode<synchronous>, transform_indices = @transform_2, window_bounds = array<i64: 8, 128>}, {transform_indices = @transform_3, window_bounds = array<i64: 1, 160, 128>}]} {
    %c160_i32 = arith.constant 160 : i32
    %0 = arith.muli %arg1, %c160_i32 : i32
    %1 = tpu.assume_multiple %0, 8 : i32
    %c0 = arith.constant 0 : index
    %2 = arith.index_cast %1 : i32 to index
    %c0_0 = arith.constant 0 : index
    %3 = vector.load %arg2[%c0, %2, %c0_0] : memref<1x192x128xbf16, #tpu.memory_space<vmem>>, vector<1x160x128xbf16>
    %4 = vector.shape_cast %3 : vector<1x160x128xbf16> to vector<160x128xbf16>
    %c0_1 = arith.constant 0 : index
    %c0_2 = arith.constant 0 : index
    %c0_3 = arith.constant 0 : index
    %5 = vector.load %arg3[%c0_1, %c0_2, %c0_3] : memref<3x128x128xbf16, #tpu.memory_space<vmem>>, vector<1x128x128xbf16>
    %6 = vector.shape_cast %5 : vector<1x128x128xbf16> to vector<128x128xbf16>
    %cst = arith.constant dense<0.000000e+00> : vector<160x128xf32>
    %7 = tpu.matmul %4, %6, %cst {dimension_numbers = #tpu.dot_dimension_numbers<[1], [0], [0], [1], [0, 0, 1, 1], [], []>} : vector<160x128xbf16>, vector<128x128xbf16>, vector<160x128xf32> -> vector<160x128xf32>
    %c16_i32 = arith.constant 16 : i32
    %8 = arith.addi %0, %c16_i32 : i32
    %9 = tpu.assume_multiple %8, 8 : i32
    %c0_4 = arith.constant 0 : index
    %10 = arith.index_cast %9 : i32 to index
    %c0_5 = arith.constant 0 : index
    %11 = vector.load %arg2[%c0_4, %10, %c0_5] : memref<1x192x128xbf16, #tpu.memory_space<vmem>>, vector<1x160x128xbf16>
    %12 = vector.shape_cast %11 : vector<1x160x128xbf16> to vector<160x128xbf16>
    %c1 = arith.constant 1 : index
    %c0_6 = arith.constant 0 : index
    %c0_7 = arith.constant 0 : index
    %13 = vector.load %arg3[%c1, %c0_6, %c0_7] : memref<3x128x128xbf16, #tpu.memory_space<vmem>>, vector<1x128x128xbf16>
    %14 = vector.shape_cast %13 : vector<1x128x128xbf16> to vector<128x128xbf16>
    %cst_8 = arith.constant dense<0.000000e+00> : vector<160x128xf32>
    %15 = tpu.matmul %12, %14, %cst_8 {dimension_numbers = #tpu.dot_dimension_numbers<[1], [0], [0], [1], [0, 0, 1, 1], [], []>} : vector<160x128xbf16>, vector<128x128xbf16>, vector<160x128xf32> -> vector<160x128xf32>
    %16 = arith.addf %7, %15 : vector<160x128xf32>
    %c32_i32 = arith.constant 32 : i32
    %17 = arith.addi %0, %c32_i32 : i32
    %18 = tpu.assume_multiple %17, 8 : i32
    %c0_9 = arith.constant 0 : index
    %19 = arith.index_cast %18 : i32 to index
    %c0_10 = arith.constant 0 : index
    %20 = vector.load %arg2[%c0_9, %19, %c0_10] : memref<1x192x128xbf16, #tpu.memory_space<vmem>>, vector<1x160x128xbf16>
    %21 = vector.shape_cast %20 : vector<1x160x128xbf16> to vector<160x128xbf16>
    %c2 = arith.constant 2 : index
    %c0_11 = arith.constant 0 : index
    %c0_12 = arith.constant 0 : index
    %22 = vector.load %arg3[%c2, %c0_11, %c0_12] : memref<3x128x128xbf16, #tpu.memory_space<vmem>>, vector<1x128x128xbf16>
    %23 = vector.shape_cast %22 : vector<1x128x128xbf16> to vector<128x128xbf16>
    %cst_13 = arith.constant dense<0.000000e+00> : vector<160x128xf32>
    %24 = tpu.matmul %21, %23, %cst_13 {dimension_numbers = #tpu.dot_dimension_numbers<[1], [0], [0], [1], [0, 0, 1, 1], [], []>} : vector<160x128xbf16>, vector<128x128xbf16>, vector<160x128xf32> -> vector<160x128xf32>
    %25 = arith.addf %16, %24 : vector<160x128xf32>
    %c0_14 = arith.constant 0 : index
    %c0_15 = arith.constant 0 : index
    %26 = vector.load %arg4[%c0_14, %c0_15] : memref<8x128xf32, #tpu.memory_space<vmem>>, vector<1x128xf32>
    %27 = vector.broadcast %26 : vector<1x128xf32> to vector<160x128xf32>
    %28 = arith.mulf %25, %27 : vector<160x128xf32>
    %c1_16 = arith.constant 1 : index
    %c0_17 = arith.constant 0 : index
    %29 = vector.load %arg4[%c1_16, %c0_17] : memref<8x128xf32, #tpu.memory_space<vmem>>, vector<1x128xf32>
    %30 = vector.broadcast %29 : vector<1x128xf32> to vector<160x128xf32>
    %31 = arith.addf %28, %30 : vector<160x128xf32>
    %cst_18 = arith.constant 0.000000e+00 : f32
    %32 = vector.broadcast %cst_18 : f32 to vector<160x128xf32>
    %33 = arith.maximumf %31, %32 : vector<160x128xf32>
    %34 = arith.truncf %33 : vector<160x128xf32> to vector<160x128xbf16>
    %c0_19 = arith.constant 0 : index
    %c0_20 = arith.constant 0 : index
    %c0_21 = arith.constant 0 : index
    %35 = vector.load %arg5[%c0_19, %c0_20, %c0_21] : memref<1x160x128xbf16, #tpu.memory_space<vmem>>, vector<1x160x128xbf16>
    %36 = vector.shape_cast %35 : vector<1x160x128xbf16> to vector<160x128xbf16>
    %37 = vector.shape_cast %34 : vector<160x128xbf16> to vector<1x160x128xbf16>
    tpu.vector_store %arg5[%c0_19, %c0_20, %c0_21], %37 {strides = array<i32>} : memref<1x160x128xbf16, #tpu.memory_space<vmem>>, vector<1x160x128xbf16>,
    return
  }
  func.func @transform_0(%arg0: i32, %arg1: i32) -> (i32, i32, i32) {
    %c0_i32 = arith.constant 0 : i32
    %c0_i32_0 = arith.constant 0 : i32
    %c0_i32_1 = arith.constant 0 : i32
    return %arg0, %c0_i32, %c0_i32_0 : i32, i32, i32
  }
  func.func @transform_1(%arg0: i32, %arg1: i32) -> (i32, i32, i32) {
    %c0_i32 = arith.constant 0 : i32
    %c0_i32_0 = arith.constant 0 : i32
    %c0_i32_1 = arith.constant 0 : i32
    %c0_i32_2 = arith.constant 0 : i32
    return %c0_i32, %c0_i32_0, %c0_i32_1 : i32, i32, i32
  }
  func.func @transform_2(%arg0: i32, %arg1: i32) -> (i32, i32) {
    %c0_i32 = arith.constant 0 : i32
    %c0_i32_0 = arith.constant 0 : i32
    %c0_i32_1 = arith.constant 0 : i32
    return %c0_i32, %c0_i32_0 : i32, i32
  }
  func.func @transform_3(%arg0: i32, %arg1: i32) -> (i32, i32, i32) {
    %c0_i32 = arith.constant 0 : i32
    %c0_i32_0 = arith.constant 0 : i32
    return %arg0, %arg1, %c0_i32 : i32, i32, i32
  }
}

module attributes {stable_mosaic.version = 11 : i64} {
  func.func @_conv1_affine_act_kernel(%arg0: i32, %arg1: i32, %arg2: memref<1x528x128xbf16, #tpu.memory_space<vmem>>, %arg3: memref<3x128x128xbf16, #tpu.memory_space<vmem>>, %arg4: memref<8x128xf32, #tpu.memory_space<vmem>>, %arg5: memref<1x480x128xbf16, #tpu.memory_space<vmem>>) attributes {dimension_semantics = [#tpu.dimension_semantics<parallel>, #tpu.dimension_semantics<arbitrary>], iteration_bounds = array<i64: 2, 1>, scalar_prefetch = 0 : i64, scratch_operands = 0 : i64, tpu.core_type = #tpu.core_type<tc>, window_params = [{transform_indices = @transform_0, window_bounds = array<i64: 1, 528, 128>}, {pipeline_mode = #tpu.pipeline_mode<synchronous>, transform_indices = @transform_1, window_bounds = array<i64: 3, 128, 128>}, {pipeline_mode = #tpu.pipeline_mode<synchronous>, transform_indices = @transform_2, window_bounds = array<i64: 8, 128>}, {transform_indices = @transform_3, window_bounds = array<i64: 1, 480, 128>}]} {
    %c480_i32 = arith.constant 480 : i32
    %0 = arith.muli %arg1, %c480_i32 : i32
    %1 = tpu.assume_multiple %0, 8 : i32
    %c0 = arith.constant 0 : index
    %2 = arith.index_cast %1 : i32 to index
    %c0_0 = arith.constant 0 : index
    %3 = vector.load %arg2[%c0, %2, %c0_0] : memref<1x528x128xbf16, #tpu.memory_space<vmem>>, vector<1x480x128xbf16>
    %4 = vector.shape_cast %3 : vector<1x480x128xbf16> to vector<480x128xbf16>
    %c0_1 = arith.constant 0 : index
    %c0_2 = arith.constant 0 : index
    %c0_3 = arith.constant 0 : index
    %5 = vector.load %arg3[%c0_1, %c0_2, %c0_3] : memref<3x128x128xbf16, #tpu.memory_space<vmem>>, vector<1x128x128xbf16>
    %6 = vector.shape_cast %5 : vector<1x128x128xbf16> to vector<128x128xbf16>
    %cst = arith.constant dense<0.000000e+00> : vector<480x128xf32>
    %7 = tpu.matmul %4, %6, %cst {dimension_numbers = #tpu.dot_dimension_numbers<[1], [0], [0], [1], [0, 0, 1, 1], [], []>} : vector<480x128xbf16>, vector<128x128xbf16>, vector<480x128xf32> -> vector<480x128xf32>
    %c24_i32 = arith.constant 24 : i32
    %8 = arith.addi %0, %c24_i32 : i32
    %9 = tpu.assume_multiple %8, 8 : i32
    %c0_4 = arith.constant 0 : index
    %10 = arith.index_cast %9 : i32 to index
    %c0_5 = arith.constant 0 : index
    %11 = vector.load %arg2[%c0_4, %10, %c0_5] : memref<1x528x128xbf16, #tpu.memory_space<vmem>>, vector<1x480x128xbf16>
    %12 = vector.shape_cast %11 : vector<1x480x128xbf16> to vector<480x128xbf16>
    %c1 = arith.constant 1 : index
    %c0_6 = arith.constant 0 : index
    %c0_7 = arith.constant 0 : index
    %13 = vector.load %arg3[%c1, %c0_6, %c0_7] : memref<3x128x128xbf16, #tpu.memory_space<vmem>>, vector<1x128x128xbf16>
    %14 = vector.shape_cast %13 : vector<1x128x128xbf16> to vector<128x128xbf16>
    %cst_8 = arith.constant dense<0.000000e+00> : vector<480x128xf32>
    %15 = tpu.matmul %12, %14, %cst_8 {dimension_numbers = #tpu.dot_dimension_numbers<[1], [0], [0], [1], [0, 0, 1, 1], [], []>} : vector<480x128xbf16>, vector<128x128xbf16>, vector<480x128xf32> -> vector<480x128xf32>
    %16 = arith.addf %7, %15 : vector<480x128xf32>
    %c48_i32 = arith.constant 48 : i32
    %17 = arith.addi %0, %c48_i32 : i32
    %18 = tpu.assume_multiple %17, 8 : i32
    %c0_9 = arith.constant 0 : index
    %19 = arith.index_cast %18 : i32 to index
    %c0_10 = arith.constant 0 : index
    %20 = vector.load %arg2[%c0_9, %19, %c0_10] : memref<1x528x128xbf16, #tpu.memory_space<vmem>>, vector<1x480x128xbf16>
    %21 = vector.shape_cast %20 : vector<1x480x128xbf16> to vector<480x128xbf16>
    %c2 = arith.constant 2 : index
    %c0_11 = arith.constant 0 : index
    %c0_12 = arith.constant 0 : index
    %22 = vector.load %arg3[%c2, %c0_11, %c0_12] : memref<3x128x128xbf16, #tpu.memory_space<vmem>>, vector<1x128x128xbf16>
    %23 = vector.shape_cast %22 : vector<1x128x128xbf16> to vector<128x128xbf16>
    %cst_13 = arith.constant dense<0.000000e+00> : vector<480x128xf32>
    %24 = tpu.matmul %21, %23, %cst_13 {dimension_numbers = #tpu.dot_dimension_numbers<[1], [0], [0], [1], [0, 0, 1, 1], [], []>} : vector<480x128xbf16>, vector<128x128xbf16>, vector<480x128xf32> -> vector<480x128xf32>
    %25 = arith.addf %16, %24 : vector<480x128xf32>
    %c0_14 = arith.constant 0 : index
    %c0_15 = arith.constant 0 : index
    %26 = vector.load %arg4[%c0_14, %c0_15] : memref<8x128xf32, #tpu.memory_space<vmem>>, vector<1x128xf32>
    %27 = vector.broadcast %26 : vector<1x128xf32> to vector<480x128xf32>
    %28 = arith.mulf %25, %27 : vector<480x128xf32>
    %c1_16 = arith.constant 1 : index
    %c0_17 = arith.constant 0 : index
    %29 = vector.load %arg4[%c1_16, %c0_17] : memref<8x128xf32, #tpu.memory_space<vmem>>, vector<1x128xf32>
    %30 = vector.broadcast %29 : vector<1x128xf32> to vector<480x128xf32>
    %31 = arith.addf %28, %30 : vector<480x128xf32>
    %32 = math.tanh %31 : vector<480x128xf32>
    %33 = arith.truncf %32 : vector<480x128xf32> to vector<480x128xbf16>
    %c0_18 = arith.constant 0 : index
    %c0_19 = arith.constant 0 : index
    %c0_20 = arith.constant 0 : index
    %34 = vector.load %arg5[%c0_18, %c0_19, %c0_20] : memref<1x480x128xbf16, #tpu.memory_space<vmem>>, vector<1x480x128xbf16>
    %35 = vector.shape_cast %34 : vector<1x480x128xbf16> to vector<480x128xbf16>
    %36 = vector.shape_cast %33 : vector<480x128xbf16> to vector<1x480x128xbf16>
    tpu.vector_store %arg5[%c0_18, %c0_19, %c0_20], %36 {strides = array<i32>} : memref<1x480x128xbf16, #tpu.memory_space<vmem>>, vector<1x480x128xbf16>,
    return
  }
  func.func @transform_0(%arg0: i32, %arg1: i32) -> (i32, i32, i32) {
    %c0_i32 = arith.constant 0 : i32
    %c0_i32_0 = arith.constant 0 : i32
    %c0_i32_1 = arith.constant 0 : i32
    return %arg0, %c0_i32, %c0_i32_0 : i32, i32, i32
  }
  func.func @transform_1(%arg0: i32, %arg1: i32) -> (i32, i32, i32) {
    %c0_i32 = arith.constant 0 : i32
    %c0_i32_0 = arith.constant 0 : i32
    %c0_i32_1 = arith.constant 0 : i32
    %c0_i32_2 = arith.constant 0 : i32
    return %c0_i32, %c0_i32_0, %c0_i32_1 : i32, i32, i32
  }
  func.func @transform_2(%arg0: i32, %arg1: i32) -> (i32, i32) {
    %c0_i32 = arith.constant 0 : i32
    %c0_i32_0 = arith.constant 0 : i32
    %c0_i32_1 = arith.constant 0 : i32
    return %c0_i32, %c0_i32_0 : i32, i32
  }
  func.func @transform_3(%arg0: i32, %arg1: i32) -> (i32, i32, i32) {
    %c0_i32 = arith.constant 0 : i32
    %c0_i32_0 = arith.constant 0 : i32
    return %arg0, %arg1, %c0_i32 : i32, i32, i32
  }
}

</mosaic_0001>

<llo_original>
// kernel: tile.23
$region0: #{tile.23}
  #allocation0 [shape = 's32[1]{0}', space=sflag, size = 0x4, scoped, tag = 'scoped memory for tile.23']
  %s0 = inlined_call_operand.vmem [shape: f32[8], index: 0, kind: input, shape index: {}]
  %s1 = inlined_call_operand.vmem [shape: f32[4,8], index: 1, kind: output, shape index: {}]
  // Predicated region
  $region2: #{tile.23} parent=0 // pred_check
    _
  $region3: #{tile.23} parent=0 // pred_check_branch
    %3 = sbr.rel (0) target = $region5
  $region4: #{tile.23} parent=0 // pred_region
    _
  $region5: #{tile.23} parent=0 // pred_fallthru
    _
  %v4 = vld [vmem:[%s0] ss:$0 sm:$0xff]
  %5 = vst [vmem:[%s1] sm:$0xf] %v4

// kernel: tile.28
$region0: #{tile.28}
  #allocation2 [shape = 's32[1]{0}', space=sflag, size = 0x4, scoped, tag = 'scoped memory for tile.28']
  %s0 = inlined_call_operand.hbm [shape: f32[3], index: 0, kind: input, shape index: {}]
  %s1 = inlined_call_operand.vmem [shape: f32[4,3], index: 1, kind: output, shape index: {}]
  $region1: #{tile.28} parent=0
    #allocation0 [shape = 'u8[512]{0}', space=vmem, size = 0x400, scoped, tag = 'operand span for operand 0']
    #allocation1 [shape = 's32[1]{0}', space=sflag, size = 0x4, scoped, tag = 'scoped memory for tile.28']
    %2 = vsyncpa [#allocation1], 0
    // Predicated region
    $region2: #{tile.28} parent=1 // pred_check
      _
    $region3: #{tile.28} parent=1 // pred_check_branch
      %4 = sbr.rel (0) target = $region5
    $region4: #{tile.28} parent=1 // pred_region
      %6 = vsyncadd [#allocation1], 0
      %s8 = sshll.u32 %s0, 4
      %s9 = int_to_ptr.hbm [resolvable:$true] %s8
      %s10 = sshll.u32 [#allocation0], 4
      %s11 = int_to_ptr.vmem [resolvable:$true] %s10
      %13 = dma.hbm_to_vmem [thread:$0]  %s9, 16, %s11, [#allocation1]
    $region5: #{tile.28} parent=1 // pred_fallthru
      _
    // Predicated region
    $region6: #{tile.28} parent=1 // pred_check
      _
    $region7: #{tile.28} parent=1 // pred_check_branch
      %15 = sbr.rel (0) target = $region9
    $region8: #{tile.28} parent=1 // pred_region
      %17 = dma.done [#allocation1], 16
    $region9: #{tile.28} parent=1 // pred_fallthru
      _
    %v18 = vld [vmem:[#allocation0] ss:$0 sm:$0xff]
    %19 = vst [vmem:[%s1] sm:$0xf] %v18
    %20 = vsyncpa [#allocation1], 1

// kernel: generator_forward.3
$region0: #{generator_forward.3}
  #allocation0 [shape = 'u32[]', space=smem, size = 0x4, offset = 0x4, fixed_abs, tag = 'smem constant byte address 0x4 - core index']
  #allocation1 [shape = 'u32[72,128]{1,0:T(1,128)}', space=vmem, size = 0x9000, scoped, tag = 'internal scratch']
  %s0 = inlined_call_operand.vmem [shape: bf16[2,256,128], index: 0, kind: input, shape index: {}]
  %s1 = inlined_call_operand.vmem [shape: bf16[7,128,128], index: 1, kind: input, shape index: {}]
  %s2 = inlined_call_operand.vmem [shape: f32[8,128], index: 2, kind: input, shape index: {}]
  %s3 = inlined_call_operand.vmem [shape: bf16[2,160,128], index: 3, kind: output, shape index: {}]
  %s4 = sld [smem:[#allocation0]]
  $region45: #{generator_forward.3} parent=0
    _
  %s6 = ssub.s32 1, %s4
  %s7 = scalar_select 0, %s6, %s4
  loop: start=0, step=1, limit=4
  $region2: #{generator_forward.3} parent=0 // loop_pre_header
    _
  $region3: #{generator_forward.3} parent=0 // loop_header
    %s9 = sphi 0, %s13
    %p10 = scmp.ge.s32.totalorder %s9, 4
    %s16 = sphi 0, %s28
    %s17 = sphi 0, %s24
    %s18 = sphi 0, %s16
    %s19 = sphi 0, %s17
    %s20 = sphi 0, %s18
    %s21 = sphi 0, %s19
    %s31 = sphi 0, %s33
    %s34 = sphi 0, %s31
    %s35 = sphi 0, %s34
    %s51 = sphi 0, %s35
    %s55 = sphi 0, %s55
    %s57 = sphi 0, %s55
    %s58 = sphi 0, %s57
    %s72 = sphi 0, %s58
    %s76 = sphi 0, %s76
    %s78 = sphi 0, %s76
    %s79 = sphi 0, %s78
    %s93 = sphi 0, %s79
    %s101 = sphi 0, %s103
    %s104 = sphi 0, %s101
    %s105 = sphi 0, %s104
    %s121 = sphi 0, %s105
  $region4: #{generator_forward.3} parent=0 // loop_header_branch
    %12 = sbr.rel (%p10) target = $region8
  $region5: #{generator_forward.3} parent=0 // loop_body
    %s14 = ssub.s32 %s9, 1
    %s15 = ssub.s32 %s9, 2
    %s22 = sadd.s32 1, %s17
    %p23 = scmp.ge.s32.totalorder %s22, 1
    %s24 = scalar_select %p23, 0, %s22
    %s25 = sadd.s32 1, %s16
    %s26 = scalar_select %p23, %s25, %s16
    %p27 = scmp.ge.s32.totalorder %s26, 2
    %s28 = scalar_select %p27, 0, %s26
    %s29 = ssub.s32 %s16, %s28
    %p30 = scmp.eq.s32.totalorder %s29, 0
    %s32 = sadd.s32 %s31, 1
    %s33 = scalar_select %p30, %s31, %s32
    %p36 = pneg %p30
    %p37 = scmp.eq.s32.totalorder %s9, 1
    %p38 = por %p36, %p37
    %p39 = scmp.ne.s32.totalorder %s31, %s34
    %p40 = scmp.eq.s32.totalorder %s9, 0
    %p41 = por %p39, %p40
    %p42 = scmp.ne.s32.totalorder %s31, %s34
    %p43 = scmp.eq.s32.totalorder %s14, 1
    %p44 = por %p42, %p43
    %p45 = scmp.ne.s32.totalorder %s34, %s35
    %p46 = scmp.eq.s32.totalorder %s14, 0
    %p47 = por %p45, %p46
    %p48 = scmp.ne.s32.totalorder %s34, %s35
    %p49 = scmp.eq.s32.totalorder %s15, 1
    %p50 = por %p48, %p49
    %p52 = scmp.ne.s32.totalorder %s35, %s51
    %p53 = scmp.eq.s32.totalorder %s15, 0
    %p54 = por %p52, %p53
    %s56 = sadd.s32 %s55, 1
    %p59 = scmp.eq.s32.totalorder %s9, 1
    %p60 = scmp.ne.s32.totalorder %s55, %s57
    %p61 = scmp.eq.s32.totalorder %s9, 0
    %p62 = por %p60, %p61
    %p63 = scmp.ne.s32.totalorder %s55, %s57
    %p64 = scmp.eq.s32.totalorder %s14, 1
    %p65 = por %p63, %p64
    %p66 = scmp.ne.s32.totalorder %s57, %s58
    %p67 = scmp.eq.s32.totalorder %s14, 0
    %p68 = por %p66, %p67
    %p69 = scmp.ne.s32.totalorder %s57, %s58
    %p70 = scmp.eq.s32.totalorder %s15, 1
    %p71 = por %p69, %p70
    %p73 = scmp.ne.s32.totalorder %s58, %s72
    %p74 = scmp.eq.s32.totalorder %s15, 0
    %p75 = por %p73, %p74
    %s77 = sadd.s32 %s76, 1
    %p80 = scmp.eq.s32.totalorder %s9, 1
    %p81 = scmp.ne.s32.totalorder %s76, %s78
    %p82 = scmp.eq.s32.totalorder %s9, 0
    %p83 = por %p81, %p82
    %p84 = scmp.ne.s32.totalorder %s76, %s78
    %p85 = scmp.eq.s32.totalorder %s14, 1
    %p86 = por %p84, %p85
    %p87 = scmp.ne.s32.totalorder %s78, %s79
    %p88 = scmp.eq.s32.totalorder %s14, 0
    %p89 = por %p87, %p88
    %p90 = scmp.ne.s32.totalorder %s78, %s79
    %p91 = scmp.eq.s32.totalorder %s15, 1
    %p92 = por %p90, %p91
    %p94 = scmp.ne.s32.totalorder %s79, %s93
    %p95 = scmp.eq.s32.totalorder %s15, 0
    %p96 = por %p94, %p95
    %s97 = ssub.s32 %s16, %s28
    %s98 = ssub.s32 %s17, %s24
    %s99 = sor.u32 %s97, %s98
    %p100 = scmp.eq.s32.totalorder %s99, 0
    %s102 = sadd.s32 %s101, 1
    %s103 = scalar_select %p100, %s101, %s102
    %p106 = pneg %p100
    %p107 = scmp.eq.s32.totalorder %s9, 1
    %p108 = por %p106, %p107
    %p109 = scmp.ne.s32.totalorder %s101, %s104
    %p110 = scmp.eq.s32.totalorder %s9, 0
    %p111 = por %p109, %p110
    %p112 = scmp.ne.s32.totalorder %s101, %s104
    %p113 = scmp.eq.s32.totalorder %s14, 1
    %p114 = por %p112, %p113
    %p115 = scmp.ne.s32.totalorder %s104, %s105
    %p116 = scmp.eq.s32.totalorder %s14, 0
    %p117 = por %p115, %p116
    %p118 = scmp.ne.s32.totalorder %s104, %s105
    %p119 = scmp.eq.s32.totalorder %s15, 1
    %p120 = por %p118, %p119
    %p122 = scmp.ne.s32.totalorder %s105, %s121
    %p123 = scmp.eq.s32.totalorder %s15, 0
    %p124 = por %p122, %p123
    %p125 = scmp.le.s32.totalorder 1, %s9
    %p126 = scmp.lt.s32.totalorder %s9, 3
    %p127 = pnand %p125, %p126
    %p128 = pneg %p127
    // Predicated region
    $region9: #{generator_forward.3} parent=5 // pred_check
      _
    $region10: #{generator_forward.3} parent=5 // pred_check_branch
      %130 = sbr.rel (%p127) target = $region12
    $region11: #{generator_forward.3} parent=5 // pred_region
      %s131 = ssub.s32 %s9, 1
      // Predicated region
      $region13: #{generator_forward.3} parent=11 // pred_check
        %p132 = pneg %p68
      $region14: #{generator_forward.3} parent=11 // pred_check_branch
        %134 = sbr.rel (%p132) target = $region16
      $region15: #{generator_forward.3} parent=11 // pred_region
        _
      $region16: #{generator_forward.3} parent=11 // pred_fallthru
        _
      // Predicated region
      $region17: #{generator_forward.3} parent=11 // pred_check
        %p135 = pneg %p89
      $region18: #{generator_forward.3} parent=11 // pred_check_branch
        %137 = sbr.rel (%p135) target = $region20
      $region19: #{generator_forward.3} parent=11 // pred_region
        _
      $region20: #{generator_forward.3} parent=11 // pred_fallthru
        _
    $region12: #{generator_forward.3} parent=5 // pred_fallthru
      _
    %p138 = scmp.lt.s32.totalorder %s9, 2
    // Predicated region
    $region21: #{generator_forward.3} parent=5 // pred_check
      %p139 = pneg %p138
    $region22: #{generator_forward.3} parent=5 // pred_check_branch
      %141 = sbr.rel (%p139) target = $region24
    $region23: #{generator_forward.3} parent=5 // pred_region
      // Predicated region
      $region25: #{generator_forward.3} parent=23 // pred_check
        %p142 = pneg %p41
      $region26: #{generator_forward.3} parent=23 // pred_check_branch
        %144 = sbr.rel (%p142) target = $region28
      $region27: #{generator_forward.3} parent=23 // pred_region
        %p145 = scmp.lt.s32.totalorder %s16, 1
        %s146 = scalar_select %p145, %s16, 1
        %s147 = smul.addr %s146, 32
        %s148 = smul.addr %s147, 4
        %s149 = scalar_lea.vmem %s0, %s148
      $region28: #{generator_forward.3} parent=23 // pred_fallthru
        _
    $region24: #{generator_forward.3} parent=5 // pred_fallthru
      _
    %p150 = scmp.le.s32.totalorder 1, %s9
    %p151 = scmp.lt.s32.totalorder %s9, 3
    %p152 = pnand %p150, %p151
    %p153 = pneg %p152
    // Predicated region
    $region29: #{generator_forward.3} parent=5 // pred_check
      _
    $region30: #{generator_forward.3} parent=5 // pred_check_branch
      %155 = sbr.rel (%p152) target = $region32
    $region31: #{generator_forward.3} parent=5 // pred_region
      %s156 = ssub.s32 %s9, 1
      %p157 = scmp.lt.s32.totalorder %s18, 1
      %s158 = scalar_select %p157, %s18, 1
      %s159 = smul.addr %s158, 32
      %s160 = smul.addr %s159, 4
      %s161 = scalar_lea.vmem %s0, %s160
      %p162 = pneg %p47
      %p163 = pneg %p44
      %p164 = pneg %p68
      %p165 = pneg %p65
      %p166 = pneg %p89
      %p167 = pneg %p86
      %p168 = pneg %p117
      %p169 = pneg %p114
      %s170 = smul.u32 20, %s19
      %p171 = scmp.lt.s32.totalorder %s18, 1
      %s172 = scalar_select %p171, %s18, 1
      %p173 = scmp.lt.s32.totalorder %s170, 19
      %s174 = scalar_select %p173, %s170, 19
      %s175 = smul.addr %s172, 20
      %s176 = sadd.s32 %s174, %s175
      %s177 = smul.addr %s176, 4
      %s178 = scalar_lea.vmem %s3, %s177
      %p179 = scmp.lt.s32.totalorder %s18, 1
      %s180 = scalar_select %p179, %s18, 1
      %s181 = smul.addr %s180, 32
      %s182 = smul.addr %s181, 4
      %s183 = scalar_lea.vmem %s0, %s182
      %s184 = smul.u32 20, %s19
      %p185 = scmp.lt.s32.totalorder %s18, 1
      %s186 = scalar_select %p185, %s18, 1
      %p187 = scmp.lt.s32.totalorder %s184, 19
      %s188 = scalar_select %p187, %s184, 19
      %s189 = smul.addr %s186, 20
      %s190 = sadd.s32 %s188, %s189
      %s191 = smul.addr %s190, 4
      %s192 = scalar_lea.vmem %s3, %s191
      %s193 = smul.u32 20, %s19
      %s194 = smul.u32 %s19, 160
      %s195 = sshra.s32 %s194, 3
      %s196 = sand.u32 %s194, 7
      %s197 = smul.addr %s195, 4
      %s198 = scalar_lea.vmem %s183, %s197
      %v199 = vld [vmem:[%s198] sm:$0xf]
      %v200 = vld [vmem:[%s198 + $0x4] sm:$0xf]
      %v201 = vld [vmem:[%s198 + $0x8] sm:$0xf]
      %v202 = vld [vmem:[%s198 + $0xc] sm:$0xf]
      %v203 = vld [vmem:[%s198 + $0x10] sm:$0xf]
      %v204 = vld [vmem:[%s198 + $0x14] sm:$0xf]
      %v205 = vld [vmem:[%s198 + $0x18] sm:$0xf]
      %v206 = vld [vmem:[%s198 + $0x1c] sm:$0xf]
      %v207 = vld [vmem:[%s198 + $0x20] sm:$0xf]
      %v208 = vld [vmem:[%s198 + $0x24] sm:$0xf]
      %v209 = vld [vmem:[%s198 + $0x28] sm:$0xf]
      %v210 = vld [vmem:[%s198 + $0x2c] sm:$0xf]
      %v211 = vld [vmem:[%s198 + $0x30] sm:$0xf]
      %v212 = vld [vmem:[%s198 + $0x34] sm:$0xf]
      %v213 = vld [vmem:[%s198 + $0x38] sm:$0xf]
      %v214 = vld [vmem:[%s198 + $0x3c] sm:$0xf]
      %v215 = vld [vmem:[%s198 + $0x40] sm:$0xf]
      %v216 = vld [vmem:[%s198 + $0x44] sm:$0xf]
      %v217 = vld [vmem:[%s198 + $0x48] sm:$0xf]
      %v218 = vld [vmem:[%s198 + $0x4c] sm:$0xf]
      %v219 = vld [vmem:[%s1] sm:$0xf]
      %v220 = vld [vmem:[%s1 + $0x4] sm:$0xf]
      %v221 = vld [vmem:[%s1 + $0x8] sm:$0xf]
      %v222 = vld [vmem:[%s1 + $0xc] sm:$0xf]
      %v223 = vld [vmem:[%s1 + $0x10] sm:$0xf]
      %v224 = vld [vmem:[%s1 + $0x14] sm:$0xf]
      %v225 = vld [vmem:[%s1 + $0x18] sm:$0xf]
      %v226 = vld [vmem:[%s1 + $0x1c] sm:$0xf]
      %v227 = vld [vmem:[%s1 + $0x20] sm:$0xf]
      %v228 = vld [vmem:[%s1 + $0x24] sm:$0xf]
      %v229 = vld [vmem:[%s1 + $0x28] sm:$0xf]
      %v230 = vld [vmem:[%s1 + $0x2c] sm:$0xf]
      %v231 = vld [vmem:[%s1 + $0x30] sm:$0xf]
      %v232 = vld [vmem:[%s1 + $0x34] sm:$0xf]
      %v233 = vld [vmem:[%s1 + $0x38] sm:$0xf]
      %v234 = vld [vmem:[%s1 + $0x3c] sm:$0xf]
      %s235 = sadd.s32 %s194, 16
      %s236 = sshra.s32 %s235, 3
      %s237 = sand.u32 %s235, 7
      %s238 = smul.addr %s236, 4
      %s239 = scalar_lea.vmem %s183, %s238
      %v240 = vld [vmem:[%s239] sm:$0xf]
      %v241 = vld [vmem:[%s239 + $0x4] sm:$0xf]
      %v242 = vld [vmem:[%s239 + $0x8] sm:$0xf]
      %v243 = vld [vmem:[%s239 + $0xc] sm:$0xf]
      %v244 = vld [vmem:[%s239 + $0x10] sm:$0xf]
      %v245 = vld [vmem:[%s239 + $0x14] sm:$0xf]
      %v246 = vld [vmem:[%s239 + $0x18] sm:$0xf]
      %v247 = vld [vmem:[%s239 + $0x1c] sm:$0xf]
      %v248 = vld [vmem:[%s239 + $0x20] sm:$0xf]
      %v249 = vld [vmem:[%s239 + $0x24] sm:$0xf]
      %v250 = vld [vmem:[%s239 + $0x28] sm:$0xf]
      %v251 = vld [vmem:[%s239 + $0x2c] sm:$0xf]
      %v252 = vld [vmem:[%s239 + $0x30] sm:$0xf]
      %v253 = vld [vmem:[%s239 + $0x34] sm:$0xf]
      %v254 = vld [vmem:[%s239 + $0x38] sm:$0xf]
      %v255 = vld [vmem:[%s239 + $0x3c] sm:$0xf]
      %v256 = vld [vmem:[%s239 + $0x40] sm:$0xf]
      %v257 = vld [vmem:[%s239 + $0x44] sm:$0xf]
      %v258 = vld [vmem:[%s239 + $0x48] sm:$0xf]
      %v259 = vld [vmem:[%s239 + $0x4c] sm:$0xf]
      %s260 = scalar_lea.vmem %s1, 64
      %v261 = vld [vmem:[%s260] sm:$0xf]
      %v262 = vld [vmem:[%s260 + $0x4] sm:$0xf]
      %v263 = vld [vmem:[%s260 + $0x8] sm:$0xf]
      %v264 = vld [vmem:[%s260 + $0xc] sm:$0xf]
      %v265 = vld [vmem:[%s260 + $0x10] sm:$0xf]
      %v266 = vld [vmem:[%s260 + $0x14] sm:$0xf]
      %v267 = vld [vmem:[%s260 + $0x18] sm:$0xf]
      %v268 = vld [vmem:[%s260 + $0x1c] sm:$0xf]
      %v269 = vld [vmem:[%s260 + $0x20] sm:$0xf]
      %v270 = vld [vmem:[%s260 + $0x24] sm:$0xf]
      %v271 = vld [vmem:[%s260 + $0x28] sm:$0xf]
      %v272 = vld [vmem:[%s260 + $0x2c] sm:$0xf]
      %v273 = vld [vmem:[%s260 + $0x30] sm:$0xf]
      %v274 = vld [vmem:[%s260 + $0x34] sm:$0xf]
      %v275 = vld [vmem:[%s260 + $0x38] sm:$0xf]
      %v276 = vld [vmem:[%s260 + $0x3c] sm:$0xf]
      %v297 = vunpack.c.l.b16 %v240
      %v298 = vunpack.c.l.b16 %v241
      %v299 = vunpack.c.l.b16 %v242
      %v300 = vunpack.c.l.b16 %v243
      %v301 = vunpack.c.l.b16 %v244
      %v302 = vunpack.c.l.b16 %v245
      %v303 = vunpack.c.l.b16 %v246
      %v304 = vunpack.c.l.b16 %v247
      %v305 = vunpack.c.l.b16 %v248
      %v306 = vunpack.c.l.b16 %v249
      %v307 = vunpack.c.l.b16 %v250
      %v308 = vunpack.c.l.b16 %v251
      %v309 = vunpack.c.l.b16 %v252
      %v310 = vunpack.c.l.b16 %v253
      %v311 = vunpack.c.l.b16 %v254
      %v312 = vunpack.c.l.b16 %v255
      %v313 = vunpack.c.l.b16 %v256
      %v314 = vunpack.c.l.b16 %v257
      %v315 = vunpack.c.l.b16 %v258
      %v316 = vunpack.c.l.b16 %v259
      %v317 = vpack.c.b16 %v298, %v297
      %v318 = vpack.c.b16 %v300, %v299
      %v319 = vpack.c.b16 %v302, %v301
      %v320 = vpack.c.b16 %v304, %v303
      %v321 = vpack.c.b16 %v306, %v305
      %v322 = vpack.c.b16 %v308, %v307
      %v323 = vpack.c.b16 %v310, %v309
      %v324 = vpack.c.b16 %v312, %v311
      %v325 = vpack.c.b16 %v314, %v313
      %v326 = vpack.c.b16 %v316, %v315
      %v353 = vunpack.c.l.b16 %v261
      %v354 = vunpack.c.l.b16 %v262
      %v355 = vunpack.c.l.b16 %v263
      %v356 = vunpack.c.l.b16 %v264
      %v357 = vunpack.c.l.b16 %v265
      %v358 = vunpack.c.l.b16 %v266
      %v359 = vunpack.c.l.b16 %v267
      %v360 = vunpack.c.l.b16 %v268
      %v361 = vunpack.c.l.b16 %v269
      %v362 = vunpack.c.l.b16 %v270
      %v363 = vunpack.c.l.b16 %v271
      %v364 = vunpack.c.l.b16 %v272
      %v365 = vunpack.c.l.b16 %v273
      %v366 = vunpack.c.l.b16 %v274
      %v367 = vunpack.c.l.b16 %v275
      %v368 = vunpack.c.l.b16 %v276
      %v369 = vpack.c.b16 %v354, %v353
      %v370 = vpack.c.b16 %v356, %v355
      %v371 = vpack.c.b16 %v358, %v357
      %v372 = vpack.c.b16 %v360, %v359
      %v373 = vpack.c.b16 %v362, %v361
      %v374 = vpack.c.b16 %v364, %v363
      %v375 = vpack.c.b16 %v366, %v365
      %v376 = vpack.c.b16 %v368, %v367
      %385 = vmatpush.bf16.msra.mxu0 %v376
      %386 = vmatpush.bf16.msra.mxu0 %v375
      %387 = vmatpush.bf16.msra.mxu0 %v374
      %388 = vmatpush.bf16.msra.mxu0 %v373
      %389 = vmatpush.bf16.msra.mxu0 %v372
      %390 = vmatpush.bf16.msra.mxu0 %v371
      %391 = vmatpush.bf16.msra.mxu0 %v370
      %392 = vmatpush.bf16.msra.mxu0 %v369
      %393 = vmatmul.bf16.gmra.mxu0 %v317
      %v394 = vpop.f32.mrf.mxu0
      %v395 = vadd.f32 0.0, %v394
      %v396 = vpop.f32.mrf.mxu0
      %v397 = vadd.f32 0.0, %v396
      %398 = vmatmul.bf16.gmra.mxu0 %v318
      %v399 = vpop.f32.mrf.mxu0
      %v400 = vadd.f32 0.0, %v399
      %v401 = vpop.f32.mrf.mxu0
      %v402 = vadd.f32 0.0, %v401
      %403 = vmatmul.bf16.gmra.mxu0 %v319
      %v404 = vpop.f32.mrf.mxu0
      %v405 = vadd.f32 0.0, %v404
      %v406 = vpop.f32.mrf.mxu0
      %v407 = vadd.f32 0.0, %v406
      %408 = vmatmul.bf16.gmra.mxu0 %v320
      %v409 = vpop.f32.mrf.mxu0
      %v410 = vadd.f32 0.0, %v409
      %v411 = vpop.f32.mrf.mxu0
      %v412 = vadd.f32 0.0, %v411
      %413 = vmatmul.bf16.gmra.mxu0 %v321
      %v414 = vpop.f32.mrf.mxu0
      %v415 = vadd.f32 0.0, %v414
      %v416 = vpop.f32.mrf.mxu0
      %v417 = vadd.f32 0.0, %v416
      %418 = vmatmul.bf16.gmra.mxu0 %v322
      %v419 = vpop.f32.mrf.mxu0
      %v420 = vadd.f32 0.0, %v419
      %v421 = vpop.f32.mrf.mxu0
      %v422 = vadd.f32 0.0, %v421
      %423 = vmatmul.bf16.gmra.mxu0 %v323
      %v424 = vpop.f32.mrf.mxu0
      %v425 = vadd.f32 0.0, %v424
      %v426 = vpop.f32.mrf.mxu0
      %v427 = vadd.f32 0.0, %v426
      %428 = vmatmul.bf16.gmra.mxu0 %v324
      %v429 = vpop.f32.mrf.mxu0
      %v430 = vadd.f32 0.0, %v429
      %v431 = vpop.f32.mrf.mxu0
      %v432 = vadd.f32 0.0, %v431
      %433 = vmatmul.bf16.gmra.mxu0 %v325
      %v434 = vpop.f32.mrf.mxu0
      %v435 = vadd.f32 0.0, %v434
      %v436 = vpop.f32.mrf.mxu0
      %v437 = vadd.f32 0.0, %v436
      %438 = vmatmul.bf16.gmra.mxu0 %v326
      %v439 = vpop.f32.mrf.mxu0
      %v440 = vadd.f32 0.0, %v439
      %v441 = vpop.f32.mrf.mxu0
      %v442 = vadd.f32 0.0, %v441
      %443 = vdwg.mxu0
      %v464 = vunpack.c.l.b16 %v199
      %v465 = vunpack.c.l.b16 %v200
      %v466 = vunpack.c.l.b16 %v201
      %v467 = vunpack.c.l.b16 %v202
      %v468 = vunpack.c.l.b16 %v203
      %v469 = vunpack.c.l.b16 %v204
      %v470 = vunpack.c.l.b16 %v205
      %v471 = vunpack.c.l.b16 %v206
      %v472 = vunpack.c.l.b16 %v207
      %v473 = vunpack.c.l.b16 %v208
      %v474 = vunpack.c.l.b16 %v209
      %v475 = vunpack.c.l.b16 %v210
      %v476 = vunpack.c.l.b16 %v211
      %v477 = vunpack.c.l.b16 %v212
      %v478 = vunpack.c.l.b16 %v213
      %v479 = vunpack.c.l.b16 %v214
      %v480 = vunpack.c.l.b16 %v215
      %v481 = vunpack.c.l.b16 %v216
      %v482 = vunpack.c.l.b16 %v217
      %v483 = vunpack.c.l.b16 %v218
      %v484 = vpack.c.b16 %v465, %v464
      %v485 = vpack.c.b16 %v467, %v466
      %v486 = vpack.c.b16 %v469, %v468
      %v487 = vpack.c.b16 %v471, %v470
      %v488 = vpack.c.b16 %v473, %v472
      %v489 = vpack.c.b16 %v475, %v474
      %v490 = vpack.c.b16 %v477, %v476
      %v491 = vpack.c.b16 %v479, %v478
      %v492 = vpack.c.b16 %v481, %v480
      %v493 = vpack.c.b16 %v483, %v482
      %v520 = vunpack.c.l.b16 %v219
      %v521 = vunpack.c.l.b16 %v220
      %v522 = vunpack.c.l.b16 %v221
      %v523 = vunpack.c.l.b16 %v222
      %v524 = vunpack.c.l.b16 %v223
      %v525 = vunpack.c.l.b16 %v224
      %v526 = vunpack.c.l.b16 %v225
      %v527 = vunpack.c.l.b16 %v226
      %v528 = vunpack.c.l.b16 %v227
      %v529 = vunpack.c.l.b16 %v228
      %v530 = vunpack.c.l.b16 %v229
      %v531 = vunpack.c.l.b16 %v230
      %v532 = vunpack.c.l.b16 %v231
      %v533 = vunpack.c.l.b16 %v232
      %v534 = vunpack.c.l.b16 %v233
      %v535 = vunpack.c.l.b16 %v234
      %v536 = vpack.c.b16 %v521, %v520
      %v537 = vpack.c.b16 %v523, %v522
      %v538 = vpack.c.b16 %v525, %v524
      %v539 = vpack.c.b16 %v527, %v526
      %v540 = vpack.c.b16 %v529, %v528
      %v541 = vpack.c.b16 %v531, %v530
      %v542 = vpack.c.b16 %v533, %v532
      %v543 = vpack.c.b16 %v535, %v534
      %552 = vmatpush.bf16.msra.mxu0 %v543
      %553 = vmatpush.bf16.msra.mxu0 %v542
      %554 = vmatpush.bf16.msra.mxu0 %v541
      %555 = vmatpush.bf16.msra.mxu0 %v540
      %556 = vmatpush.bf16.msra.mxu0 %v539
      %557 = vmatpush.bf16.msra.mxu0 %v538
      %558 = vmatpush.bf16.msra.mxu0 %v537
      %559 = vmatpush.bf16.msra.mxu0 %v536
      %560 = vmatmul.bf16.gmra.mxu0 %v484
      %v561 = vpop.f32.mrf.mxu0
      %v562 = vadd.f32 %v395, %v561
      %v563 = vpop.f32.mrf.mxu0
      %v564 = vadd.f32 %v397, %v563
      %565 = vmatmul.bf16.gmra.mxu0 %v485
      %v566 = vpop.f32.mrf.mxu0
      %v567 = vadd.f32 %v400, %v566
      %v568 = vpop.f32.mrf.mxu0
      %v569 = vadd.f32 %v402, %v568
      %570 = vmatmul.bf16.gmra.mxu0 %v486
      %v571 = vpop.f32.mrf.mxu0
      %v572 = vadd.f32 %v405, %v571
      %v573 = vpop.f32.mrf.mxu0
      %v574 = vadd.f32 %v407, %v573
      %575 = vmatmul.bf16.gmra.mxu0 %v487
      %v576 = vpop.f32.mrf.mxu0
      %v577 = vadd.f32 %v410, %v576
      %v578 = vpop.f32.mrf.mxu0
      %v579 = vadd.f32 %v412, %v578
      %580 = vmatmul.bf16.gmra.mxu0 %v488
      %v581 = vpop.f32.mrf.mxu0
      %v582 = vadd.f32 %v415, %v581
      %v583 = vpop.f32.mrf.mxu0
      %v584 = vadd.f32 %v417, %v583
      %585 = vmatmul.bf16.gmra.mxu0 %v489
      %v586 = vpop.f32.mrf.mxu0
      %v587 = vadd.f32 %v420, %v586
      %v588 = vpop.f32.mrf.mxu0
      %v589 = vadd.f32 %v422, %v588
      %590 = vmatmul.bf16.gmra.mxu0 %v490
      %v591 = vpop.f32.mrf.mxu0
      %v592 = vadd.f32 %v425, %v591
      %v593 = vpop.f32.mrf.mxu0
      %v594 = vadd.f32 %v427, %v593
      %595 = vmatmul.bf16.gmra.mxu0 %v491
      %v596 = vpop.f32.mrf.mxu0
      %v597 = vadd.f32 %v430, %v596
      %v598 = vpop.f32.mrf.mxu0
      %v599 = vadd.f32 %v432, %v598
      %600 = vmatmul.bf16.gmra.mxu0 %v492
      %v601 = vpop.f32.mrf.mxu0
      %v602 = vadd.f32 %v435, %v601
      %v603 = vpop.f32.mrf.mxu0
      %v604 = vadd.f32 %v437, %v603
      %605 = vmatmul.bf16.gmra.mxu0 %v493
      %v606 = vpop.f32.mrf.mxu0
      %v607 = vadd.f32 %v440, %v606
      %v608 = vpop.f32.mrf.mxu0
      %v609 = vadd.f32 %v442, %v608
      %610 = vdwg.mxu0
      %s611 = sadd.s32 %s194, 32
      %s612 = sshra.s32 %s611, 3
      %s613 = sand.u32 %s611, 7
      %s614 = smul.addr %s612, 4
      %s615 = scalar_lea.vmem %s183, %s614
      %v616 = vld [vmem:[%s615] sm:$0xf]
      %v617 = vld [vmem:[%s615 + $0x4] sm:$0xf]
      %v618 = vld [vmem:[%s615 + $0x8] sm:$0xf]
      %v619 = vld [vmem:[%s615 + $0xc] sm:$0xf]
      %v620 = vld [vmem:[%s615 + $0x10] sm:$0xf]
      %v621 = vld [vmem:[%s615 + $0x14] sm:$0xf]
      %v622 = vld [vmem:[%s615 + $0x18] sm:$0xf]
      %v623 = vld [vmem:[%s615 + $0x1c] sm:$0xf]
      %v624 = vld [vmem:[%s615 + $0x20] sm:$0xf]
      %v625 = vld [vmem:[%s615 + $0x24] sm:$0xf]
      %v626 = vld [vmem:[%s615 + $0x28] sm:$0xf]
      %v627 = vld [vmem:[%s615 + $0x2c] sm:$0xf]
      %v628 = vld [vmem:[%s615 + $0x30] sm:$0xf]
      %v629 = vld [vmem:[%s615 + $0x34] sm:$0xf]
      %v630 = vld [vmem:[%s615 + $0x38] sm:$0xf]
      %v631 = vld [vmem:[%s615 + $0x3c] sm:$0xf]
      %v632 = vld [vmem:[%s615 + $0x40] sm:$0xf]
      %v633 = vld [vmem:[%s615 + $0x44] sm:$0xf]
      %v634 = vld [vmem:[%s615 + $0x48] sm:$0xf]
      %v635 = vld [vmem:[%s615 + $0x4c] sm:$0xf]
      %s636 = scalar_lea.vmem %s1, 128
      %v637 = vld [vmem:[%s636] sm:$0xf]
      %v638 = vld [vmem:[%s636 + $0x4] sm:$0xf]
      %v639 = vld [vmem:[%s636 + $0x8] sm:$0xf]
      %v640 = vld [vmem:[%s636 + $0xc] sm:$0xf]
      %v641 = vld [vmem:[%s636 + $0x10] sm:$0xf]
      %v642 = vld [vmem:[%s636 + $0x14] sm:$0xf]
      %v643 = vld [vmem:[%s636 + $0x18] sm:$0xf]
      %v644 = vld [vmem:[%s636 + $0x1c] sm:$0xf]
      %v645 = vld [vmem:[%s636 + $0x20] sm:$0xf]
      %v646 = vld [vmem:[%s636 + $0x24] sm:$0xf]
      %v647 = vld [vmem:[%s636 + $0x28] sm:$0xf]
      %v648 = vld [vmem:[%s636 + $0x2c] sm:$0xf]
      %v649 = vld [vmem:[%s636 + $0x30] sm:$0xf]
      %v650 = vld [vmem:[%s636 + $0x34] sm:$0xf]
      %v651 = vld [vmem:[%s636 + $0x38] sm:$0xf]
      %v652 = vld [vmem:[%s636 + $0x3c] sm:$0xf]
      %v673 = vunpack.c.l.b16 %v616
      %v674 = vunpack.c.l.b16 %v617
      %v675 = vunpack.c.l.b16 %v618
      %v676 = vunpack.c.l.b16 %v619
      %v677 = vunpack.c.l.b16 %v620
      %v678 = vunpack.c.l.b16 %v621
      %v679 = vunpack.c.l.b16 %v622
      %v680 = vunpack.c.l.b16 %v623
      %v681 = vunpack.c.l.b16 %v624
      %v682 = vunpack.c.l.b16 %v625
      %v683 = vunpack.c.l.b16 %v626
      %v684 = vunpack.c.l.b16 %v627
      %v685 = vunpack.c.l.b16 %v628
      %v686 = vunpack.c.l.b16 %v629
      %v687 = vunpack.c.l.b16 %v630
      %v688 = vunpack.c.l.b16 %v631
      %v689 = vunpack.c.l.b16 %v632
      %v690 = vunpack.c.l.b16 %v633
      %v691 = vunpack.c.l.b16 %v634
      %v692 = vunpack.c.l.b16 %v635
      %v693 = vpack.c.b16 %v674, %v673
      %v694 = vpack.c.b16 %v676, %v675
      %v695 = vpack.c.b16 %v678, %v677
      %v696 = vpack.c.b16 %v680, %v679
      %v697 = vpack.c.b16 %v682, %v681
      %v698 = vpack.c.b16 %v684, %v683
      %v699 = vpack.c.b16 %v686, %v685
      %v700 = vpack.c.b16 %v688, %v687
      %v701 = vpack.c.b16 %v690, %v689
      %v702 = vpack.c.b16 %v692, %v691
      %v729 = vunpack.c.l.b16 %v637
      %v730 = vunpack.c.l.b16 %v638
      %v731 = vunpack.c.l.b16 %v639
      %v732 = vunpack.c.l.b16 %v640
      %v733 = vunpack.c.l.b16 %v641
      %v734 = vunpack.c.l.b16 %v642
      %v735 = vunpack.c.l.b16 %v643
      %v736 = vunpack.c.l.b16 %v644
      %v737 = vunpack.c.l.b16 %v645
      %v738 = vunpack.c.l.b16 %v646
      %v739 = vunpack.c.l.b16 %v647
      %v740 = vunpack.c.l.b16 %v648
      %v741 = vunpack.c.l.b16 %v649
      %v742 = vunpack.c.l.b16 %v650
      %v743 = vunpack.c.l.b16 %v651
      %v744 = vunpack.c.l.b16 %v652
      %v745 = vpack.c.b16 %v730, %v729
      %v746 = vpack.c.b16 %v732, %v731
      %v747 = vpack.c.b16 %v734, %v733
      %v748 = vpack.c.b16 %v736, %v735
      %v749 = vpack.c.b16 %v738, %v737
      %v750 = vpack.c.b16 %v740, %v739
      %v751 = vpack.c.b16 %v742, %v741
      %v752 = vpack.c.b16 %v744, %v743
      %761 = vmatpush.bf16.msra.mxu0 %v752
      %762 = vmatpush.bf16.msra.mxu0 %v751
      %763 = vmatpush.bf16.msra.mxu0 %v750
      %764 = vmatpush.bf16.msra.mxu0 %v749
      %765 = vmatpush.bf16.msra.mxu0 %v748
      %766 = vmatpush.bf16.msra.mxu0 %v747
      %767 = vmatpush.bf16.msra.mxu0 %v746
      %768 = vmatpush.bf16.msra.mxu0 %v745
      %769 = vmatmul.bf16.gmra.mxu0 %v693
      %v770 = vpop.f32.mrf.mxu0
      %v771 = vadd.f32 0.0, %v770
      %v772 = vpop.f32.mrf.mxu0
      %v773 = vadd.f32 0.0, %v772
      %774 = vmatmul.bf16.gmra.mxu0 %v694
      %v775 = vpop.f32.mrf.mxu0
      %v776 = vadd.f32 0.0, %v775
      %v777 = vpop.f32.mrf.mxu0
      %v778 = vadd.f32 0.0, %v777
      %779 = vmatmul.bf16.gmra.mxu0 %v695
      %v780 = vpop.f32.mrf.mxu0
      %v781 = vadd.f32 0.0, %v780
      %v782 = vpop.f32.mrf.mxu0
      %v783 = vadd.f32 0.0, %v782
      %784 = vmatmul.bf16.gmra.mxu0 %v696
      %v785 = vpop.f32.mrf.mxu0
      %v786 = vadd.f32 0.0, %v785
      %v787 = vpop.f32.mrf.mxu0
      %v788 = vadd.f32 0.0, %v787
      %789 = vmatmul.bf16.gmra.mxu0 %v697
      %v790 = vpop.f32.mrf.mxu0
      %v791 = vadd.f32 0.0, %v790
      %v792 = vpop.f32.mrf.mxu0
      %v793 = vadd.f32 0.0, %v792
      %794 = vmatmul.bf16.gmra.mxu0 %v698
      %v795 = vpop.f32.mrf.mxu0
      %v796 = vadd.f32 0.0, %v795
      %v797 = vpop.f32.mrf.mxu0
      %v798 = vadd.f32 0.0, %v797
      %799 = vmatmul.bf16.gmra.mxu0 %v699
      %v800 = vpop.f32.mrf.mxu0
      %v801 = vadd.f32 0.0, %v800
      %v802 = vpop.f32.mrf.mxu0
      %v803 = vadd.f32 0.0, %v802
      %804 = vmatmul.bf16.gmra.mxu0 %v700
      %v805 = vpop.f32.mrf.mxu0
      %v806 = vadd.f32 0.0, %v805
      %v807 = vpop.f32.mrf.mxu0
      %v808 = vadd.f32 0.0, %v807
      %809 = vmatmul.bf16.gmra.mxu0 %v701
      %v810 = vpop.f32.mrf.mxu0
      %v811 = vadd.f32 0.0, %v810
      %v812 = vpop.f32.mrf.mxu0
      %v813 = vadd.f32 0.0, %v812
      %814 = vmatmul.bf16.gmra.mxu0 %v702
      %v815 = vpop.f32.mrf.mxu0
      %v816 = vadd.f32 0.0, %v815
      %v817 = vpop.f32.mrf.mxu0
      %v818 = vadd.f32 0.0, %v817
      %819 = vdwg.mxu0
      %v820 = vadd.f32 %v562, %v771
      %v821 = vadd.f32 %v564, %v773
      %v822 = vadd.f32 %v567, %v776
      %v823 = vadd.f32 %v569, %v778
      %v824 = vadd.f32 %v572, %v781
      %v825 = vadd.f32 %v574, %v783
      %v826 = vadd.f32 %v577, %v786
      %v827 = vadd.f32 %v579, %v788
      %v828 = vadd.f32 %v582, %v791
      %v829 = vadd.f32 %v584, %v793
      %v830 = vadd.f32 %v587, %v796
      %v831 = vadd.f32 %v589, %v798
      %v832 = vadd.f32 %v592, %v801
      %v833 = vadd.f32 %v594, %v803
      %v834 = vadd.f32 %v597, %v806
      %v835 = vadd.f32 %v599, %v808
      %v836 = vadd.f32 %v602, %v811
      %v837 = vadd.f32 %v604, %v813
      %v838 = vadd.f32 %v607, %v816
      %v839 = vadd.f32 %v609, %v818
      %s840 = sadd.s32 %s194, 48
      %s841 = sshra.s32 %s840, 3
      %s842 = sand.u32 %s840, 7
      %s843 = smul.addr %s841, 4
      %s844 = scalar_lea.vmem %s183, %s843
      %v845 = vld [vmem:[%s844] sm:$0xf]
      %v846 = vld [vmem:[%s844 + $0x4] sm:$0xf]
      %v847 = vld [vmem:[%s844 + $0x8] sm:$0xf]
      %v848 = vld [vmem:[%s844 + $0xc] sm:$0xf]
      %v849 = vld [vmem:[%s844 + $0x10] sm:$0xf]
      %v850 = vld [vmem:[%s844 + $0x14] sm:$0xf]
      %v851 = vld [vmem:[%s844 + $0x18] sm:$0xf]
      %v852 = vld [vmem:[%s844 + $0x1c] sm:$0xf]
      %v853 = vld [vmem:[%s844 + $0x20] sm:$0xf]
      %v854 = vld [vmem:[%s844 + $0x24] sm:$0xf]
      %v855 = vld [vmem:[%s844 + $0x28] sm:$0xf]
      %v856 = vld [vmem:[%s844 + $0x2c] sm:$0xf]
      %v857 = vld [vmem:[%s844 + $0x30] sm:$0xf]
      %v858 = vld [vmem:[%s844 + $0x34] sm:$0xf]
      %v859 = vld [vmem:[%s844 + $0x38] sm:$0xf]
      %v860 = vld [vmem:[%s844 + $0x3c] sm:$0xf]
      %v861 = vld [vmem:[%s844 + $0x40] sm:$0xf]
      %v862 = vld [vmem:[%s844 + $0x44] sm:$0xf]
      %v863 = vld [vmem:[%s844 + $0x48] sm:$0xf]
      %v864 = vld [vmem:[%s844 + $0x4c] sm:$0xf]
      %s865 = scalar_lea.vmem %s1, 192
      %v866 = vld [vmem:[%s865] sm:$0xf]
      %v867 = vld [vmem:[%s865 + $0x4] sm:$0xf]
      %v868 = vld [vmem:[%s865 + $0x8] sm:$0xf]
      %v869 = vld [vmem:[%s865 + $0xc] sm:$0xf]
      %v870 = vld [vmem:[%s865 + $0x10] sm:$0xf]
      %v871 = vld [vmem:[%s865 + $0x14] sm:$0xf]
      %v872 = vld [vmem:[%s865 + $0x18] sm:$0xf]
      %v873 = vld [vmem:[%s865 + $0x1c] sm:$0xf]
      %v874 = vld [vmem:[%s865 + $0x20] sm:$0xf]
      %v875 = vld [vmem:[%s865 + $0x24] sm:$0xf]
      %v876 = vld [vmem:[%s865 + $0x28] sm:$0xf]
      %v877 = vld [vmem:[%s865 + $0x2c] sm:$0xf]
      %v878 = vld [vmem:[%s865 + $0x30] sm:$0xf]
      %v879 = vld [vmem:[%s865 + $0x34] sm:$0xf]
      %v880 = vld [vmem:[%s865 + $0x38] sm:$0xf]
      %v881 = vld [vmem:[%s865 + $0x3c] sm:$0xf]
      %v902 = vunpack.c.l.b16 %v845
      %v903 = vunpack.c.l.b16 %v846
      %v904 = vunpack.c.l.b16 %v847
      %v905 = vunpack.c.l.b16 %v848
      %v906 = vunpack.c.l.b16 %v849
      %v907 = vunpack.c.l.b16 %v850
      %v908 = vunpack.c.l.b16 %v851
      %v909 = vunpack.c.l.b16 %v852
      %v910 = vunpack.c.l.b16 %v853
      %v911 = vunpack.c.l.b16 %v854
      %v912 = vunpack.c.l.b16 %v855
      %v913 = vunpack.c.l.b16 %v856
      %v914 = vunpack.c.l.b16 %v857
      %v915 = vunpack.c.l.b16 %v858
      %v916 = vunpack.c.l.b16 %v859
      %v917 = vunpack.c.l.b16 %v860
      %v918 = vunpack.c.l.b16 %v861
      %v919 = vunpack.c.l.b16 %v862
      %v920 = vunpack.c.l.b16 %v863
      %v921 = vunpack.c.l.b16 %v864
      %v922 = vpack.c.b16 %v903, %v902
      %v923 = vpack.c.b16 %v905, %v904
      %v924 = vpack.c.b16 %v907, %v906
      %v925 = vpack.c.b16 %v909, %v908
      %v926 = vpack.c.b16 %v911, %v910
      %v927 = vpack.c.b16 %v913, %v912
      %v928 = vpack.c.b16 %v915, %v914
      %v929 = vpack.c.b16 %v917, %v916
      %v930 = vpack.c.b16 %v919, %v918
      %v931 = vpack.c.b16 %v921, %v920
      %v958 = vunpack.c.l.b16 %v866
      %v959 = vunpack.c.l.b16 %v867
      %v960 = vunpack.c.l.b16 %v868
      %v961 = vunpack.c.l.b16 %v869
      %v962 = vunpack.c.l.b16 %v870
      %v963 = vunpack.c.l.b16 %v871
      %v964 = vunpack.c.l.b16 %v872
      %v965 = vunpack.c.l.b16 %v873
      %v966 = vunpack.c.l.b16 %v874
      %v967 = vunpack.c.l.b16 %v875
      %v968 = vunpack.c.l.b16 %v876
      %v969 = vunpack.c.l.b16 %v877
      %v970 = vunpack.c.l.b16 %v878
      %v971 = vunpack.c.l.b16 %v879
      %v972 = vunpack.c.l.b16 %v880
      %v973 = vunpack.c.l.b16 %v881
      %v974 = vpack.c.b16 %v959, %v958
      %v975 = vpack.c.b16 %v961, %v960
      %v976 = vpack.c.b16 %v963, %v962
      %v977 = vpack.c.b16 %v965, %v964
      %v978 = vpack.c.b16 %v967, %v966
      %v979 = vpack.c.b16 %v969, %v968
      %v980 = vpack.c.b16 %v971, %v970
      %v981 = vpack.c.b16 %v973, %v972
      %990 = vmatpush.bf16.msra.mxu0 %v981
      %991 = vmatpush.bf16.msra.mxu0 %v980
      %992 = vmatpush.bf16.msra.mxu0 %v979
      %993 = vmatpush.bf16.msra.mxu0 %v978
      %994 = vmatpush.bf16.msra.mxu0 %v977
      %995 = vmatpush.bf16.msra.mxu0 %v976
      %996 = vmatpush.bf16.msra.mxu0 %v975
      %997 = vmatpush.bf16.msra.mxu0 %v974
      %998 = vmatmul.bf16.gmra.mxu0 %v922
      %v999 = vpop.f32.mrf.mxu0
      %v1000 = vadd.f32 0.0, %v999
      %v1001 = vpop.f32.mrf.mxu0
      %v1002 = vadd.f32 0.0, %v1001
      %1003 = vmatmul.bf16.gmra.mxu0 %v923
      %v1004 = vpop.f32.mrf.mxu0
      %v1005 = vadd.f32 0.0, %v1004
      %v1006 = vpop.f32.mrf.mxu0
      %v1007 = vadd.f32 0.0, %v1006
      %1008 = vmatmul.bf16.gmra.mxu0 %v924
      %v1009 = vpop.f32.mrf.mxu0
      %v1010 = vadd.f32 0.0, %v1009
      %v1011 = vpop.f32.mrf.mxu0
      %v1012 = vadd.f32 0.0, %v1011
      %1013 = vmatmul.bf16.gmra.mxu0 %v925
      %v1014 = vpop.f32.mrf.mxu0
      %v1015 = vadd.f32 0.0, %v1014
      %v1016 = vpop.f32.mrf.mxu0
      %v1017 = vadd.f32 0.0, %v1016
      %1018 = vmatmul.bf16.gmra.mxu0 %v926
      %v1019 = vpop.f32.mrf.mxu0
      %v1020 = vadd.f32 0.0, %v1019
      %v1021 = vpop.f32.mrf.mxu0
      %v1022 = vadd.f32 0.0, %v1021
      %1023 = vmatmul.bf16.gmra.mxu0 %v927
      %v1024 = vpop.f32.mrf.mxu0
      %v1025 = vadd.f32 0.0, %v1024
      %v1026 = vpop.f32.mrf.mxu0
      %v1027 = vadd.f32 0.0, %v1026
      %1028 = vmatmul.bf16.gmra.mxu0 %v928
      %v1029 = vpop.f32.mrf.mxu0
      %v1030 = vadd.f32 0.0, %v1029
      %v1031 = vpop.f32.mrf.mxu0
      %v1032 = vadd.f32 0.0, %v1031
      %1033 = vmatmul.bf16.gmra.mxu0 %v929
      %v1034 = vpop.f32.mrf.mxu0
      %v1035 = vadd.f32 0.0, %v1034
      %v1036 = vpop.f32.mrf.mxu0
      %v1037 = vadd.f32 0.0, %v1036
      %1038 = vmatmul.bf16.gmra.mxu0 %v930
      %v1039 = vpop.f32.mrf.mxu0
      %v1040 = vadd.f32 0.0, %v1039
      %v1041 = vpop.f32.mrf.mxu0
      %v1042 = vadd.f32 0.0, %v1041
      %1043 = vmatmul.bf16.gmra.mxu0 %v931
      %v1044 = vpop.f32.mrf.mxu0
      %v1045 = vadd.f32 0.0, %v1044
      %v1046 = vpop.f32.mrf.mxu0
      %v1047 = vadd.f32 0.0, %v1046
      %1048 = vdwg.mxu0
      %v1049 = vadd.f32 %v820, %v1000
      %v1050 = vadd.f32 %v821, %v1002
      %v1051 = vadd.f32 %v822, %v1005
      %v1052 = vadd.f32 %v823, %v1007
      %v1053 = vadd.f32 %v824, %v1010
      %v1054 = vadd.f32 %v825, %v1012
      %v1055 = vadd.f32 %v826, %v1015
      %v1056 = vadd.f32 %v827, %v1017
      %v1057 = vadd.f32 %v828, %v1020
      %v1058 = vadd.f32 %v829, %v1022
      %v1059 = vadd.f32 %v830, %v1025
      %v1060 = vadd.f32 %v831, %v1027
      %v1061 = vadd.f32 %v832, %v1030
      %v1062 = vadd.f32 %v833, %v1032
      %v1063 = vadd.f32 %v834, %v1035
      %v1064 = vadd.f32 %v835, %v1037
      %v1065 = vadd.f32 %v836, %v1040
      %v1066 = vadd.f32 %v837, %v1042
      %v1067 = vadd.f32 %v838, %v1045
      %v1068 = vadd.f32 %v839, %v1047
      %s1069 = sadd.s32 %s194, 64
      %s1070 = sshra.s32 %s1069, 3
      %s1071 = sand.u32 %s1069, 7
      %s1072 = smul.addr %s1070, 4
      %s1073 = scalar_lea.vmem %s183, %s1072
      %v1074 = vld [vmem:[%s1073] sm:$0xf]
      %v1075 = vld [vmem:[%s1073 + $0x4] sm:$0xf]
      %v1076 = vld [vmem:[%s1073 + $0x8] sm:$0xf]
      %v1077 = vld [vmem:[%s1073 + $0xc] sm:$0xf]
      %v1078 = vld [vmem:[%s1073 + $0x10] sm:$0xf]
      %v1079 = vld [vmem:[%s1073 + $0x14] sm:$0xf]
      %v1080 = vld [vmem:[%s1073 + $0x18] sm:$0xf]
      %v1081 = vld [vmem:[%s1073 + $0x1c] sm:$0xf]
      %v1082 = vld [vmem:[%s1073 + $0x20] sm:$0xf]
      %v1083 = vld [vmem:[%s1073 + $0x24] sm:$0xf]
      %v1084 = vld [vmem:[%s1073 + $0x28] sm:$0xf]
      %v1085 = vld [vmem:[%s1073 + $0x2c] sm:$0xf]
      %v1086 = vld [vmem:[%s1073 + $0x30] sm:$0xf]
      %v1087 = vld [vmem:[%s1073 + $0x34] sm:$0xf]
      %v1088 = vld [vmem:[%s1073 + $0x38] sm:$0xf]
      %v1089 = vld [vmem:[%s1073 + $0x3c] sm:$0xf]
      %v1090 = vld [vmem:[%s1073 + $0x40] sm:$0xf]
      %v1091 = vld [vmem:[%s1073 + $0x44] sm:$0xf]
      %v1092 = vld [vmem:[%s1073 + $0x48] sm:$0xf]
      %v1093 = vld [vmem:[%s1073 + $0x4c] sm:$0xf]
      %s1094 = scalar_lea.vmem %s1, 256
      %v1095 = vld [vmem:[%s1094] sm:$0xf]
      %v1096 = vld [vmem:[%s1094 + $0x4] sm:$0xf]
      %v1097 = vld [vmem:[%s1094 + $0x8] sm:$0xf]
      %v1098 = vld [vmem:[%s1094 + $0xc] sm:$0xf]
      %v1099 = vld [vmem:[%s1094 + $0x10] sm:$0xf]
      %v1100 = vld [vmem:[%s1094 + $0x14] sm:$0xf]
      %v1101 = vld [vmem:[%s1094 + $0x18] sm:$0xf]
      %v1102 = vld [vmem:[%s1094 + $0x1c] sm:$0xf]
      %v1103 = vld [vmem:[%s1094 + $0x20] sm:$0xf]
      %v1104 = vld [vmem:[%s1094 + $0x24] sm:$0xf]
      %v1105 = vld [vmem:[%s1094 + $0x28] sm:$0xf]
      %v1106 = vld [vmem:[%s1094 + $0x2c] sm:$0xf]
      %v1107 = vld [vmem:[%s1094 + $0x30] sm:$0xf]
      %v1108 = vld [vmem:[%s1094 + $0x34] sm:$0xf]
      %v1109 = vld [vmem:[%s1094 + $0x38] sm:$0xf]
      %v1110 = vld [vmem:[%s1094 + $0x3c] sm:$0xf]
      %v1131 = vunpack.c.l.b16 %v1074
      %v1132 = vunpack.c.l.b16 %v1075
      %v1133 = vunpack.c.l.b16 %v1076
      %v1134 = vunpack.c.l.b16 %v1077
      %v1135 = vunpack.c.l.b16 %v1078
      %v1136 = vunpack.c.l.b16 %v1079
      %v1137 = vunpack.c.l.b16 %v1080
      %v1138 = vunpack.c.l.b16 %v1081
      %v1139 = vunpack.c.l.b16 %v1082
      %v1140 = vunpack.c.l.b16 %v1083
      %v1141 = vunpack.c.l.b16 %v1084
      %v1142 = vunpack.c.l.b16 %v1085
      %v1143 = vunpack.c.l.b16 %v1086
      %v1144 = vunpack.c.l.b16 %v1087
      %v1145 = vunpack.c.l.b16 %v1088
      %v1146 = vunpack.c.l.b16 %v1089
      %v1147 = vunpack.c.l.b16 %v1090
      %v1148 = vunpack.c.l.b16 %v1091
      %v1149 = vunpack.c.l.b16 %v1092
      %v1150 = vunpack.c.l.b16 %v1093
      %v1151 = vpack.c.b16 %v1132, %v1131
      %v1152 = vpack.c.b16 %v1134, %v1133
      %v1153 = vpack.c.b16 %v1136, %v1135
      %v1154 = vpack.c.b16 %v1138, %v1137
      %v1155 = vpack.c.b16 %v1140, %v1139
      %v1156 = vpack.c.b16 %v1142, %v1141
      %v1157 = vpack.c.b16 %v1144, %v1143
      %v1158 = vpack.c.b16 %v1146, %v1145
      %v1159 = vpack.c.b16 %v1148, %v1147
      %v1160 = vpack.c.b16 %v1150, %v1149
      %v1187 = vunpack.c.l.b16 %v1095
      %v1188 = vunpack.c.l.b16 %v1096
      %v1189 = vunpack.c.l.b16 %v1097
      %v1190 = vunpack.c.l.b16 %v1098
      %v1191 = vunpack.c.l.b16 %v1099
      %v1192 = vunpack.c.l.b16 %v1100
      %v1193 = vunpack.c.l.b16 %v1101
      %v1194 = vunpack.c.l.b16 %v1102
      %v1195 = vunpack.c.l.b16 %v1103
      %v1196 = vunpack.c.l.b16 %v1104
      %v1197 = vunpack.c.l.b16 %v1105
      %v1198 = vunpack.c.l.b16 %v1106
      %v1199 = vunpack.c.l.b16 %v1107
      %v1200 = vunpack.c.l.b16 %v1108
      %v1201 = vunpack.c.l.b16 %v1109
      %v1202 = vunpack.c.l.b16 %v1110
      %v1203 = vpack.c.b16 %v1188, %v1187
      %v1204 = vpack.c.b16 %v1190, %v1189
      %v1205 = vpack.c.b16 %v1192, %v1191
      %v1206 = vpack.c.b16 %v1194, %v1193
      %v1207 = vpack.c.b16 %v1196, %v1195
      %v1208 = vpack.c.b16 %v1198, %v1197
      %v1209 = vpack.c.b16 %v1200, %v1199
      %v1210 = vpack.c.b16 %v1202, %v1201
      %1219 = vmatpush.bf16.msra.mxu0 %v1210
      %1220 = vmatpush.bf16.msra.mxu0 %v1209
      %1221 = vmatpush.bf16.msra.mxu0 %v1208
      %1222 = vmatpush.bf16.msra.mxu0 %v1207
      %1223 = vmatpush.bf16.msra.mxu0 %v1206
      %1224 = vmatpush.bf16.msra.mxu0 %v1205
      %1225 = vmatpush.bf16.msra.mxu0 %v1204
      %1226 = vmatpush.bf16.msra.mxu0 %v1203
      %1227 = vmatmul.bf16.gmra.mxu0 %v1151
      %v1228 = vpop.f32.mrf.mxu0
      %v1229 = vadd.f32 0.0, %v1228
      %v1230 = vpop.f32.mrf.mxu0
      %v1231 = vadd.f32 0.0, %v1230
      %1232 = vmatmul.bf16.gmra.mxu0 %v1152
      %v1233 = vpop.f32.mrf.mxu0
      %v1234 = vadd.f32 0.0, %v1233
      %v1235 = vpop.f32.mrf.mxu0
      %v1236 = vadd.f32 0.0, %v1235
      %1237 = vmatmul.bf16.gmra.mxu0 %v1153
      %v1238 = vpop.f32.mrf.mxu0
      %v1239 = vadd.f32 0.0, %v1238
      %v1240 = vpop.f32.mrf.mxu0
      %v1241 = vadd.f32 0.0, %v1240
      %1242 = vmatmul.bf16.gmra.mxu0 %v1154
      %v1243 = vpop.f32.mrf.mxu0
      %v1244 = vadd.f32 0.0, %v1243
      %v1245 = vpop.f32.mrf.mxu0
      %v1246 = vadd.f32 0.0, %v1245
      %1247 = vmatmul.bf16.gmra.mxu0 %v1155
      %v1248 = vpop.f32.mrf.mxu0
      %v1249 = vadd.f32 0.0, %v1248
      %v1250 = vpop.f32.mrf.mxu0
      %v1251 = vadd.f32 0.0, %v1250
      %1252 = vmatmul.bf16.gmra.mxu0 %v1156
      %v1253 = vpop.f32.mrf.mxu0
      %v1254 = vadd.f32 0.0, %v1253
      %v1255 = vpop.f32.mrf.mxu0
      %v1256 = vadd.f32 0.0, %v1255
      %1257 = vmatmul.bf16.gmra.mxu0 %v1157
      %v1258 = vpop.f32.mrf.mxu0
      %v1259 = vadd.f32 0.0, %v1258
      %v1260 = vpop.f32.mrf.mxu0
      %v1261 = vadd.f32 0.0, %v1260
      %1262 = vmatmul.bf16.gmra.mxu0 %v1158
      %v1263 = vpop.f32.mrf.mxu0
      %v1264 = vadd.f32 0.0, %v1263
      %v1265 = vpop.f32.mrf.mxu0
      %v1266 = vadd.f32 0.0, %v1265
      %1267 = vmatmul.bf16.gmra.mxu0 %v1159
      %v1268 = vpop.f32.mrf.mxu0
      %v1269 = vadd.f32 0.0, %v1268
      %v1270 = vpop.f32.mrf.mxu0
      %v1271 = vadd.f32 0.0, %v1270
      %1272 = vmatmul.bf16.gmra.mxu0 %v1160
      %v1273 = vpop.f32.mrf.mxu0
      %v1274 = vadd.f32 0.0, %v1273
      %v1275 = vpop.f32.mrf.mxu0
      %v1276 = vadd.f32 0.0, %v1275
      %1277 = vdwg.mxu0
      %v1278 = vadd.f32 %v1049, %v1229
      %v1279 = vadd.f32 %v1050, %v1231
      %v1280 = vadd.f32 %v1051, %v1234
      %v1281 = vadd.f32 %v1052, %v1236
      %v1282 = vadd.f32 %v1053, %v1239
      %v1283 = vadd.f32 %v1054, %v1241
      %v1284 = vadd.f32 %v1055, %v1244
      %v1285 = vadd.f32 %v1056, %v1246
      %v1286 = vadd.f32 %v1057, %v1249
      %v1287 = vadd.f32 %v1058, %v1251
      %v1288 = vadd.f32 %v1059, %v1254
      %v1289 = vadd.f32 %v1060, %v1256
      %v1290 = vadd.f32 %v1061, %v1259
      %v1291 = vadd.f32 %v1062, %v1261
      %v1292 = vadd.f32 %v1063, %v1264
      %v1293 = vadd.f32 %v1064, %v1266
      %v1294 = vadd.f32 %v1065, %v1269
      %v1295 = vadd.f32 %v1066, %v1271
      %v1296 = vadd.f32 %v1067, %v1274
      %v1297 = vadd.f32 %v1068, %v1276
      %s1298 = sadd.s32 %s194, 80
      %s1299 = sshra.s32 %s1298, 3
      %s1300 = sand.u32 %s1298, 7
      %s1301 = smul.addr %s1299, 4
      %s1302 = scalar_lea.vmem %s183, %s1301
      %v1303 = vld [vmem:[%s1302] sm:$0xf]
      %v1304 = vld [vmem:[%s1302 + $0x4] sm:$0xf]
      %v1305 = vld [vmem:[%s1302 + $0x8] sm:$0xf]
      %v1306 = vld [vmem:[%s1302 + $0xc] sm:$0xf]
      %v1307 = vld [vmem:[%s1302 + $0x10] sm:$0xf]
      %v1308 = vld [vmem:[%s1302 + $0x14] sm:$0xf]
      %v1309 = vld [vmem:[%s1302 + $0x18] sm:$0xf]
      %v1310 = vld [vmem:[%s1302 + $0x1c] sm:$0xf]
      %v1311 = vld [vmem:[%s1302 + $0x20] sm:$0xf]
      %v1312 = vld [vmem:[%s1302 + $0x24] sm:$0xf]
      %v1313 = vld [vmem:[%s1302 + $0x28] sm:$0xf]
      %v1314 = vld [vmem:[%s1302 + $0x2c] sm:$0xf]
      %v1315 = vld [vmem:[%s1302 + $0x30] sm:$0xf]
      %v1316 = vld [vmem:[%s1302 + $0x34] sm:$0xf]
      %v1317 = vld [vmem:[%s1302 + $0x38] sm:$0xf]
      %v1318 = vld [vmem:[%s1302 + $0x3c] sm:$0xf]
      %v1319 = vld [vmem:[%s1302 + $0x40] sm:$0xf]
      %v1320 = vld [vmem:[%s1302 + $0x44] sm:$0xf]
      %v1321 = vld [vmem:[%s1302 + $0x48] sm:$0xf]
      %v1322 = vld [vmem:[%s1302 + $0x4c] sm:$0xf]
      %s1323 = scalar_lea.vmem %s1, 320
      %v1324 = vld [vmem:[%s1323] sm:$0xf]
      %v1325 = vld [vmem:[%s1323 + $0x4] sm:$0xf]
      %v1326 = vld [vmem:[%s1323 + $0x8] sm:$0xf]
      %v1327 = vld [vmem:[%s1323 + $0xc] sm:$0xf]
      %v1328 = vld [vmem:[%s1323 + $0x10] sm:$0xf]
      %v1329 = vld [vmem:[%s1323 + $0x14] sm:$0xf]
      %v1330 = vld [vmem:[%s1323 + $0x18] sm:$0xf]
      %v1331 = vld [vmem:[%s1323 + $0x1c] sm:$0xf]
      %v1332 = vld [vmem:[%s1323 + $0x20] sm:$0xf]
      %v1333 = vld [vmem:[%s1323 + $0x24] sm:$0xf]
      %v1334 = vld [vmem:[%s1323 + $0x28] sm:$0xf]
      %v1335 = vld [vmem:[%s1323 + $0x2c] sm:$0xf]
      %v1336 = vld [vmem:[%s1323 + $0x30] sm:$0xf]
      %v1337 = vld [vmem:[%s1323 + $0x34] sm:$0xf]
      %v1338 = vld [vmem:[%s1323 + $0x38] sm:$0xf]
      %v1339 = vld [vmem:[%s1323 + $0x3c] sm:$0xf]
      %v1360 = vunpack.c.l.b16 %v1303
      %v1361 = vunpack.c.l.b16 %v1304
      %v1362 = vunpack.c.l.b16 %v1305
      %v1363 = vunpack.c.l.b16 %v1306
      %v1364 = vunpack.c.l.b16 %v1307
      %v1365 = vunpack.c.l.b16 %v1308
      %v1366 = vunpack.c.l.b16 %v1309
      %v1367 = vunpack.c.l.b16 %v1310
      %v1368 = vunpack.c.l.b16 %v1311
      %v1369 = vunpack.c.l.b16 %v1312
      %v1370 = vunpack.c.l.b16 %v1313
      %v1371 = vunpack.c.l.b16 %v1314
      %v1372 = vunpack.c.l.b16 %v1315
      %v1373 = vunpack.c.l.b16 %v1316
      %v1374 = vunpack.c.l.b16 %v1317
      %v1375 = vunpack.c.l.b16 %v1318
      %v1376 = vunpack.c.l.b16 %v1319
      %v1377 = vunpack.c.l.b16 %v1320
      %v1378 = vunpack.c.l.b16 %v1321
      %v1379 = vunpack.c.l.b16 %v1322
      %v1380 = vpack.c.b16 %v1361, %v1360
      %v1381 = vpack.c.b16 %v1363, %v1362
      %v1382 = vpack.c.b16 %v1365, %v1364
      %v1383 = vpack.c.b16 %v1367, %v1366
      %v1384 = vpack.c.b16 %v1369, %v1368
      %v1385 = vpack.c.b16 %v1371, %v1370
      %v1386 = vpack.c.b16 %v1373, %v1372
      %v1387 = vpack.c.b16 %v1375, %v1374
      %v1388 = vpack.c.b16 %v1377, %v1376
      %v1389 = vpack.c.b16 %v1379, %v1378
      %v1416 = vunpack.c.l.b16 %v1324
      %v1417 = vunpack.c.l.b16 %v1325
      %v1418 = vunpack.c.l.b16 %v1326
      %v1419 = vunpack.c.l.b16 %v1327
      %v1420 = vunpack.c.l.b16 %v1328
      %v1421 = vunpack.c.l.b16 %v1329
      %v1422 = vunpack.c.l.b16 %v1330
      %v1423 = vunpack.c.l.b16 %v1331
      %v1424 = vunpack.c.l.b16 %v1332
      %v1425 = vunpack.c.l.b16 %v1333
      %v1426 = vunpack.c.l.b16 %v1334
      %v1427 = vunpack.c.l.b16 %v1335
      %v1428 = vunpack.c.l.b16 %v1336
      %v1429 = vunpack.c.l.b16 %v1337
      %v1430 = vunpack.c.l.b16 %v1338
      %v1431 = vunpack.c.l.b16 %v1339
      %v1432 = vpack.c.b16 %v1417, %v1416
      %v1433 = vpack.c.b16 %v1419, %v1418
      %v1434 = vpack.c.b16 %v1421, %v1420
      %v1435 = vpack.c.b16 %v1423, %v1422
      %v1436 = vpack.c.b16 %v1425, %v1424
      %v1437 = vpack.c.b16 %v1427, %v1426
      %v1438 = vpack.c.b16 %v1429, %v1428
      %v1439 = vpack.c.b16 %v1431, %v1430
      %1448 = vmatpush.bf16.msra.mxu0 %v1439
      %1449 = vmatpush.bf16.msra.mxu0 %v1438
      %1450 = vmatpush.bf16.msra.mxu0 %v1437
      %1451 = vmatpush.bf16.msra.mxu0 %v1436
      %1452 = vmatpush.bf16.msra.mxu0 %v1435
      %1453 = vmatpush.bf16.msra.mxu0 %v1434
      %1454 = vmatpush.bf16.msra.mxu0 %v1433
      %1455 = vmatpush.bf16.msra.mxu0 %v1432
      %1456 = vmatmul.bf16.gmra.mxu0 %v1380
      %v1457 = vpop.f32.mrf.mxu0
      %v1458 = vadd.f32 0.0, %v1457
      %v1459 = vpop.f32.mrf.mxu0
      %v1460 = vadd.f32 0.0, %v1459
      %1461 = vmatmul.bf16.gmra.mxu0 %v1381
      %v1462 = vpop.f32.mrf.mxu0
      %v1463 = vadd.f32 0.0, %v1462
      %v1464 = vpop.f32.mrf.mxu0
      %v1465 = vadd.f32 0.0, %v1464
      %1466 = vmatmul.bf16.gmra.mxu0 %v1382
      %v1467 = vpop.f32.mrf.mxu0
      %v1468 = vadd.f32 0.0, %v1467
      %v1469 = vpop.f32.mrf.mxu0
      %v1470 = vadd.f32 0.0, %v1469
      %1471 = vmatmul.bf16.gmra.mxu0 %v1383
      %v1472 = vpop.f32.mrf.mxu0
      %v1473 = vadd.f32 0.0, %v1472
      %v1474 = vpop.f32.mrf.mxu0
      %v1475 = vadd.f32 0.0, %v1474
      %1476 = vmatmul.bf16.gmra.mxu0 %v1384
      %v1477 = vpop.f32.mrf.mxu0
      %v1478 = vadd.f32 0.0, %v1477
      %v1479 = vpop.f32.mrf.mxu0
      %v1480 = vadd.f32 0.0, %v1479
      %1481 = vmatmul.bf16.gmra.mxu0 %v1385
      %v1482 = vpop.f32.mrf.mxu0
      %v1483 = vadd.f32 0.0, %v1482
      %v1484 = vpop.f32.mrf.mxu0
      %v1485 = vadd.f32 0.0, %v1484
      %1486 = vmatmul.bf16.gmra.mxu0 %v1386
      %v1487 = vpop.f32.mrf.mxu0
      %v1488 = vadd.f32 0.0, %v1487
      %v1489 = vpop.f32.mrf.mxu0
      %v1490 = vadd.f32 0.0, %v1489
      %1491 = vmatmul.bf16.gmra.mxu0 %v1387
      %v1492 = vpop.f32.mrf.mxu0
      %v1493 = vadd.f32 0.0, %v1492
      %v1494 = vpop.f32.mrf.mxu0
      %v1495 = vadd.f32 0.0, %v1494
      %1496 = vmatmul.bf16.gmra.mxu0 %v1388
      %v1497 = vpop.f32.mrf.mxu0
      %v1498 = vadd.f32 0.0, %v1497
      %v1499 = vpop.f32.mrf.mxu0
      %v1500 = vadd.f32 0.0, %v1499
      %1501 = vmatmul.bf16.gmra.mxu0 %v1389
      %v1502 = vpop.f32.mrf.mxu0
      %v1503 = vadd.f32 0.0, %v1502
      %v1504 = vpop.f32.mrf.mxu0
      %v1505 = vadd.f32 0.0, %v1504
      %1506 = vdwg.mxu0
      %v1507 = vadd.f32 %v1278, %v1458
      %v1508 = vadd.f32 %v1279, %v1460
      %v1509 = vadd.f32 %v1280, %v1463
      %v1510 = vadd.f32 %v1281, %v1465
      %v1511 = vadd.f32 %v1282, %v1468
      %v1512 = vadd.f32 %v1283, %v1470
      %v1513 = vadd.f32 %v1284, %v1473
      %v1514 = vadd.f32 %v1285, %v1475
      %v1515 = vadd.f32 %v1286, %v1478
      %v1516 = vadd.f32 %v1287, %v1480
      %v1517 = vadd.f32 %v1288, %v1483
      %v1518 = vadd.f32 %v1289, %v1485
      %v1519 = vadd.f32 %v1290, %v1488
      %v1520 = vadd.f32 %v1291, %v1490
      %v1521 = vadd.f32 %v1292, %v1493
      %v1522 = vadd.f32 %v1293, %v1495
      %v1523 = vadd.f32 %v1294, %v1498
      %v1524 = vadd.f32 %v1295, %v1500
      %v1525 = vadd.f32 %v1296, %v1503
      %v1526 = vadd.f32 %v1297, %v1505
      %s1527 = sadd.s32 %s194, 96
      %s1528 = sshra.s32 %s1527, 3
      %s1529 = sand.u32 %s1527, 7
      %s1530 = smul.addr %s1528, 4
      %s1531 = scalar_lea.vmem %s183, %s1530
      %v1532 = vld [vmem:[%s1531] sm:$0xf]
      %v1533 = vld [vmem:[%s1531 + $0x4] sm:$0xf]
      %v1534 = vld [vmem:[%s1531 + $0x8] sm:$0xf]
      %v1535 = vld [vmem:[%s1531 + $0xc] sm:$0xf]
      %v1536 = vld [vmem:[%s1531 + $0x10] sm:$0xf]
      %v1537 = vld [vmem:[%s1531 + $0x14] sm:$0xf]
      %v1538 = vld [vmem:[%s1531 + $0x18] sm:$0xf]
      %v1539 = vld [vmem:[%s1531 + $0x1c] sm:$0xf]
      %v1540 = vld [vmem:[%s1531 + $0x20] sm:$0xf]
      %v1541 = vld [vmem:[%s1531 + $0x24] sm:$0xf]
      %v1542 = vld [vmem:[%s1531 + $0x28] sm:$0xf]
      %v1543 = vld [vmem:[%s1531 + $0x2c] sm:$0xf]
      %v1544 = vld [vmem:[%s1531 + $0x30] sm:$0xf]
      %v1545 = vld [vmem:[%s1531 + $0x34] sm:$0xf]
      %v1546 = vld [vmem:[%s1531 + $0x38] sm:$0xf]
      %v1547 = vld [vmem:[%s1531 + $0x3c] sm:$0xf]
      %v1548 = vld [vmem:[%s1531 + $0x40] sm:$0xf]
      %v1549 = vld [vmem:[%s1531 + $0x44] sm:$0xf]
      %v1550 = vld [vmem:[%s1531 + $0x48] sm:$0xf]
      %v1551 = vld [vmem:[%s1531 + $0x4c] sm:$0xf]
      %s1552 = scalar_lea.vmem %s1, 384
      %v1553 = vld [vmem:[%s1552] sm:$0xf]
      %v1554 = vld [vmem:[%s1552 + $0x4] sm:$0xf]
      %v1555 = vld [vmem:[%s1552 + $0x8] sm:$0xf]
      %v1556 = vld [vmem:[%s1552 + $0xc] sm:$0xf]
      %v1557 = vld [vmem:[%s1552 + $0x10] sm:$0xf]
      %v1558 = vld [vmem:[%s1552 + $0x14] sm:$0xf]
      %v1559 = vld [vmem:[%s1552 + $0x18] sm:$0xf]
      %v1560 = vld [vmem:[%s1552 + $0x1c] sm:$0xf]
      %v1561 = vld [vmem:[%s1552 + $0x20] sm:$0xf]
      %v1562 = vld [vmem:[%s1552 + $0x24] sm:$0xf]
      %v1563 = vld [vmem:[%s1552 + $0x28] sm:$0xf]
      %v1564 = vld [vmem:[%s1552 + $0x2c] sm:$0xf]
      %v1565 = vld [vmem:[%s1552 + $0x30] sm:$0xf]
      %v1566 = vld [vmem:[%s1552 + $0x34] sm:$0xf]
      %v1567 = vld [vmem:[%s1552 + $0x38] sm:$0xf]
      %v1568 = vld [vmem:[%s1552 + $0x3c] sm:$0xf]
      %v1589 = vunpack.c.l.b16 %v1532
      %v1590 = vunpack.c.l.b16 %v1533
      %v1591 = vunpack.c.l.b16 %v1534
      %v1592 = vunpack.c.l.b16 %v1535
      %v1593 = vunpack.c.l.b16 %v1536
      %v1594 = vunpack.c.l.b16 %v1537
      %v1595 = vunpack.c.l.b16 %v1538
      %v1596 = vunpack.c.l.b16 %v1539
      %v1597 = vunpack.c.l.b16 %v1540
      %v1598 = vunpack.c.l.b16 %v1541
      %v1599 = vunpack.c.l.b16 %v1542
      %v1600 = vunpack.c.l.b16 %v1543
      %v1601 = vunpack.c.l.b16 %v1544
      %v1602 = vunpack.c.l.b16 %v1545
      %v1603 = vunpack.c.l.b16 %v1546
      %v1604 = vunpack.c.l.b16 %v1547
      %v1605 = vunpack.c.l.b16 %v1548
      %v1606 = vunpack.c.l.b16 %v1549
      %v1607 = vunpack.c.l.b16 %v1550
      %v1608 = vunpack.c.l.b16 %v1551
      %v1609 = vpack.c.b16 %v1590, %v1589
      %v1610 = vpack.c.b16 %v1592, %v1591
      %v1611 = vpack.c.b16 %v1594, %v1593
      %v1612 = vpack.c.b16 %v1596, %v1595
      %v1613 = vpack.c.b16 %v1598, %v1597
      %v1614 = vpack.c.b16 %v1600, %v1599
      %v1615 = vpack.c.b16 %v1602, %v1601
      %v1616 = vpack.c.b16 %v1604, %v1603
      %v1617 = vpack.c.b16 %v1606, %v1605
      %v1618 = vpack.c.b16 %v1608, %v1607
      %v1645 = vunpack.c.l.b16 %v1553
      %v1646 = vunpack.c.l.b16 %v1554
      %v1647 = vunpack.c.l.b16 %v1555
      %v1648 = vunpack.c.l.b16 %v1556
      %v1649 = vunpack.c.l.b16 %v1557
      %v1650 = vunpack.c.l.b16 %v1558
      %v1651 = vunpack.c.l.b16 %v1559
      %v1652 = vunpack.c.l.b16 %v1560
      %v1653 = vunpack.c.l.b16 %v1561
      %v1654 = vunpack.c.l.b16 %v1562
      %v1655 = vunpack.c.l.b16 %v1563
      %v1656 = vunpack.c.l.b16 %v1564
      %v1657 = vunpack.c.l.b16 %v1565
      %v1658 = vunpack.c.l.b16 %v1566
      %v1659 = vunpack.c.l.b16 %v1567
      %v1660 = vunpack.c.l.b16 %v1568
      %v1661 = vpack.c.b16 %v1646, %v1645
      %v1662 = vpack.c.b16 %v1648, %v1647
      %v1663 = vpack.c.b16 %v1650, %v1649
      %v1664 = vpack.c.b16 %v1652, %v1651
      %v1665 = vpack.c.b16 %v1654, %v1653
      %v1666 = vpack.c.b16 %v1656, %v1655
      %v1667 = vpack.c.b16 %v1658, %v1657
      %v1668 = vpack.c.b16 %v1660, %v1659
      %1677 = vmatpush.bf16.msra.mxu0 %v1668
      %1678 = vmatpush.bf16.msra.mxu0 %v1667
      %1679 = vmatpush.bf16.msra.mxu0 %v1666
      %1680 = vmatpush.bf16.msra.mxu0 %v1665
      %1681 = vmatpush.bf16.msra.mxu0 %v1664
      %1682 = vmatpush.bf16.msra.mxu0 %v1663
      %1683 = vmatpush.bf16.msra.mxu0 %v1662
      %1684 = vmatpush.bf16.msra.mxu0 %v1661
      %1685 = vmatmul.bf16.gmra.mxu0 %v1609
      %v1686 = vpop.f32.mrf.mxu0
      %v1687 = vadd.f32 0.0, %v1686
      %v1688 = vpop.f32.mrf.mxu0
      %v1689 = vadd.f32 0.0, %v1688
      %1690 = vmatmul.bf16.gmra.mxu0 %v1610
      %v1691 = vpop.f32.mrf.mxu0
      %v1692 = vadd.f32 0.0, %v1691
      %v1693 = vpop.f32.mrf.mxu0
      %v1694 = vadd.f32 0.0, %v1693
      %1695 = vmatmul.bf16.gmra.mxu0 %v1611
      %v1696 = vpop.f32.mrf.mxu0
      %v1697 = vadd.f32 0.0, %v1696
      %v1698 = vpop.f32.mrf.mxu0
      %v1699 = vadd.f32 0.0, %v1698
      %1700 = vmatmul.bf16.gmra.mxu0 %v1612
      %v1701 = vpop.f32.mrf.mxu0
      %v1702 = vadd.f32 0.0, %v1701
      %v1703 = vpop.f32.mrf.mxu0
      %v1704 = vadd.f32 0.0, %v1703
      %1705 = vmatmul.bf16.gmra.mxu0 %v1613
      %v1706 = vpop.f32.mrf.mxu0
      %v1707 = vadd.f32 0.0, %v1706
      %v1708 = vpop.f32.mrf.mxu0
      %v1709 = vadd.f32 0.0, %v1708
      %1710 = vmatmul.bf16.gmra.mxu0 %v1614
      %v1711 = vpop.f32.mrf.mxu0
      %v1712 = vadd.f32 0.0, %v1711
      %v1713 = vpop.f32.mrf.mxu0
      %v1714 = vadd.f32 0.0, %v1713
      %1715 = vmatmul.bf16.gmra.mxu0 %v1615
      %v1716 = vpop.f32.mrf.mxu0
      %v1717 = vadd.f32 0.0, %v1716
      %v1718 = vpop.f32.mrf.mxu0
      %v1719 = vadd.f32 0.0, %v1718
      %1720 = vmatmul.bf16.gmra.mxu0 %v1616
      %v1721 = vpop.f32.mrf.mxu0
      %v1722 = vadd.f32 0.0, %v1721
      %v1723 = vpop.f32.mrf.mxu0
      %v1724 = vadd.f32 0.0, %v1723
      %1725 = vmatmul.bf16.gmra.mxu0 %v1617
      %v1726 = vpop.f32.mrf.mxu0
      %v1727 = vadd.f32 0.0, %v1726
      %v1728 = vpop.f32.mrf.mxu0
      %v1729 = vadd.f32 0.0, %v1728
      %1730 = vmatmul.bf16.gmra.mxu0 %v1618
      %v1731 = vpop.f32.mrf.mxu0
      %v1732 = vadd.f32 0.0, %v1731
      %v1733 = vpop.f32.mrf.mxu0
      %v1734 = vadd.f32 0.0, %v1733
      %1735 = vdwg.mxu0
      %v1736 = vadd.f32 %v1507, %v1687
      %v1737 = vadd.f32 %v1508, %v1689
      %v1738 = vadd.f32 %v1509, %v1692
      %v1739 = vadd.f32 %v1510, %v1694
      %v1740 = vadd.f32 %v1511, %v1697
      %v1741 = vadd.f32 %v1512, %v1699
      %v1742 = vadd.f32 %v1513, %v1702
      %v1743 = vadd.f32 %v1514, %v1704
      %v1744 = vadd.f32 %v1515, %v1707
      %v1745 = vadd.f32 %v1516, %v1709
      %v1746 = vadd.f32 %v1517, %v1712
      %v1747 = vadd.f32 %v1518, %v1714
      %v1748 = vadd.f32 %v1519, %v1717
      %v1749 = vadd.f32 %v1520, %v1719
      %v1750 = vadd.f32 %v1521, %v1722
      %v1751 = vadd.f32 %v1522, %v1724
      %v1752 = vadd.f32 %v1523, %v1727
      %v1753 = vadd.f32 %v1524, %v1729
      %v1754 = vadd.f32 %v1525, %v1732
      %v1755 = vadd.f32 %v1526, %v1734
      %v1756 = vld [vmem:[%s2] sm:$0x1]
      %v1757 = vperm.slane %v1756, 0
      %v1758 = vmul.f32 %v1736, %v1757
      %v1759 = vmul.f32 %v1737, %v1757
      %v1760 = vmul.f32 %v1738, %v1757
      %v1761 = vmul.f32 %v1739, %v1757
      %v1762 = vmul.f32 %v1740, %v1757
      %v1763 = vmul.f32 %v1741, %v1757
      %v1764 = vmul.f32 %v1742, %v1757
      %v1765 = vmul.f32 %v1743, %v1757
      %v1766 = vmul.f32 %v1744, %v1757
      %v1767 = vmul.f32 %v1745, %v1757
      %v1768 = vmul.f32 %v1746, %v1757
      %v1769 = vmul.f32 %v1747, %v1757
      %v1770 = vmul.f32 %v1748, %v1757
      %v1771 = vmul.f32 %v1749, %v1757
      %v1772 = vmul.f32 %v1750, %v1757
      %v1773 = vmul.f32 %v1751, %v1757
      %v1774 = vmul.f32 %v1752, %v1757
      %v1775 = vmul.f32 %v1753, %v1757
      %v1776 = vmul.f32 %v1754, %v1757
      %v1777 = vmul.f32 %v1755, %v1757
      %v1778 = vld [vmem:[%s2 + $0x1] sm:$0x1]
      %v1779 = vperm.slane %v1778, 0
      %v1780 = vadd.f32 %v1758, %v1779
      %v1781 = vadd.f32 %v1759, %v1779
      %v1782 = vadd.f32 %v1760, %v1779
      %v1783 = vadd.f32 %v1761, %v1779
      %v1784 = vadd.f32 %v1762, %v1779
      %v1785 = vadd.f32 %v1763, %v1779
      %v1786 = vadd.f32 %v1764, %v1779
      %v1787 = vadd.f32 %v1765, %v1779
      %v1788 = vadd.f32 %v1766, %v1779
      %v1789 = vadd.f32 %v1767, %v1779
      %v1790 = vadd.f32 %v1768, %v1779
      %v1791 = vadd.f32 %v1769, %v1779
      %v1792 = vadd.f32 %v1770, %v1779
      %v1793 = vadd.f32 %v1771, %v1779
      %v1794 = vadd.f32 %v1772, %v1779
      %v1795 = vadd.f32 %v1773, %v1779
      %v1796 = vadd.f32 %v1774, %v1779
      %v1797 = vadd.f32 %v1775, %v1779
      %v1798 = vadd.f32 %v1776, %v1779
      %v1799 = vadd.f32 %v1777, %v1779
      %v1800 = vmax.f32 %v1780, 0.0
      %v1801 = vmax.f32 %v1781, 0.0
      %v1802 = vmax.f32 %v1782, 0.0
      %v1803 = vmax.f32 %v1783, 0.0
      %v1804 = vmax.f32 %v1784, 0.0
      %v1805 = vmax.f32 %v1785, 0.0
      %v1806 = vmax.f32 %v1786, 0.0
      %v1807 = vmax.f32 %v1787, 0.0
      %v1808 = vmax.f32 %v1788, 0.0
      %v1809 = vmax.f32 %v1789, 0.0
      %v1810 = vmax.f32 %v1790, 0.0
      %v1811 = vmax.f32 %v1791, 0.0
      %v1812 = vmax.f32 %v1792, 0.0
      %v1813 = vmax.f32 %v1793, 0.0
      %v1814 = vmax.f32 %v1794, 0.0
      %v1815 = vmax.f32 %v1795, 0.0
      %v1816 = vmax.f32 %v1796, 0.0
      %v1817 = vmax.f32 %v1797, 0.0
      %v1818 = vmax.f32 %v1798, 0.0
      %v1819 = vmax.f32 %v1799, 0.0
      %v1820 = vpack.c.bf16 %v1800, %v1800
      %v1821 = vpack.c.bf16 %v1801, %v1801
      %v1822 = vpack.c.bf16 %v1802, %v1802
      %v1823 = vpack.c.bf16 %v1803, %v1803
      %v1824 = vpack.c.bf16 %v1804, %v1804
      %v1825 = vpack.c.bf16 %v1805, %v1805
      %v1826 = vpack.c.bf16 %v1806, %v1806
      %v1827 = vpack.c.bf16 %v1807, %v1807
      %v1828 = vpack.c.bf16 %v1808, %v1808
      %v1829 = vpack.c.bf16 %v1809, %v1809
      %v1830 = vpack.c.bf16 %v1810, %v1810
      %v1831 = vpack.c.bf16 %v1811, %v1811
      %v1832 = vpack.c.bf16 %v1812, %v1812
      %v1833 = vpack.c.bf16 %v1813, %v1813
      %v1834 = vpack.c.bf16 %v1814, %v1814
      %v1835 = vpack.c.bf16 %v1815, %v1815
      %v1836 = vpack.c.bf16 %v1816, %v1816
      %v1837 = vpack.c.bf16 %v1817, %v1817
      %v1838 = vpack.c.bf16 %v1818, %v1818
      %v1839 = vpack.c.bf16 %v1819, %v1819
      %1840 = vst [vmem:[%s192] sm:$0xf] %v1820
      %1841 = vst [vmem:[%s192 + $0x4] sm:$0xf] %v1821
      %1842 = vst [vmem:[%s192 + $0x8] sm:$0xf] %v1822
      %1843 = vst [vmem:[%s192 + $0xc] sm:$0xf] %v1823
      %1844 = vst [vmem:[%s192 + $0x10] sm:$0xf] %v1824
      %1845 = vst [vmem:[%s192 + $0x14] sm:$0xf] %v1825
      %1846 = vst [vmem:[%s192 + $0x18] sm:$0xf] %v1826
      %1847 = vst [vmem:[%s192 + $0x1c] sm:$0xf] %v1827
      %1848 = vst [vmem:[%s192 + $0x20] sm:$0xf] %v1828
      %1849 = vst [vmem:[%s192 + $0x24] sm:$0xf] %v1829
      %1850 = vst [vmem:[%s192 + $0x28] sm:$0xf] %v1830
      %1851 = vst [vmem:[%s192 + $0x2c] sm:$0xf] %v1831
      %1852 = vst [vmem:[%s192 + $0x30] sm:$0xf] %v1832
      %1853 = vst [vmem:[%s192 + $0x34] sm:$0xf] %v1833
      %1854 = vst [vmem:[%s192 + $0x38] sm:$0xf] %v1834
      %1855 = vst [vmem:[%s192 + $0x3c] sm:$0xf] %v1835
      %1856 = vst [vmem:[%s192 + $0x40] sm:$0xf] %v1836
      %1857 = vst [vmem:[%s192 + $0x44] sm:$0xf] %v1837
      %1858 = vst [vmem:[%s192 + $0x48] sm:$0xf] %v1838
      %1859 = vst [vmem:[%s192 + $0x4c] sm:$0xf] %v1839
      %s1860 = smul.u32 20, %s19
      %p1861 = scmp.lt.s32.totalorder %s18, 1
      %s1862 = scalar_select %p1861, %s18, 1
      %p1863 = scmp.lt.s32.totalorder %s1860, 19
      %s1864 = scalar_select %p1863, %s1860, 19
      %s1865 = smul.addr %s1862, 20
      %s1866 = sadd.s32 %s1864, %s1865
      %s1867 = smul.addr %s1866, 4
      %s1868 = scalar_lea.vmem %s3, %s1867
      // Predicated region
      $region33: #{generator_forward.3} parent=31 // pred_check
        %p1869 = pneg %p114
      $region34: #{generator_forward.3} parent=31 // pred_check_branch
        %1871 = sbr.rel (%p1869) target = $region36
      $region35: #{generator_forward.3} parent=31 // pred_region
        %s1872 = smul.u32 20, %s19
      $region36: #{generator_forward.3} parent=31 // pred_fallthru
        _
    $region32: #{generator_forward.3} parent=5 // pred_fallthru
      _
    %p1873 = scmp.le.s32.totalorder 2, %s9
    // Predicated region
    $region37: #{generator_forward.3} parent=5 // pred_check
      %p1874 = pneg %p1873
    $region38: #{generator_forward.3} parent=5 // pred_check_branch
      %1876 = sbr.rel (%p1874) target = $region40
    $region39: #{generator_forward.3} parent=5 // pred_region
      %s1877 = ssub.s32 %s9, 2
      // Predicated region
      $region41: #{generator_forward.3} parent=39 // pred_check
        %p1878 = pneg %p120
      $region42: #{generator_forward.3} parent=39 // pred_check_branch
        %1880 = sbr.rel (%p1878) target = $region44
      $region43: #{generator_forward.3} parent=39 // pred_region
        %s1881 = smul.u32 20, %s21
        %p1882 = scmp.lt.s32.totalorder %s20, 1
        %s1883 = scalar_select %p1882, %s20, 1
        %p1884 = scmp.lt.s32.totalorder %s1881, 19
        %s1885 = scalar_select %p1884, %s1881, 19
        %s1886 = smul.addr %s1883, 20
        %s1887 = sadd.s32 %s1885, %s1886
        %s1888 = smul.addr %s1887, 4
        %s1889 = scalar_lea.vmem %s3, %s1888
      $region44: #{generator_forward.3} parent=39 // pred_fallthru
        _
    $region40: #{generator_forward.3} parent=5 // pred_fallthru
      _
  $region6: #{generator_forward.3} parent=0 // loop_footer
    %s13 = sadd.s32 1, %s9
  $region7: #{generator_forward.3} parent=0 // loop_footer_branch
    %8 = sbr.rel target = $region3
  $region8: #{generator_forward.3} parent=0 // loop_exit
    _

// kernel: generator_forward.4
$region0: #{generator_forward.4}
  #allocation0 [shape = 'u32[]', space=smem, size = 0x4, offset = 0x4, fixed_abs, tag = 'smem constant byte address 0x4 - core index']
  #allocation1 [shape = 'u32[72,128]{1,0:T(1,128)}', space=vmem, size = 0x9000, scoped, tag = 'internal scratch']
  %s0 = inlined_call_operand.vmem [shape: bf16[2,192,128], index: 0, kind: input, shape index: {}]
  %s1 = inlined_call_operand.vmem [shape: bf16[3,128,128], index: 1, kind: input, shape index: {}]
  %s2 = inlined_call_operand.vmem [shape: f32[8,128], index: 2, kind: input, shape index: {}]
  %s3 = inlined_call_operand.vmem [shape: bf16[2,160,128], index: 3, kind: output, shape index: {}]
  %s4 = sld [smem:[#allocation0]]
  $region45: #{generator_forward.4} parent=0
    _
  %s6 = ssub.s32 1, %s4
  %s7 = scalar_select 0, %s6, %s4
  loop: start=0, step=1, limit=4
  $region2: #{generator_forward.4} parent=0 // loop_pre_header
    _
  $region3: #{generator_forward.4} parent=0 // loop_header
    %s9 = sphi 0, %s13
    %p10 = scmp.ge.s32.totalorder %s9, 4
    %s16 = sphi 0, %s28
    %s17 = sphi 0, %s24
    %s18 = sphi 0, %s16
    %s19 = sphi 0, %s17
    %s20 = sphi 0, %s18
    %s21 = sphi 0, %s19
    %s31 = sphi 0, %s33
    %s34 = sphi 0, %s31
    %s35 = sphi 0, %s34
    %s51 = sphi 0, %s35
    %s55 = sphi 0, %s55
    %s57 = sphi 0, %s55
    %s58 = sphi 0, %s57
    %s72 = sphi 0, %s58
    %s76 = sphi 0, %s76
    %s78 = sphi 0, %s76
    %s79 = sphi 0, %s78
    %s93 = sphi 0, %s79
    %s101 = sphi 0, %s103
    %s104 = sphi 0, %s101
    %s105 = sphi 0, %s104
    %s121 = sphi 0, %s105
  $region4: #{generator_forward.4} parent=0 // loop_header_branch
    %12 = sbr.rel (%p10) target = $region8
  $region5: #{generator_forward.4} parent=0 // loop_body
    %s14 = ssub.s32 %s9, 1
    %s15 = ssub.s32 %s9, 2
    %s22 = sadd.s32 1, %s17
    %p23 = scmp.ge.s32.totalorder %s22, 1
    %s24 = scalar_select %p23, 0, %s22
    %s25 = sadd.s32 1, %s16
    %s26 = scalar_select %p23, %s25, %s16
    %p27 = scmp.ge.s32.totalorder %s26, 2
    %s28 = scalar_select %p27, 0, %s26
    %s29 = ssub.s32 %s16, %s28
    %p30 = scmp.eq.s32.totalorder %s29, 0
    %s32 = sadd.s32 %s31, 1
    %s33 = scalar_select %p30, %s31, %s32
    %p36 = pneg %p30
    %p37 = scmp.eq.s32.totalorder %s9, 1
    %p38 = por %p36, %p37
    %p39 = scmp.ne.s32.totalorder %s31, %s34
    %p40 = scmp.eq.s32.totalorder %s9, 0
    %p41 = por %p39, %p40
    %p42 = scmp.ne.s32.totalorder %s31, %s34
    %p43 = scmp.eq.s32.totalorder %s14, 1
    %p44 = por %p42, %p43
    %p45 = scmp.ne.s32.totalorder %s34, %s35
    %p46 = scmp.eq.s32.totalorder %s14, 0
    %p47 = por %p45, %p46
    %p48 = scmp.ne.s32.totalorder %s34, %s35
    %p49 = scmp.eq.s32.totalorder %s15, 1
    %p50 = por %p48, %p49
    %p52 = scmp.ne.s32.totalorder %s35, %s51
    %p53 = scmp.eq.s32.totalorder %s15, 0
    %p54 = por %p52, %p53
    %s56 = sadd.s32 %s55, 1
    %p59 = scmp.eq.s32.totalorder %s9, 1
    %p60 = scmp.ne.s32.totalorder %s55, %s57
    %p61 = scmp.eq.s32.totalorder %s9, 0
    %p62 = por %p60, %p61
    %p63 = scmp.ne.s32.totalorder %s55, %s57
    %p64 = scmp.eq.s32.totalorder %s14, 1
    %p65 = por %p63, %p64
    %p66 = scmp.ne.s32.totalorder %s57, %s58
    %p67 = scmp.eq.s32.totalorder %s14, 0
    %p68 = por %p66, %p67
    %p69 = scmp.ne.s32.totalorder %s57, %s58
    %p70 = scmp.eq.s32.totalorder %s15, 1
    %p71 = por %p69, %p70
    %p73 = scmp.ne.s32.totalorder %s58, %s72
    %p74 = scmp.eq.s32.totalorder %s15, 0
    %p75 = por %p73, %p74
    %s77 = sadd.s32 %s76, 1
    %p80 = scmp.eq.s32.totalorder %s9, 1
    %p81 = scmp.ne.s32.totalorder %s76, %s78
    %p82 = scmp.eq.s32.totalorder %s9, 0
    %p83 = por %p81, %p82
    %p84 = scmp.ne.s32.totalorder %s76, %s78
    %p85 = scmp.eq.s32.totalorder %s14, 1
    %p86 = por %p84, %p85
    %p87 = scmp.ne.s32.totalorder %s78, %s79
    %p88 = scmp.eq.s32.totalorder %s14, 0
    %p89 = por %p87, %p88
    %p90 = scmp.ne.s32.totalorder %s78, %s79
    %p91 = scmp.eq.s32.totalorder %s15, 1
    %p92 = por %p90, %p91
    %p94 = scmp.ne.s32.totalorder %s79, %s93
    %p95 = scmp.eq.s32.totalorder %s15, 0
    %p96 = por %p94, %p95
    %s97 = ssub.s32 %s16, %s28
    %s98 = ssub.s32 %s17, %s24
    %s99 = sor.u32 %s97, %s98
    %p100 = scmp.eq.s32.totalorder %s99, 0
    %s102 = sadd.s32 %s101, 1
    %s103 = scalar_select %p100, %s101, %s102
    %p106 = pneg %p100
    %p107 = scmp.eq.s32.totalorder %s9, 1
    %p108 = por %p106, %p107
    %p109 = scmp.ne.s32.totalorder %s101, %s104
    %p110 = scmp.eq.s32.totalorder %s9, 0
    %p111 = por %p109, %p110
    %p112 = scmp.ne.s32.totalorder %s101, %s104
    %p113 = scmp.eq.s32.totalorder %s14, 1
    %p114 = por %p112, %p113
    %p115 = scmp.ne.s32.totalorder %s104, %s105
    %p116 = scmp.eq.s32.totalorder %s14, 0
    %p117 = por %p115, %p116
    %p118 = scmp.ne.s32.totalorder %s104, %s105
    %p119 = scmp.eq.s32.totalorder %s15, 1
    %p120 = por %p118, %p119
    %p122 = scmp.ne.s32.totalorder %s105, %s121
    %p123 = scmp.eq.s32.totalorder %s15, 0
    %p124 = por %p122, %p123
    %p125 = scmp.le.s32.totalorder 1, %s9
    %p126 = scmp.lt.s32.totalorder %s9, 3
    %p127 = pnand %p125, %p126
    %p128 = pneg %p127
    // Predicated region
    $region9: #{generator_forward.4} parent=5 // pred_check
      _
    $region10: #{generator_forward.4} parent=5 // pred_check_branch
      %130 = sbr.rel (%p127) target = $region12
    $region11: #{generator_forward.4} parent=5 // pred_region
      %s131 = ssub.s32 %s9, 1
      // Predicated region
      $region13: #{generator_forward.4} parent=11 // pred_check
        %p132 = pneg %p68
      $region14: #{generator_forward.4} parent=11 // pred_check_branch
        %134 = sbr.rel (%p132) target = $region16
      $region15: #{generator_forward.4} parent=11 // pred_region
        _
      $region16: #{generator_forward.4} parent=11 // pred_fallthru
        _
      // Predicated region
      $region17: #{generator_forward.4} parent=11 // pred_check
        %p135 = pneg %p89
      $region18: #{generator_forward.4} parent=11 // pred_check_branch
        %137 = sbr.rel (%p135) target = $region20
      $region19: #{generator_forward.4} parent=11 // pred_region
        _
      $region20: #{generator_forward.4} parent=11 // pred_fallthru
        _
    $region12: #{generator_forward.4} parent=5 // pred_fallthru
      _
    %p138 = scmp.lt.s32.totalorder %s9, 2
    // Predicated region
    $region21: #{generator_forward.4} parent=5 // pred_check
      %p139 = pneg %p138
    $region22: #{generator_forward.4} parent=5 // pred_check_branch
      %141 = sbr.rel (%p139) target = $region24
    $region23: #{generator_forward.4} parent=5 // pred_region
      // Predicated region
      $region25: #{generator_forward.4} parent=23 // pred_check
        %p142 = pneg %p41
      $region26: #{generator_forward.4} parent=23 // pred_check_branch
        %144 = sbr.rel (%p142) target = $region28
      $region27: #{generator_forward.4} parent=23 // pred_region
        %p145 = scmp.lt.s32.totalorder %s16, 1
        %s146 = scalar_select %p145, %s16, 1
        %s147 = smul.addr %s146, 24
        %s148 = smul.addr %s147, 4
        %s149 = scalar_lea.vmem %s0, %s148
      $region28: #{generator_forward.4} parent=23 // pred_fallthru
        _
    $region24: #{generator_forward.4} parent=5 // pred_fallthru
      _
    %p150 = scmp.le.s32.totalorder 1, %s9
    %p151 = scmp.lt.s32.totalorder %s9, 3
    %p152 = pnand %p150, %p151
    %p153 = pneg %p152
    // Predicated region
    $region29: #{generator_forward.4} parent=5 // pred_check
      _
    $region30: #{generator_forward.4} parent=5 // pred_check_branch
      %155 = sbr.rel (%p152) target = $region32
    $region31: #{generator_forward.4} parent=5 // pred_region
      %s156 = ssub.s32 %s9, 1
      %p157 = scmp.lt.s32.totalorder %s18, 1
      %s158 = scalar_select %p157, %s18, 1
      %s159 = smul.addr %s158, 24
      %s160 = smul.addr %s159, 4
      %s161 = scalar_lea.vmem %s0, %s160
      %p162 = pneg %p47
      %p163 = pneg %p44
      %p164 = pneg %p68
      %p165 = pneg %p65
      %p166 = pneg %p89
      %p167 = pneg %p86
      %p168 = pneg %p117
      %p169 = pneg %p114
      %s170 = smul.u32 20, %s19
      %p171 = scmp.lt.s32.totalorder %s18, 1
      %s172 = scalar_select %p171, %s18, 1
      %p173 = scmp.lt.s32.totalorder %s170, 19
      %s174 = scalar_select %p173, %s170, 19
      %s175 = smul.addr %s172, 20
      %s176 = sadd.s32 %s174, %s175
      %s177 = smul.addr %s176, 4
      %s178 = scalar_lea.vmem %s3, %s177
      %p179 = scmp.lt.s32.totalorder %s18, 1
      %s180 = scalar_select %p179, %s18, 1
      %s181 = smul.addr %s180, 24
      %s182 = smul.addr %s181, 4
      %s183 = scalar_lea.vmem %s0, %s182
      %s184 = smul.u32 20, %s19
      %p185 = scmp.lt.s32.totalorder %s18, 1
      %s186 = scalar_select %p185, %s18, 1
      %p187 = scmp.lt.s32.totalorder %s184, 19
      %s188 = scalar_select %p187, %s184, 19
      %s189 = smul.addr %s186, 20
      %s190 = sadd.s32 %s188, %s189
      %s191 = smul.addr %s190, 4
      %s192 = scalar_lea.vmem %s3, %s191
      %s193 = smul.u32 20, %s19
      %s194 = smul.u32 %s19, 160
      %s195 = sshra.s32 %s194, 3
      %s196 = sand.u32 %s194, 7
      %s197 = smul.addr %s195, 4
      %s198 = scalar_lea.vmem %s183, %s197
      %v199 = vld [vmem:[%s198] sm:$0xf]
      %v200 = vld [vmem:[%s198 + $0x4] sm:$0xf]
      %v201 = vld [vmem:[%s198 + $0x8] sm:$0xf]
      %v202 = vld [vmem:[%s198 + $0xc] sm:$0xf]
      %v203 = vld [vmem:[%s198 + $0x10] sm:$0xf]
      %v204 = vld [vmem:[%s198 + $0x14] sm:$0xf]
      %v205 = vld [vmem:[%s198 + $0x18] sm:$0xf]
      %v206 = vld [vmem:[%s198 + $0x1c] sm:$0xf]
      %v207 = vld [vmem:[%s198 + $0x20] sm:$0xf]
      %v208 = vld [vmem:[%s198 + $0x24] sm:$0xf]
      %v209 = vld [vmem:[%s198 + $0x28] sm:$0xf]
      %v210 = vld [vmem:[%s198 + $0x2c] sm:$0xf]
      %v211 = vld [vmem:[%s198 + $0x30] sm:$0xf]
      %v212 = vld [vmem:[%s198 + $0x34] sm:$0xf]
      %v213 = vld [vmem:[%s198 + $0x38] sm:$0xf]
      %v214 = vld [vmem:[%s198 + $0x3c] sm:$0xf]
      %v215 = vld [vmem:[%s198 + $0x40] sm:$0xf]
      %v216 = vld [vmem:[%s198 + $0x44] sm:$0xf]
      %v217 = vld [vmem:[%s198 + $0x48] sm:$0xf]
      %v218 = vld [vmem:[%s198 + $0x4c] sm:$0xf]
      %v219 = vld [vmem:[%s1] sm:$0xf]
      %v220 = vld [vmem:[%s1 + $0x4] sm:$0xf]
      %v221 = vld [vmem:[%s1 + $0x8] sm:$0xf]
      %v222 = vld [vmem:[%s1 + $0xc] sm:$0xf]
      %v223 = vld [vmem:[%s1 + $0x10] sm:$0xf]
      %v224 = vld [vmem:[%s1 + $0x14] sm:$0xf]
      %v225 = vld [vmem:[%s1 + $0x18] sm:$0xf]
      %v226 = vld [vmem:[%s1 + $0x1c] sm:$0xf]
      %v227 = vld [vmem:[%s1 + $0x20] sm:$0xf]
      %v228 = vld [vmem:[%s1 + $0x24] sm:$0xf]
      %v229 = vld [vmem:[%s1 + $0x28] sm:$0xf]
      %v230 = vld [vmem:[%s1 + $0x2c] sm:$0xf]
      %v231 = vld [vmem:[%s1 + $0x30] sm:$0xf]
      %v232 = vld [vmem:[%s1 + $0x34] sm:$0xf]
      %v233 = vld [vmem:[%s1 + $0x38] sm:$0xf]
      %v234 = vld [vmem:[%s1 + $0x3c] sm:$0xf]
      %s235 = sadd.s32 %s194, 16
      %s236 = sshra.s32 %s235, 3
      %s237 = sand.u32 %s235, 7
      %s238 = smul.addr %s236, 4
      %s239 = scalar_lea.vmem %s183, %s238
      %v240 = vld [vmem:[%s239] sm:$0xf]
      %v241 = vld [vmem:[%s239 + $0x4] sm:$0xf]
      %v242 = vld [vmem:[%s239 + $0x8] sm:$0xf]
      %v243 = vld [vmem:[%s239 + $0xc] sm:$0xf]
      %v244 = vld [vmem:[%s239 + $0x10] sm:$0xf]
      %v245 = vld [vmem:[%s239 + $0x14] sm:$0xf]
      %v246 = vld [vmem:[%s239 + $0x18] sm:$0xf]
      %v247 = vld [vmem:[%s239 + $0x1c] sm:$0xf]
      %v248 = vld [vmem:[%s239 + $0x20] sm:$0xf]
      %v249 = vld [vmem:[%s239 + $0x24] sm:$0xf]
      %v250 = vld [vmem:[%s239 + $0x28] sm:$0xf]
      %v251 = vld [vmem:[%s239 + $0x2c] sm:$0xf]
      %v252 = vld [vmem:[%s239 + $0x30] sm:$0xf]
      %v253 = vld [vmem:[%s239 + $0x34] sm:$0xf]
      %v254 = vld [vmem:[%s239 + $0x38] sm:$0xf]
      %v255 = vld [vmem:[%s239 + $0x3c] sm:$0xf]
      %v256 = vld [vmem:[%s239 + $0x40] sm:$0xf]
      %v257 = vld [vmem:[%s239 + $0x44] sm:$0xf]
      %v258 = vld [vmem:[%s239 + $0x48] sm:$0xf]
      %v259 = vld [vmem:[%s239 + $0x4c] sm:$0xf]
      %s260 = scalar_lea.vmem %s1, 64
      %v261 = vld [vmem:[%s260] sm:$0xf]
      %v262 = vld [vmem:[%s260 + $0x4] sm:$0xf]
      %v263 = vld [vmem:[%s260 + $0x8] sm:$0xf]
      %v264 = vld [vmem:[%s260 + $0xc] sm:$0xf]
      %v265 = vld [vmem:[%s260 + $0x10] sm:$0xf]
      %v266 = vld [vmem:[%s260 + $0x14] sm:$0xf]
      %v267 = vld [vmem:[%s260 + $0x18] sm:$0xf]
      %v268 = vld [vmem:[%s260 + $0x1c] sm:$0xf]
      %v269 = vld [vmem:[%s260 + $0x20] sm:$0xf]
      %v270 = vld [vmem:[%s260 + $0x24] sm:$0xf]
      %v271 = vld [vmem:[%s260 + $0x28] sm:$0xf]
      %v272 = vld [vmem:[%s260 + $0x2c] sm:$0xf]
      %v273 = vld [vmem:[%s260 + $0x30] sm:$0xf]
      %v274 = vld [vmem:[%s260 + $0x34] sm:$0xf]
      %v275 = vld [vmem:[%s260 + $0x38] sm:$0xf]
      %v276 = vld [vmem:[%s260 + $0x3c] sm:$0xf]
      %v297 = vunpack.c.l.b16 %v240
      %v298 = vunpack.c.l.b16 %v241
      %v299 = vunpack.c.l.b16 %v242
      %v300 = vunpack.c.l.b16 %v243
      %v301 = vunpack.c.l.b16 %v244
      %v302 = vunpack.c.l.b16 %v245
      %v303 = vunpack.c.l.b16 %v246
      %v304 = vunpack.c.l.b16 %v247
      %v305 = vunpack.c.l.b16 %v248
      %v306 = vunpack.c.l.b16 %v249
      %v307 = vunpack.c.l.b16 %v250
      %v308 = vunpack.c.l.b16 %v251
      %v309 = vunpack.c.l.b16 %v252
      %v310 = vunpack.c.l.b16 %v253
      %v311 = vunpack.c.l.b16 %v254
      %v312 = vunpack.c.l.b16 %v255
      %v313 = vunpack.c.l.b16 %v256
      %v314 = vunpack.c.l.b16 %v257
      %v315 = vunpack.c.l.b16 %v258
      %v316 = vunpack.c.l.b16 %v259
      %v317 = vpack.c.b16 %v298, %v297
      %v318 = vpack.c.b16 %v300, %v299
      %v319 = vpack.c.b16 %v302, %v301
      %v320 = vpack.c.b16 %v304, %v303
      %v321 = vpack.c.b16 %v306, %v305
      %v322 = vpack.c.b16 %v308, %v307
      %v323 = vpack.c.b16 %v310, %v309
      %v324 = vpack.c.b16 %v312, %v311
      %v325 = vpack.c.b16 %v314, %v313
      %v326 = vpack.c.b16 %v316, %v315
      %v353 = vunpack.c.l.b16 %v261
      %v354 = vunpack.c.l.b16 %v262
      %v355 = vunpack.c.l.b16 %v263
      %v356 = vunpack.c.l.b16 %v264
      %v357 = vunpack.c.l.b16 %v265
      %v358 = vunpack.c.l.b16 %v266
      %v359 = vunpack.c.l.b16 %v267
      %v360 = vunpack.c.l.b16 %v268
      %v361 = vunpack.c.l.b16 %v269
      %v362 = vunpack.c.l.b16 %v270
      %v363 = vunpack.c.l.b16 %v271
      %v364 = vunpack.c.l.b16 %v272
      %v365 = vunpack.c.l.b16 %v273
      %v366 = vunpack.c.l.b16 %v274
      %v367 = vunpack.c.l.b16 %v275
      %v368 = vunpack.c.l.b16 %v276
      %v369 = vpack.c.b16 %v354, %v353
      %v370 = vpack.c.b16 %v356, %v355
      %v371 = vpack.c.b16 %v358, %v357
      %v372 = vpack.c.b16 %v360, %v359
      %v373 = vpack.c.b16 %v362, %v361
      %v374 = vpack.c.b16 %v364, %v363
      %v375 = vpack.c.b16 %v366, %v365
      %v376 = vpack.c.b16 %v368, %v367
      %385 = vmatpush.bf16.msra.mxu0 %v376
      %386 = vmatpush.bf16.msra.mxu0 %v375
      %387 = vmatpush.bf16.msra.mxu0 %v374
      %388 = vmatpush.bf16.msra.mxu0 %v373
      %389 = vmatpush.bf16.msra.mxu0 %v372
      %390 = vmatpush.bf16.msra.mxu0 %v371
      %391 = vmatpush.bf16.msra.mxu0 %v370
      %392 = vmatpush.bf16.msra.mxu0 %v369
      %393 = vmatmul.bf16.gmra.mxu0 %v317
      %v394 = vpop.f32.mrf.mxu0
      %v395 = vadd.f32 0.0, %v394
      %v396 = vpop.f32.mrf.mxu0
      %v397 = vadd.f32 0.0, %v396
      %398 = vmatmul.bf16.gmra.mxu0 %v318
      %v399 = vpop.f32.mrf.mxu0
      %v400 = vadd.f32 0.0, %v399
      %v401 = vpop.f32.mrf.mxu0
      %v402 = vadd.f32 0.0, %v401
      %403 = vmatmul.bf16.gmra.mxu0 %v319
      %v404 = vpop.f32.mrf.mxu0
      %v405 = vadd.f32 0.0, %v404
      %v406 = vpop.f32.mrf.mxu0
      %v407 = vadd.f32 0.0, %v406
      %408 = vmatmul.bf16.gmra.mxu0 %v320
      %v409 = vpop.f32.mrf.mxu0
      %v410 = vadd.f32 0.0, %v409
      %v411 = vpop.f32.mrf.mxu0
      %v412 = vadd.f32 0.0, %v411
      %413 = vmatmul.bf16.gmra.mxu0 %v321
      %v414 = vpop.f32.mrf.mxu0
      %v415 = vadd.f32 0.0, %v414
      %v416 = vpop.f32.mrf.mxu0
      %v417 = vadd.f32 0.0, %v416
      %418 = vmatmul.bf16.gmra.mxu0 %v322
      %v419 = vpop.f32.mrf.mxu0
      %v420 = vadd.f32 0.0, %v419
      %v421 = vpop.f32.mrf.mxu0
      %v422 = vadd.f32 0.0, %v421
      %423 = vmatmul.bf16.gmra.mxu0 %v323
      %v424 = vpop.f32.mrf.mxu0
      %v425 = vadd.f32 0.0, %v424
      %v426 = vpop.f32.mrf.mxu0
      %v427 = vadd.f32 0.0, %v426
      %428 = vmatmul.bf16.gmra.mxu0 %v324
      %v429 = vpop.f32.mrf.mxu0
      %v430 = vadd.f32 0.0, %v429
      %v431 = vpop.f32.mrf.mxu0
      %v432 = vadd.f32 0.0, %v431
      %433 = vmatmul.bf16.gmra.mxu0 %v325
      %v434 = vpop.f32.mrf.mxu0
      %v435 = vadd.f32 0.0, %v434
      %v436 = vpop.f32.mrf.mxu0
      %v437 = vadd.f32 0.0, %v436
      %438 = vmatmul.bf16.gmra.mxu0 %v326
      %v439 = vpop.f32.mrf.mxu0
      %v440 = vadd.f32 0.0, %v439
      %v441 = vpop.f32.mrf.mxu0
      %v442 = vadd.f32 0.0, %v441
      %443 = vdwg.mxu0
      %v464 = vunpack.c.l.b16 %v199
      %v465 = vunpack.c.l.b16 %v200
      %v466 = vunpack.c.l.b16 %v201
      %v467 = vunpack.c.l.b16 %v202
      %v468 = vunpack.c.l.b16 %v203
      %v469 = vunpack.c.l.b16 %v204
      %v470 = vunpack.c.l.b16 %v205
      %v471 = vunpack.c.l.b16 %v206
      %v472 = vunpack.c.l.b16 %v207
      %v473 = vunpack.c.l.b16 %v208
      %v474 = vunpack.c.l.b16 %v209
      %v475 = vunpack.c.l.b16 %v210
      %v476 = vunpack.c.l.b16 %v211
      %v477 = vunpack.c.l.b16 %v212
      %v478 = vunpack.c.l.b16 %v213
      %v479 = vunpack.c.l.b16 %v214
      %v480 = vunpack.c.l.b16 %v215
      %v481 = vunpack.c.l.b16 %v216
      %v482 = vunpack.c.l.b16 %v217
      %v483 = vunpack.c.l.b16 %v218
      %v484 = vpack.c.b16 %v465, %v464
      %v485 = vpack.c.b16 %v467, %v466
      %v486 = vpack.c.b16 %v469, %v468
      %v487 = vpack.c.b16 %v471, %v470
      %v488 = vpack.c.b16 %v473, %v472
      %v489 = vpack.c.b16 %v475, %v474
      %v490 = vpack.c.b16 %v477, %v476
      %v491 = vpack.c.b16 %v479, %v478
      %v492 = vpack.c.b16 %v481, %v480
      %v493 = vpack.c.b16 %v483, %v482
      %v520 = vunpack.c.l.b16 %v219
      %v521 = vunpack.c.l.b16 %v220
      %v522 = vunpack.c.l.b16 %v221
      %v523 = vunpack.c.l.b16 %v222
      %v524 = vunpack.c.l.b16 %v223
      %v525 = vunpack.c.l.b16 %v224
      %v526 = vunpack.c.l.b16 %v225
      %v527 = vunpack.c.l.b16 %v226
      %v528 = vunpack.c.l.b16 %v227
      %v529 = vunpack.c.l.b16 %v228
      %v530 = vunpack.c.l.b16 %v229
      %v531 = vunpack.c.l.b16 %v230
      %v532 = vunpack.c.l.b16 %v231
      %v533 = vunpack.c.l.b16 %v232
      %v534 = vunpack.c.l.b16 %v233
      %v535 = vunpack.c.l.b16 %v234
      %v536 = vpack.c.b16 %v521, %v520
      %v537 = vpack.c.b16 %v523, %v522
      %v538 = vpack.c.b16 %v525, %v524
      %v539 = vpack.c.b16 %v527, %v526
      %v540 = vpack.c.b16 %v529, %v528
      %v541 = vpack.c.b16 %v531, %v530
      %v542 = vpack.c.b16 %v533, %v532
      %v543 = vpack.c.b16 %v535, %v534
      %552 = vmatpush.bf16.msra.mxu0 %v543
      %553 = vmatpush.bf16.msra.mxu0 %v542
      %554 = vmatpush.bf16.msra.mxu0 %v541
      %555 = vmatpush.bf16.msra.mxu0 %v540
      %556 = vmatpush.bf16.msra.mxu0 %v539
      %557 = vmatpush.bf16.msra.mxu0 %v538
      %558 = vmatpush.bf16.msra.mxu0 %v537
      %559 = vmatpush.bf16.msra.mxu0 %v536
      %560 = vmatmul.bf16.gmra.mxu0 %v484
      %v561 = vpop.f32.mrf.mxu0
      %v562 = vadd.f32 %v395, %v561
      %v563 = vpop.f32.mrf.mxu0
      %v564 = vadd.f32 %v397, %v563
      %565 = vmatmul.bf16.gmra.mxu0 %v485
      %v566 = vpop.f32.mrf.mxu0
      %v567 = vadd.f32 %v400, %v566
      %v568 = vpop.f32.mrf.mxu0
      %v569 = vadd.f32 %v402, %v568
      %570 = vmatmul.bf16.gmra.mxu0 %v486
      %v571 = vpop.f32.mrf.mxu0
      %v572 = vadd.f32 %v405, %v571
      %v573 = vpop.f32.mrf.mxu0
      %v574 = vadd.f32 %v407, %v573
      %575 = vmatmul.bf16.gmra.mxu0 %v487
      %v576 = vpop.f32.mrf.mxu0
      %v577 = vadd.f32 %v410, %v576
      %v578 = vpop.f32.mrf.mxu0
      %v579 = vadd.f32 %v412, %v578
      %580 = vmatmul.bf16.gmra.mxu0 %v488
      %v581 = vpop.f32.mrf.mxu0
      %v582 = vadd.f32 %v415, %v581
      %v583 = vpop.f32.mrf.mxu0
      %v584 = vadd.f32 %v417, %v583
      %585 = vmatmul.bf16.gmra.mxu0 %v489
      %v586 = vpop.f32.mrf.mxu0
      %v587 = vadd.f32 %v420, %v586
      %v588 = vpop.f32.mrf.mxu0
      %v589 = vadd.f32 %v422, %v588
      %590 = vmatmul.bf16.gmra.mxu0 %v490
      %v591 = vpop.f32.mrf.mxu0
      %v592 = vadd.f32 %v425, %v591
      %v593 = vpop.f32.mrf.mxu0
      %v594 = vadd.f32 %v427, %v593
      %595 = vmatmul.bf16.gmra.mxu0 %v491
      %v596 = vpop.f32.mrf.mxu0
      %v597 = vadd.f32 %v430, %v596
      %v598 = vpop.f32.mrf.mxu0
      %v599 = vadd.f32 %v432, %v598
      %600 = vmatmul.bf16.gmra.mxu0 %v492
      %v601 = vpop.f32.mrf.mxu0
      %v602 = vadd.f32 %v435, %v601
      %v603 = vpop.f32.mrf.mxu0
      %v604 = vadd.f32 %v437, %v603
      %605 = vmatmul.bf16.gmra.mxu0 %v493
      %v606 = vpop.f32.mrf.mxu0
      %v607 = vadd.f32 %v440, %v606
      %v608 = vpop.f32.mrf.mxu0
      %v609 = vadd.f32 %v442, %v608
      %610 = vdwg.mxu0
      %s611 = sadd.s32 %s194, 32
      %s612 = sshra.s32 %s611, 3
      %s613 = sand.u32 %s611, 7
      %s614 = smul.addr %s612, 4
      %s615 = scalar_lea.vmem %s183, %s614
      %v616 = vld [vmem:[%s615] sm:$0xf]
      %v617 = vld [vmem:[%s615 + $0x4] sm:$0xf]
      %v618 = vld [vmem:[%s615 + $0x8] sm:$0xf]
      %v619 = vld [vmem:[%s615 + $0xc] sm:$0xf]
      %v620 = vld [vmem:[%s615 + $0x10] sm:$0xf]
      %v621 = vld [vmem:[%s615 + $0x14] sm:$0xf]
      %v622 = vld [vmem:[%s615 + $0x18] sm:$0xf]
      %v623 = vld [vmem:[%s615 + $0x1c] sm:$0xf]
      %v624 = vld [vmem:[%s615 + $0x20] sm:$0xf]
      %v625 = vld [vmem:[%s615 + $0x24] sm:$0xf]
      %v626 = vld [vmem:[%s615 + $0x28] sm:$0xf]
      %v627 = vld [vmem:[%s615 + $0x2c] sm:$0xf]
      %v628 = vld [vmem:[%s615 + $0x30] sm:$0xf]
      %v629 = vld [vmem:[%s615 + $0x34] sm:$0xf]
      %v630 = vld [vmem:[%s615 + $0x38] sm:$0xf]
      %v631 = vld [vmem:[%s615 + $0x3c] sm:$0xf]
      %v632 = vld [vmem:[%s615 + $0x40] sm:$0xf]
      %v633 = vld [vmem:[%s615 + $0x44] sm:$0xf]
      %v634 = vld [vmem:[%s615 + $0x48] sm:$0xf]
      %v635 = vld [vmem:[%s615 + $0x4c] sm:$0xf]
      %s636 = scalar_lea.vmem %s1, 128
      %v637 = vld [vmem:[%s636] sm:$0xf]
      %v638 = vld [vmem:[%s636 + $0x4] sm:$0xf]
      %v639 = vld [vmem:[%s636 + $0x8] sm:$0xf]
      %v640 = vld [vmem:[%s636 + $0xc] sm:$0xf]
      %v641 = vld [vmem:[%s636 + $0x10] sm:$0xf]
      %v642 = vld [vmem:[%s636 + $0x14] sm:$0xf]
      %v643 = vld [vmem:[%s636 + $0x18] sm:$0xf]
      %v644 = vld [vmem:[%s636 + $0x1c] sm:$0xf]
      %v645 = vld [vmem:[%s636 + $0x20] sm:$0xf]
      %v646 = vld [vmem:[%s636 + $0x24] sm:$0xf]
      %v647 = vld [vmem:[%s636 + $0x28] sm:$0xf]
      %v648 = vld [vmem:[%s636 + $0x2c] sm:$0xf]
      %v649 = vld [vmem:[%s636 + $0x30] sm:$0xf]
      %v650 = vld [vmem:[%s636 + $0x34] sm:$0xf]
      %v651 = vld [vmem:[%s636 + $0x38] sm:$0xf]
      %v652 = vld [vmem:[%s636 + $0x3c] sm:$0xf]
      %v673 = vunpack.c.l.b16 %v616
      %v674 = vunpack.c.l.b16 %v617
      %v675 = vunpack.c.l.b16 %v618
      %v676 = vunpack.c.l.b16 %v619
      %v677 = vunpack.c.l.b16 %v620
      %v678 = vunpack.c.l.b16 %v621
      %v679 = vunpack.c.l.b16 %v622
      %v680 = vunpack.c.l.b16 %v623
      %v681 = vunpack.c.l.b16 %v624
      %v682 = vunpack.c.l.b16 %v625
      %v683 = vunpack.c.l.b16 %v626
      %v684 = vunpack.c.l.b16 %v627
      %v685 = vunpack.c.l.b16 %v628
      %v686 = vunpack.c.l.b16 %v629
      %v687 = vunpack.c.l.b16 %v630
      %v688 = vunpack.c.l.b16 %v631
      %v689 = vunpack.c.l.b16 %v632
      %v690 = vunpack.c.l.b16 %v633
      %v691 = vunpack.c.l.b16 %v634
      %v692 = vunpack.c.l.b16 %v635
      %v693 = vpack.c.b16 %v674, %v673
      %v694 = vpack.c.b16 %v676, %v675
      %v695 = vpack.c.b16 %v678, %v677
      %v696 = vpack.c.b16 %v680, %v679
      %v697 = vpack.c.b16 %v682, %v681
      %v698 = vpack.c.b16 %v684, %v683
      %v699 = vpack.c.b16 %v686, %v685
      %v700 = vpack.c.b16 %v688, %v687
      %v701 = vpack.c.b16 %v690, %v689
      %v702 = vpack.c.b16 %v692, %v691
      %v729 = vunpack.c.l.b16 %v637
      %v730 = vunpack.c.l.b16 %v638
      %v731 = vunpack.c.l.b16 %v639
      %v732 = vunpack.c.l.b16 %v640
      %v733 = vunpack.c.l.b16 %v641
      %v734 = vunpack.c.l.b16 %v642
      %v735 = vunpack.c.l.b16 %v643
      %v736 = vunpack.c.l.b16 %v644
      %v737 = vunpack.c.l.b16 %v645
      %v738 = vunpack.c.l.b16 %v646
      %v739 = vunpack.c.l.b16 %v647
      %v740 = vunpack.c.l.b16 %v648
      %v741 = vunpack.c.l.b16 %v649
      %v742 = vunpack.c.l.b16 %v650
      %v743 = vunpack.c.l.b16 %v651
      %v744 = vunpack.c.l.b16 %v652
      %v745 = vpack.c.b16 %v730, %v729
      %v746 = vpack.c.b16 %v732, %v731
      %v747 = vpack.c.b16 %v734, %v733
      %v748 = vpack.c.b16 %v736, %v735
      %v749 = vpack.c.b16 %v738, %v737
      %v750 = vpack.c.b16 %v740, %v739
      %v751 = vpack.c.b16 %v742, %v741
      %v752 = vpack.c.b16 %v744, %v743
      %761 = vmatpush.bf16.msra.mxu0 %v752
      %762 = vmatpush.bf16.msra.mxu0 %v751
      %763 = vmatpush.bf16.msra.mxu0 %v750
      %764 = vmatpush.bf16.msra.mxu0 %v749
      %765 = vmatpush.bf16.msra.mxu0 %v748
      %766 = vmatpush.bf16.msra.mxu0 %v747
      %767 = vmatpush.bf16.msra.mxu0 %v746
      %768 = vmatpush.bf16.msra.mxu0 %v745
      %769 = vmatmul.bf16.gmra.mxu0 %v693
      %v770 = vpop.f32.mrf.mxu0
      %v771 = vadd.f32 0.0, %v770
      %v772 = vpop.f32.mrf.mxu0
      %v773 = vadd.f32 0.0, %v772
      %774 = vmatmul.bf16.gmra.mxu0 %v694
      %v775 = vpop.f32.mrf.mxu0
      %v776 = vadd.f32 0.0, %v775
      %v777 = vpop.f32.mrf.mxu0
      %v778 = vadd.f32 0.0, %v777
      %779 = vmatmul.bf16.gmra.mxu0 %v695
      %v780 = vpop.f32.mrf.mxu0
      %v781 = vadd.f32 0.0, %v780
      %v782 = vpop.f32.mrf.mxu0
      %v783 = vadd.f32 0.0, %v782
      %784 = vmatmul.bf16.gmra.mxu0 %v696
      %v785 = vpop.f32.mrf.mxu0
      %v786 = vadd.f32 0.0, %v785
      %v787 = vpop.f32.mrf.mxu0
      %v788 = vadd.f32 0.0, %v787
      %789 = vmatmul.bf16.gmra.mxu0 %v697
      %v790 = vpop.f32.mrf.mxu0
      %v791 = vadd.f32 0.0, %v790
      %v792 = vpop.f32.mrf.mxu0
      %v793 = vadd.f32 0.0, %v792
      %794 = vmatmul.bf16.gmra.mxu0 %v698
      %v795 = vpop.f32.mrf.mxu0
      %v796 = vadd.f32 0.0, %v795
      %v797 = vpop.f32.mrf.mxu0
      %v798 = vadd.f32 0.0, %v797
      %799 = vmatmul.bf16.gmra.mxu0 %v699
      %v800 = vpop.f32.mrf.mxu0
      %v801 = vadd.f32 0.0, %v800
      %v802 = vpop.f32.mrf.mxu0
      %v803 = vadd.f32 0.0, %v802
      %804 = vmatmul.bf16.gmra.mxu0 %v700
      %v805 = vpop.f32.mrf.mxu0
      %v806 = vadd.f32 0.0, %v805
      %v807 = vpop.f32.mrf.mxu0
      %v808 = vadd.f32 0.0, %v807
      %809 = vmatmul.bf16.gmra.mxu0 %v701
      %v810 = vpop.f32.mrf.mxu0
      %v811 = vadd.f32 0.0, %v810
      %v812 = vpop.f32.mrf.mxu0
      %v813 = vadd.f32 0.0, %v812
      %814 = vmatmul.bf16.gmra.mxu0 %v702
      %v815 = vpop.f32.mrf.mxu0
      %v816 = vadd.f32 0.0, %v815
      %v817 = vpop.f32.mrf.mxu0
      %v818 = vadd.f32 0.0, %v817
      %819 = vdwg.mxu0
      %v820 = vadd.f32 %v562, %v771
      %v821 = vadd.f32 %v564, %v773
      %v822 = vadd.f32 %v567, %v776
      %v823 = vadd.f32 %v569, %v778
      %v824 = vadd.f32 %v572, %v781
      %v825 = vadd.f32 %v574, %v783
      %v826 = vadd.f32 %v577, %v786
      %v827 = vadd.f32 %v579, %v788
      %v828 = vadd.f32 %v582, %v791
      %v829 = vadd.f32 %v584, %v793
      %v830 = vadd.f32 %v587, %v796
      %v831 = vadd.f32 %v589, %v798
      %v832 = vadd.f32 %v592, %v801
      %v833 = vadd.f32 %v594, %v803
      %v834 = vadd.f32 %v597, %v806
      %v835 = vadd.f32 %v599, %v808
      %v836 = vadd.f32 %v602, %v811
      %v837 = vadd.f32 %v604, %v813
      %v838 = vadd.f32 %v607, %v816
      %v839 = vadd.f32 %v609, %v818
      %v840 = vld [vmem:[%s2] sm:$0x1]
      %v841 = vperm.slane %v840, 0
      %v842 = vmul.f32 %v820, %v841
      %v843 = vmul.f32 %v821, %v841
      %v844 = vmul.f32 %v822, %v841
      %v845 = vmul.f32 %v823, %v841
      %v846 = vmul.f32 %v824, %v841
      %v847 = vmul.f32 %v825, %v841
      %v848 = vmul.f32 %v826, %v841
      %v849 = vmul.f32 %v827, %v841
      %v850 = vmul.f32 %v828, %v841
      %v851 = vmul.f32 %v829, %v841
      %v852 = vmul.f32 %v830, %v841
      %v853 = vmul.f32 %v831, %v841
      %v854 = vmul.f32 %v832, %v841
      %v855 = vmul.f32 %v833, %v841
      %v856 = vmul.f32 %v834, %v841
      %v857 = vmul.f32 %v835, %v841
      %v858 = vmul.f32 %v836, %v841
      %v859 = vmul.f32 %v837, %v841
      %v860 = vmul.f32 %v838, %v841
      %v861 = vmul.f32 %v839, %v841
      %v862 = vld [vmem:[%s2 + $0x1] sm:$0x1]
      %v863 = vperm.slane %v862, 0
      %v864 = vadd.f32 %v842, %v863
      %v865 = vadd.f32 %v843, %v863
      %v866 = vadd.f32 %v844, %v863
      %v867 = vadd.f32 %v845, %v863
      %v868 = vadd.f32 %v846, %v863
      %v869 = vadd.f32 %v847, %v863
      %v870 = vadd.f32 %v848, %v863
      %v871 = vadd.f32 %v849, %v863
      %v872 = vadd.f32 %v850, %v863
      %v873 = vadd.f32 %v851, %v863
      %v874 = vadd.f32 %v852, %v863
      %v875 = vadd.f32 %v853, %v863
      %v876 = vadd.f32 %v854, %v863
      %v877 = vadd.f32 %v855, %v863
      %v878 = vadd.f32 %v856, %v863
      %v879 = vadd.f32 %v857, %v863
      %v880 = vadd.f32 %v858, %v863
      %v881 = vadd.f32 %v859, %v863
      %v882 = vadd.f32 %v860, %v863
      %v883 = vadd.f32 %v861, %v863
      %v884 = vmax.f32 %v864, 0.0
      %v885 = vmax.f32 %v865, 0.0
      %v886 = vmax.f32 %v866, 0.0
      %v887 = vmax.f32 %v867, 0.0
      %v888 = vmax.f32 %v868, 0.0
      %v889 = vmax.f32 %v869, 0.0
      %v890 = vmax.f32 %v870, 0.0
      %v891 = vmax.f32 %v871, 0.0
      %v892 = vmax.f32 %v872, 0.0
      %v893 = vmax.f32 %v873, 0.0
      %v894 = vmax.f32 %v874, 0.0
      %v895 = vmax.f32 %v875, 0.0
      %v896 = vmax.f32 %v876, 0.0
      %v897 = vmax.f32 %v877, 0.0
      %v898 = vmax.f32 %v878, 0.0
      %v899 = vmax.f32 %v879, 0.0
      %v900 = vmax.f32 %v880, 0.0
      %v901 = vmax.f32 %v881, 0.0
      %v902 = vmax.f32 %v882, 0.0
      %v903 = vmax.f32 %v883, 0.0
      %v904 = vpack.c.bf16 %v884, %v884
      %v905 = vpack.c.bf16 %v885, %v885
      %v906 = vpack.c.bf16 %v886, %v886
      %v907 = vpack.c.bf16 %v887, %v887
      %v908 = vpack.c.bf16 %v888, %v888
      %v909 = vpack.c.bf16 %v889, %v889
      %v910 = vpack.c.bf16 %v890, %v890
      %v911 = vpack.c.bf16 %v891, %v891
      %v912 = vpack.c.bf16 %v892, %v892
      %v913 = vpack.c.bf16 %v893, %v893
      %v914 = vpack.c.bf16 %v894, %v894
      %v915 = vpack.c.bf16 %v895, %v895
      %v916 = vpack.c.bf16 %v896, %v896
      %v917 = vpack.c.bf16 %v897, %v897
      %v918 = vpack.c.bf16 %v898, %v898
      %v919 = vpack.c.bf16 %v899, %v899
      %v920 = vpack.c.bf16 %v900, %v900
      %v921 = vpack.c.bf16 %v901, %v901
      %v922 = vpack.c.bf16 %v902, %v902
      %v923 = vpack.c.bf16 %v903, %v903
      %924 = vst [vmem:[%s192] sm:$0xf] %v904
      %925 = vst [vmem:[%s192 + $0x4] sm:$0xf] %v905
      %926 = vst [vmem:[%s192 + $0x8] sm:$0xf] %v906
      %927 = vst [vmem:[%s192 + $0xc] sm:$0xf] %v907
      %928 = vst [vmem:[%s192 + $0x10] sm:$0xf] %v908
      %929 = vst [vmem:[%s192 + $0x14] sm:$0xf] %v909
      %930 = vst [vmem:[%s192 + $0x18] sm:$0xf] %v910
      %931 = vst [vmem:[%s192 + $0x1c] sm:$0xf] %v911
      %932 = vst [vmem:[%s192 + $0x20] sm:$0xf] %v912
      %933 = vst [vmem:[%s192 + $0x24] sm:$0xf] %v913
      %934 = vst [vmem:[%s192 + $0x28] sm:$0xf] %v914
      %935 = vst [vmem:[%s192 + $0x2c] sm:$0xf] %v915
      %936 = vst [vmem:[%s192 + $0x30] sm:$0xf] %v916
      %937 = vst [vmem:[%s192 + $0x34] sm:$0xf] %v917
      %938 = vst [vmem:[%s192 + $0x38] sm:$0xf] %v918
      %939 = vst [vmem:[%s192 + $0x3c] sm:$0xf] %v919
      %940 = vst [vmem:[%s192 + $0x40] sm:$0xf] %v920
      %941 = vst [vmem:[%s192 + $0x44] sm:$0xf] %v921
      %942 = vst [vmem:[%s192 + $0x48] sm:$0xf] %v922
      %943 = vst [vmem:[%s192 + $0x4c] sm:$0xf] %v923
      %s944 = smul.u32 20, %s19
      %p945 = scmp.lt.s32.totalorder %s18, 1
      %s946 = scalar_select %p945, %s18, 1
      %p947 = scmp.lt.s32.totalorder %s944, 19
      %s948 = scalar_select %p947, %s944, 19
      %s949 = smul.addr %s946, 20
      %s950 = sadd.s32 %s948, %s949
      %s951 = smul.addr %s950, 4
      %s952 = scalar_lea.vmem %s3, %s951
      // Predicated region
      $region33: #{generator_forward.4} parent=31 // pred_check
        %p953 = pneg %p114
      $region34: #{generator_forward.4} parent=31 // pred_check_branch
        %955 = sbr.rel (%p953) target = $region36
      $region35: #{generator_forward.4} parent=31 // pred_region
        %s956 = smul.u32 20, %s19
      $region36: #{generator_forward.4} parent=31 // pred_fallthru
        _
    $region32: #{generator_forward.4} parent=5 // pred_fallthru
      _
    %p957 = scmp.le.s32.totalorder 2, %s9
    // Predicated region
    $region37: #{generator_forward.4} parent=5 // pred_check
      %p958 = pneg %p957
    $region38: #{generator_forward.4} parent=5 // pred_check_branch
      %960 = sbr.rel (%p958) target = $region40
    $region39: #{generator_forward.4} parent=5 // pred_region
      %s961 = ssub.s32 %s9, 2
      // Predicated region
      $region41: #{generator_forward.4} parent=39 // pred_check
        %p962 = pneg %p120
      $region42: #{generator_forward.4} parent=39 // pred_check_branch
        %964 = sbr.rel (%p962) target = $region44
      $region43: #{generator_forward.4} parent=39 // pred_region
        %s965 = smul.u32 20, %s21
        %p966 = scmp.lt.s32.totalorder %s20, 1
        %s967 = scalar_select %p966, %s20, 1
        %p968 = scmp.lt.s32.totalorder %s965, 19
        %s969 = scalar_select %p968, %s965, 19
        %s970 = smul.addr %s967, 20
        %s971 = sadd.s32 %s969, %s970
        %s972 = smul.addr %s971, 4
        %s973 = scalar_lea.vmem %s3, %s972
      $region44: #{generator_forward.4} parent=39 // pred_fallthru
        _
    $region40: #{generator_forward.4} parent=5 // pred_fallthru
      _
  $region6: #{generator_forward.4} parent=0 // loop_footer
    %s13 = sadd.s32 1, %s9
  $region7: #{generator_forward.4} parent=0 // loop_footer_branch
    %8 = sbr.rel target = $region3
  $region8: #{generator_forward.4} parent=0 // loop_exit
    _

// kernel: generator_forward.5
$region0: #{generator_forward.5}
  #allocation0 [shape = 'u32[]', space=smem, size = 0x4, offset = 0x4, fixed_abs, tag = 'smem constant byte address 0x4 - core index']
  #allocation1 [shape = 'u32[72,128]{1,0:T(1,128)}', space=vmem, size = 0x9000, scoped, tag = 'internal scratch']
  %s0 = inlined_call_operand.vmem [shape: bf16[2,528,128], index: 0, kind: input, shape index: {}]
  %s1 = inlined_call_operand.vmem [shape: bf16[3,128,128], index: 1, kind: input, shape index: {}]
  %s2 = inlined_call_operand.vmem [shape: f32[8,128], index: 2, kind: input, shape index: {}]
  %s3 = inlined_call_operand.vmem [shape: bf16[2,480,128], index: 3, kind: output, shape index: {}]
  %s4 = sld [smem:[#allocation0]]
  $region45: #{generator_forward.5} parent=0
    _
  %s6 = ssub.s32 1, %s4
  %s7 = scalar_select 0, %s6, %s4
  loop: start=0, step=1, limit=4
  $region2: #{generator_forward.5} parent=0 // loop_pre_header
    _
  $region3: #{generator_forward.5} parent=0 // loop_header
    %s9 = sphi 0, %s13
    %p10 = scmp.ge.s32.totalorder %s9, 4
    %s16 = sphi 0, %s28
    %s17 = sphi 0, %s24
    %s18 = sphi 0, %s16
    %s19 = sphi 0, %s17
    %s20 = sphi 0, %s18
    %s21 = sphi 0, %s19
    %s31 = sphi 0, %s33
    %s34 = sphi 0, %s31
    %s35 = sphi 0, %s34
    %s51 = sphi 0, %s35
    %s55 = sphi 0, %s55
    %s57 = sphi 0, %s55
    %s58 = sphi 0, %s57
    %s72 = sphi 0, %s58
    %s76 = sphi 0, %s76
    %s78 = sphi 0, %s76
    %s79 = sphi 0, %s78
    %s93 = sphi 0, %s79
    %s101 = sphi 0, %s103
    %s104 = sphi 0, %s101
    %s105 = sphi 0, %s104
    %s121 = sphi 0, %s105
  $region4: #{generator_forward.5} parent=0 // loop_header_branch
    %12 = sbr.rel (%p10) target = $region8
  $region5: #{generator_forward.5} parent=0 // loop_body
    %s14 = ssub.s32 %s9, 1
    %s15 = ssub.s32 %s9, 2
    %s22 = sadd.s32 1, %s17
    %p23 = scmp.ge.s32.totalorder %s22, 1
    %s24 = scalar_select %p23, 0, %s22
    %s25 = sadd.s32 1, %s16
    %s26 = scalar_select %p23, %s25, %s16
    %p27 = scmp.ge.s32.totalorder %s26, 2
    %s28 = scalar_select %p27, 0, %s26
    %s29 = ssub.s32 %s16, %s28
    %p30 = scmp.eq.s32.totalorder %s29, 0
    %s32 = sadd.s32 %s31, 1
    %s33 = scalar_select %p30, %s31, %s32
    %p36 = pneg %p30
    %p37 = scmp.eq.s32.totalorder %s9, 1
    %p38 = por %p36, %p37
    %p39 = scmp.ne.s32.totalorder %s31, %s34
    %p40 = scmp.eq.s32.totalorder %s9, 0
    %p41 = por %p39, %p40
    %p42 = scmp.ne.s32.totalorder %s31, %s34
    %p43 = scmp.eq.s32.totalorder %s14, 1
    %p44 = por %p42, %p43
    %p45 = scmp.ne.s32.totalorder %s34, %s35
    %p46 = scmp.eq.s32.totalorder %s14, 0
    %p47 = por %p45, %p46
    %p48 = scmp.ne.s32.totalorder %s34, %s35
    %p49 = scmp.eq.s32.totalorder %s15, 1
    %p50 = por %p48, %p49
    %p52 = scmp.ne.s32.totalorder %s35, %s51
    %p53 = scmp.eq.s32.totalorder %s15, 0
    %p54 = por %p52, %p53
    %s56 = sadd.s32 %s55, 1
    %p59 = scmp.eq.s32.totalorder %s9, 1
    %p60 = scmp.ne.s32.totalorder %s55, %s57
    %p61 = scmp.eq.s32.totalorder %s9, 0
    %p62 = por %p60, %p61
    %p63 = scmp.ne.s32.totalorder %s55, %s57
    %p64 = scmp.eq.s32.totalorder %s14, 1
    %p65 = por %p63, %p64
    %p66 = scmp.ne.s32.totalorder %s57, %s58
    %p67 = scmp.eq.s32.totalorder %s14, 0
    %p68 = por %p66, %p67
    %p69 = scmp.ne.s32.totalorder %s57, %s58
    %p70 = scmp.eq.s32.totalorder %s15, 1
    %p71 = por %p69, %p70
    %p73 = scmp.ne.s32.totalorder %s58, %s72
    %p74 = scmp.eq.s32.totalorder %s15, 0
    %p75 = por %p73, %p74
    %s77 = sadd.s32 %s76, 1
    %p80 = scmp.eq.s32.totalorder %s9, 1
    %p81 = scmp.ne.s32.totalorder %s76, %s78
    %p82 = scmp.eq.s32.totalorder %s9, 0
    %p83 = por %p81, %p82
    %p84 = scmp.ne.s32.totalorder %s76, %s78
    %p85 = scmp.eq.s32.totalorder %s14, 1
    %p86 = por %p84, %p85
    %p87 = scmp.ne.s32.totalorder %s78, %s79
    %p88 = scmp.eq.s32.totalorder %s14, 0
    %p89 = por %p87, %p88
    %p90 = scmp.ne.s32.totalorder %s78, %s79
    %p91 = scmp.eq.s32.totalorder %s15, 1
    %p92 = por %p90, %p91
    %p94 = scmp.ne.s32.totalorder %s79, %s93
    %p95 = scmp.eq.s32.totalorder %s15, 0
    %p96 = por %p94, %p95
    %s97 = ssub.s32 %s16, %s28
    %s98 = ssub.s32 %s17, %s24
    %s99 = sor.u32 %s97, %s98
    %p100 = scmp.eq.s32.totalorder %s99, 0
    %s102 = sadd.s32 %s101, 1
    %s103 = scalar_select %p100, %s101, %s102
    %p106 = pneg %p100
    %p107 = scmp.eq.s32.totalorder %s9, 1
    %p108 = por %p106, %p107
    %p109 = scmp.ne.s32.totalorder %s101, %s104
    %p110 = scmp.eq.s32.totalorder %s9, 0
    %p111 = por %p109, %p110
    %p112 = scmp.ne.s32.totalorder %s101, %s104
    %p113 = scmp.eq.s32.totalorder %s14, 1
    %p114 = por %p112, %p113
    %p115 = scmp.ne.s32.totalorder %s104, %s105
    %p116 = scmp.eq.s32.totalorder %s14, 0
    %p117 = por %p115, %p116
    %p118 = scmp.ne.s32.totalorder %s104, %s105
    %p119 = scmp.eq.s32.totalorder %s15, 1
    %p120 = por %p118, %p119
    %p122 = scmp.ne.s32.totalorder %s105, %s121
    %p123 = scmp.eq.s32.totalorder %s15, 0
    %p124 = por %p122, %p123
    %p125 = scmp.le.s32.totalorder 1, %s9
    %p126 = scmp.lt.s32.totalorder %s9, 3
    %p127 = pnand %p125, %p126
    %p128 = pneg %p127
    // Predicated region
    $region9: #{generator_forward.5} parent=5 // pred_check
      _
    $region10: #{generator_forward.5} parent=5 // pred_check_branch
      %130 = sbr.rel (%p127) target = $region12
    $region11: #{generator_forward.5} parent=5 // pred_region
      %s131 = ssub.s32 %s9, 1
      // Predicated region
      $region13: #{generator_forward.5} parent=11 // pred_check
        %p132 = pneg %p68
      $region14: #{generator_forward.5} parent=11 // pred_check_branch
        %134 = sbr.rel (%p132) target = $region16
      $region15: #{generator_forward.5} parent=11 // pred_region
        _
      $region16: #{generator_forward.5} parent=11 // pred_fallthru
        _
      // Predicated region
      $region17: #{generator_forward.5} parent=11 // pred_check
        %p135 = pneg %p89
      $region18: #{generator_forward.5} parent=11 // pred_check_branch
        %137 = sbr.rel (%p135) target = $region20
      $region19: #{generator_forward.5} parent=11 // pred_region
        _
      $region20: #{generator_forward.5} parent=11 // pred_fallthru
        _
    $region12: #{generator_forward.5} parent=5 // pred_fallthru
      _
    %p138 = scmp.lt.s32.totalorder %s9, 2
    // Predicated region
    $region21: #{generator_forward.5} parent=5 // pred_check
      %p139 = pneg %p138
    $region22: #{generator_forward.5} parent=5 // pred_check_branch
      %141 = sbr.rel (%p139) target = $region24
    $region23: #{generator_forward.5} parent=5 // pred_region
      // Predicated region
      $region25: #{generator_forward.5} parent=23 // pred_check
        %p142 = pneg %p41
      $region26: #{generator_forward.5} parent=23 // pred_check_branch
        %144 = sbr.rel (%p142) target = $region28
      $region27: #{generator_forward.5} parent=23 // pred_region
        %p145 = scmp.lt.s32.totalorder %s16, 1
        %s146 = scalar_select %p145, %s16, 1
        %s147 = smul.addr %s146, 66
        %s148 = smul.addr %s147, 4
        %s149 = scalar_lea.vmem %s0, %s148
      $region28: #{generator_forward.5} parent=23 // pred_fallthru
        _
    $region24: #{generator_forward.5} parent=5 // pred_fallthru
      _
    %p150 = scmp.le.s32.totalorder 1, %s9
    %p151 = scmp.lt.s32.totalorder %s9, 3
    %p152 = pnand %p150, %p151
    %p153 = pneg %p152
    // Predicated region
    $region29: #{generator_forward.5} parent=5 // pred_check
      _
    $region30: #{generator_forward.5} parent=5 // pred_check_branch
      %155 = sbr.rel (%p152) target = $region32
    $region31: #{generator_forward.5} parent=5 // pred_region
      %s156 = ssub.s32 %s9, 1
      %p157 = scmp.lt.s32.totalorder %s18, 1
      %s158 = scalar_select %p157, %s18, 1
      %s159 = smul.addr %s158, 66
      %s160 = smul.addr %s159, 4
      %s161 = scalar_lea.vmem %s0, %s160
      %p162 = pneg %p47
      %p163 = pneg %p44
      %p164 = pneg %p68
      %p165 = pneg %p65
      %p166 = pneg %p89
      %p167 = pneg %p86
      %p168 = pneg %p117
      %p169 = pneg %p114
      %s170 = smul.u32 60, %s19
      %p171 = scmp.lt.s32.totalorder %s18, 1
      %s172 = scalar_select %p171, %s18, 1
      %p173 = scmp.lt.s32.totalorder %s170, 59
      %s174 = scalar_select %p173, %s170, 59
      %s175 = smul.addr %s172, 60
      %s176 = sadd.s32 %s174, %s175
      %s177 = smul.addr %s176, 4
      %s178 = scalar_lea.vmem %s3, %s177
      %p179 = scmp.lt.s32.totalorder %s18, 1
      %s180 = scalar_select %p179, %s18, 1
      %s181 = smul.addr %s180, 66
      %s182 = smul.addr %s181, 4
      %s183 = scalar_lea.vmem %s0, %s182
      %s184 = smul.u32 60, %s19
      %p185 = scmp.lt.s32.totalorder %s18, 1
      %s186 = scalar_select %p185, %s18, 1
      %p187 = scmp.lt.s32.totalorder %s184, 59
      %s188 = scalar_select %p187, %s184, 59
      %s189 = smul.addr %s186, 60
      %s190 = sadd.s32 %s188, %s189
      %s191 = smul.addr %s190, 4
      %s192 = scalar_lea.vmem %s3, %s191
      %s193 = smul.u32 60, %s19
      %s194 = smul.u32 %s19, 480
      %s195 = sshra.s32 %s194, 3
      %s196 = sand.u32 %s194, 7
      %s197 = smul.addr %s195, 4
      %s198 = scalar_lea.vmem %s183, %s197
      %v199 = vld [vmem:[%s198] sm:$0xf]
      %v200 = vld [vmem:[%s198 + $0x4] sm:$0xf]
      %v201 = vld [vmem:[%s198 + $0x8] sm:$0xf]
      %v202 = vld [vmem:[%s198 + $0xc] sm:$0xf]
      %v203 = vld [vmem:[%s198 + $0x10] sm:$0xf]
      %v204 = vld [vmem:[%s198 + $0x14] sm:$0xf]
      %v205 = vld [vmem:[%s198 + $0x18] sm:$0xf]
      %v206 = vld [vmem:[%s198 + $0x1c] sm:$0xf]
      %v207 = vld [vmem:[%s198 + $0x20] sm:$0xf]
      %v208 = vld [vmem:[%s198 + $0x24] sm:$0xf]
      %v209 = vld [vmem:[%s198 + $0x28] sm:$0xf]
      %v210 = vld [vmem:[%s198 + $0x2c] sm:$0xf]
      %v211 = vld [vmem:[%s198 + $0x30] sm:$0xf]
      %v212 = vld [vmem:[%s198 + $0x34] sm:$0xf]
      %v213 = vld [vmem:[%s198 + $0x38] sm:$0xf]
      %v214 = vld [vmem:[%s198 + $0x3c] sm:$0xf]
      %v215 = vld [vmem:[%s198 + $0x40] sm:$0xf]
      %v216 = vld [vmem:[%s198 + $0x44] sm:$0xf]
      %v217 = vld [vmem:[%s198 + $0x48] sm:$0xf]
      %v218 = vld [vmem:[%s198 + $0x4c] sm:$0xf]
      %v219 = vld [vmem:[%s198 + $0x50] sm:$0xf]
      %v220 = vld [vmem:[%s198 + $0x54] sm:$0xf]
      %v221 = vld [vmem:[%s198 + $0x58] sm:$0xf]
      %v222 = vld [vmem:[%s198 + $0x5c] sm:$0xf]
      %v223 = vld [vmem:[%s198 + $0x60] sm:$0xf]
      %v224 = vld [vmem:[%s198 + $0x64] sm:$0xf]
      %v225 = vld [vmem:[%s198 + $0x68] sm:$0xf]
      %v226 = vld [vmem:[%s198 + $0x6c] sm:$0xf]
      %v227 = vld [vmem:[%s198 + $0x70] sm:$0xf]
      %v228 = vld [vmem:[%s198 + $0x74] sm:$0xf]
      %v229 = vld [vmem:[%s198 + $0x78] sm:$0xf]
      %v230 = vld [vmem:[%s198 + $0x7c] sm:$0xf]
      %v231 = vld [vmem:[%s198 + $0x80] sm:$0xf]
      %v232 = vld [vmem:[%s198 + $0x84] sm:$0xf]
      %v233 = vld [vmem:[%s198 + $0x88] sm:$0xf]
      %v234 = vld [vmem:[%s198 + $0x8c] sm:$0xf]
      %v235 = vld [vmem:[%s198 + $0x90] sm:$0xf]
      %v236 = vld [vmem:[%s198 + $0x94] sm:$0xf]
      %v237 = vld [vmem:[%s198 + $0x98] sm:$0xf]
      %v238 = vld [vmem:[%s198 + $0x9c] sm:$0xf]
      %v239 = vld [vmem:[%s198 + $0xa0] sm:$0xf]
      %v240 = vld [vmem:[%s198 + $0xa4] sm:$0xf]
      %v241 = vld [vmem:[%s198 + $0xa8] sm:$0xf]
      %v242 = vld [vmem:[%s198 + $0xac] sm:$0xf]
      %v243 = vld [vmem:[%s198 + $0xb0] sm:$0xf]
      %v244 = vld [vmem:[%s198 + $0xb4] sm:$0xf]
      %v245 = vld [vmem:[%s198 + $0xb8] sm:$0xf]
      %v246 = vld [vmem:[%s198 + $0xbc] sm:$0xf]
      %v247 = vld [vmem:[%s198 + $0xc0] sm:$0xf]
      %v248 = vld [vmem:[%s198 + $0xc4] sm:$0xf]
      %v249 = vld [vmem:[%s198 + $0xc8] sm:$0xf]
      %v250 = vld [vmem:[%s198 + $0xcc] sm:$0xf]
      %v251 = vld [vmem:[%s198 + $0xd0] sm:$0xf]
      %v252 = vld [vmem:[%s198 + $0xd4] sm:$0xf]
      %v253 = vld [vmem:[%s198 + $0xd8] sm:$0xf]
      %v254 = vld [vmem:[%s198 + $0xdc] sm:$0xf]
      %v255 = vld [vmem:[%s198 + $0xe0] sm:$0xf]
      %v256 = vld [vmem:[%s198 + $0xe4] sm:$0xf]
      %v257 = vld [vmem:[%s198 + $0xe8] sm:$0xf]
      %v258 = vld [vmem:[%s198 + $0xec] sm:$0xf]
      %v259 = vld [vmem:[%s1] sm:$0xf]
      %v260 = vld [vmem:[%s1 + $0x4] sm:$0xf]
      %v261 = vld [vmem:[%s1 + $0x8] sm:$0xf]
      %v262 = vld [vmem:[%s1 + $0xc] sm:$0xf]
      %v263 = vld [vmem:[%s1 + $0x10] sm:$0xf]
      %v264 = vld [vmem:[%s1 + $0x14] sm:$0xf]
      %v265 = vld [vmem:[%s1 + $0x18] sm:$0xf]
      %v266 = vld [vmem:[%s1 + $0x1c] sm:$0xf]
      %v267 = vld [vmem:[%s1 + $0x20] sm:$0xf]
      %v268 = vld [vmem:[%s1 + $0x24] sm:$0xf]
      %v269 = vld [vmem:[%s1 + $0x28] sm:$0xf]
      %v270 = vld [vmem:[%s1 + $0x2c] sm:$0xf]
      %v271 = vld [vmem:[%s1 + $0x30] sm:$0xf]
      %v272 = vld [vmem:[%s1 + $0x34] sm:$0xf]
      %v273 = vld [vmem:[%s1 + $0x38] sm:$0xf]
      %v274 = vld [vmem:[%s1 + $0x3c] sm:$0xf]
      %s275 = sadd.s32 %s194, 24
      %s276 = sshra.s32 %s275, 3
      %s277 = sand.u32 %s275, 7
      %s278 = smul.addr %s276, 4
      %s279 = scalar_lea.vmem %s183, %s278
      %v280 = vld [vmem:[%s279] sm:$0xf]
      %v281 = vld [vmem:[%s279 + $0x4] sm:$0xf]
      %v282 = vld [vmem:[%s279 + $0x8] sm:$0xf]
      %v283 = vld [vmem:[%s279 + $0xc] sm:$0xf]
      %v284 = vld [vmem:[%s279 + $0x10] sm:$0xf]
      %v285 = vld [vmem:[%s279 + $0x14] sm:$0xf]
      %v286 = vld [vmem:[%s279 + $0x18] sm:$0xf]
      %v287 = vld [vmem:[%s279 + $0x1c] sm:$0xf]
      %v288 = vld [vmem:[%s279 + $0x20] sm:$0xf]
      %v289 = vld [vmem:[%s279 + $0x24] sm:$0xf]
      %v290 = vld [vmem:[%s279 + $0x28] sm:$0xf]
      %v291 = vld [vmem:[%s279 + $0x2c] sm:$0xf]
      %v292 = vld [vmem:[%s279 + $0x30] sm:$0xf]
      %v293 = vld [vmem:[%s279 + $0x34] sm:$0xf]
      %v294 = vld [vmem:[%s279 + $0x38] sm:$0xf]
      %v295 = vld [vmem:[%s279 + $0x3c] sm:$0xf]
      %v296 = vld [vmem:[%s279 + $0x40] sm:$0xf]
      %v297 = vld [vmem:[%s279 + $0x44] sm:$0xf]
      %v298 = vld [vmem:[%s279 + $0x48] sm:$0xf]
      %v299 = vld [vmem:[%s279 + $0x4c] sm:$0xf]
      %v300 = vld [vmem:[%s279 + $0x50] sm:$0xf]
      %v301 = vld [vmem:[%s279 + $0x54] sm:$0xf]
      %v302 = vld [vmem:[%s279 + $0x58] sm:$0xf]
      %v303 = vld [vmem:[%s279 + $0x5c] sm:$0xf]
      %v304 = vld [vmem:[%s279 + $0x60] sm:$0xf]
      %v305 = vld [vmem:[%s279 + $0x64] sm:$0xf]
      %v306 = vld [vmem:[%s279 + $0x68] sm:$0xf]
      %v307 = vld [vmem:[%s279 + $0x6c] sm:$0xf]
      %v308 = vld [vmem:[%s279 + $0x70] sm:$0xf]
      %v309 = vld [vmem:[%s279 + $0x74] sm:$0xf]
      %v310 = vld [vmem:[%s279 + $0x78] sm:$0xf]
      %v311 = vld [vmem:[%s279 + $0x7c] sm:$0xf]
      %v312 = vld [vmem:[%s279 + $0x80] sm:$0xf]
      %v313 = vld [vmem:[%s279 + $0x84] sm:$0xf]
      %v314 = vld [vmem:[%s279 + $0x88] sm:$0xf]
      %v315 = vld [vmem:[%s279 + $0x8c] sm:$0xf]
      %v316 = vld [vmem:[%s279 + $0x90] sm:$0xf]
      %v317 = vld [vmem:[%s279 + $0x94] sm:$0xf]
      %v318 = vld [vmem:[%s279 + $0x98] sm:$0xf]
      %v319 = vld [vmem:[%s279 + $0x9c] sm:$0xf]
      %v320 = vld [vmem:[%s279 + $0xa0] sm:$0xf]
      %v321 = vld [vmem:[%s279 + $0xa4] sm:$0xf]
      %v322 = vld [vmem:[%s279 + $0xa8] sm:$0xf]
      %v323 = vld [vmem:[%s279 + $0xac] sm:$0xf]
      %v324 = vld [vmem:[%s279 + $0xb0] sm:$0xf]
      %v325 = vld [vmem:[%s279 + $0xb4] sm:$0xf]
      %v326 = vld [vmem:[%s279 + $0xb8] sm:$0xf]
      %v327 = vld [vmem:[%s279 + $0xbc] sm:$0xf]
      %v328 = vld [vmem:[%s279 + $0xc0] sm:$0xf]
      %v329 = vld [vmem:[%s279 + $0xc4] sm:$0xf]
      %v330 = vld [vmem:[%s279 + $0xc8] sm:$0xf]
      %v331 = vld [vmem:[%s279 + $0xcc] sm:$0xf]
      %v332 = vld [vmem:[%s279 + $0xd0] sm:$0xf]
      %v333 = vld [vmem:[%s279 + $0xd4] sm:$0xf]
      %v334 = vld [vmem:[%s279 + $0xd8] sm:$0xf]
      %v335 = vld [vmem:[%s279 + $0xdc] sm:$0xf]
      %v336 = vld [vmem:[%s279 + $0xe0] sm:$0xf]
      %v337 = vld [vmem:[%s279 + $0xe4] sm:$0xf]
      %v338 = vld [vmem:[%s279 + $0xe8] sm:$0xf]
      %v339 = vld [vmem:[%s279 + $0xec] sm:$0xf]
      %s340 = scalar_lea.vmem %s1, 64
      %v341 = vld [vmem:[%s340] sm:$0xf]
      %v342 = vld [vmem:[%s340 + $0x4] sm:$0xf]
      %v343 = vld [vmem:[%s340 + $0x8] sm:$0xf]
      %v344 = vld [vmem:[%s340 + $0xc] sm:$0xf]
      %v345 = vld [vmem:[%s340 + $0x10] sm:$0xf]
      %v346 = vld [vmem:[%s340 + $0x14] sm:$0xf]
      %v347 = vld [vmem:[%s340 + $0x18] sm:$0xf]
      %v348 = vld [vmem:[%s340 + $0x1c] sm:$0xf]
      %v349 = vld [vmem:[%s340 + $0x20] sm:$0xf]
      %v350 = vld [vmem:[%s340 + $0x24] sm:$0xf]
      %v351 = vld [vmem:[%s340 + $0x28] sm:$0xf]
      %v352 = vld [vmem:[%s340 + $0x2c] sm:$0xf]
      %v353 = vld [vmem:[%s340 + $0x30] sm:$0xf]
      %v354 = vld [vmem:[%s340 + $0x34] sm:$0xf]
      %v355 = vld [vmem:[%s340 + $0x38] sm:$0xf]
      %v356 = vld [vmem:[%s340 + $0x3c] sm:$0xf]
      %v417 = vunpack.c.l.b16 %v280
      %v418 = vunpack.c.l.b16 %v281
      %v419 = vunpack.c.l.b16 %v282
      %v420 = vunpack.c.l.b16 %v283
      %v421 = vunpack.c.l.b16 %v284
      %v422 = vunpack.c.l.b16 %v285
      %v423 = vunpack.c.l.b16 %v286
      %v424 = vunpack.c.l.b16 %v287
      %v425 = vunpack.c.l.b16 %v288
      %v426 = vunpack.c.l.b16 %v289
      %v427 = vunpack.c.l.b16 %v290
      %v428 = vunpack.c.l.b16 %v291
      %v429 = vunpack.c.l.b16 %v292
      %v430 = vunpack.c.l.b16 %v293
      %v431 = vunpack.c.l.b16 %v294
      %v432 = vunpack.c.l.b16 %v295
      %v433 = vunpack.c.l.b16 %v296
      %v434 = vunpack.c.l.b16 %v297
      %v435 = vunpack.c.l.b16 %v298
      %v436 = vunpack.c.l.b16 %v299
      %v437 = vunpack.c.l.b16 %v300
      %v438 = vunpack.c.l.b16 %v301
      %v439 = vunpack.c.l.b16 %v302
      %v440 = vunpack.c.l.b16 %v303
      %v441 = vunpack.c.l.b16 %v304
      %v442 = vunpack.c.l.b16 %v305
      %v443 = vunpack.c.l.b16 %v306
      %v444 = vunpack.c.l.b16 %v307
      %v445 = vunpack.c.l.b16 %v308
      %v446 = vunpack.c.l.b16 %v309
      %v447 = vunpack.c.l.b16 %v310
      %v448 = vunpack.c.l.b16 %v311
      %v449 = vunpack.c.l.b16 %v312
      %v450 = vunpack.c.l.b16 %v313
      %v451 = vunpack.c.l.b16 %v314
      %v452 = vunpack.c.l.b16 %v315
      %v453 = vunpack.c.l.b16 %v316
      %v454 = vunpack.c.l.b16 %v317
      %v455 = vunpack.c.l.b16 %v318
      %v456 = vunpack.c.l.b16 %v319
      %v457 = vunpack.c.l.b16 %v320
      %v458 = vunpack.c.l.b16 %v321
      %v459 = vunpack.c.l.b16 %v322
      %v460 = vunpack.c.l.b16 %v323
      %v461 = vunpack.c.l.b16 %v324
      %v462 = vunpack.c.l.b16 %v325
      %v463 = vunpack.c.l.b16 %v326
      %v464 = vunpack.c.l.b16 %v327
      %v465 = vunpack.c.l.b16 %v328
      %v466 = vunpack.c.l.b16 %v329
      %v467 = vunpack.c.l.b16 %v330
      %v468 = vunpack.c.l.b16 %v331
      %v469 = vunpack.c.l.b16 %v332
      %v470 = vunpack.c.l.b16 %v333
      %v471 = vunpack.c.l.b16 %v334
      %v472 = vunpack.c.l.b16 %v335
      %v473 = vunpack.c.l.b16 %v336
      %v474 = vunpack.c.l.b16 %v337
      %v475 = vunpack.c.l.b16 %v338
      %v476 = vunpack.c.l.b16 %v339
      %v477 = vpack.c.b16 %v418, %v417
      %v478 = vpack.c.b16 %v420, %v419
      %v479 = vpack.c.b16 %v422, %v421
      %v480 = vpack.c.b16 %v424, %v423
      %v481 = vpack.c.b16 %v426, %v425
      %v482 = vpack.c.b16 %v428, %v427
      %v483 = vpack.c.b16 %v430, %v429
      %v484 = vpack.c.b16 %v432, %v431
      %v485 = vpack.c.b16 %v434, %v433
      %v486 = vpack.c.b16 %v436, %v435
      %v487 = vpack.c.b16 %v438, %v437
      %v488 = vpack.c.b16 %v440, %v439
      %v489 = vpack.c.b16 %v442, %v441
      %v490 = vpack.c.b16 %v444, %v443
      %v491 = vpack.c.b16 %v446, %v445
      %v492 = vpack.c.b16 %v448, %v447
      %v493 = vpack.c.b16 %v450, %v449
      %v494 = vpack.c.b16 %v452, %v451
      %v495 = vpack.c.b16 %v454, %v453
      %v496 = vpack.c.b16 %v456, %v455
      %v497 = vpack.c.b16 %v458, %v457
      %v498 = vpack.c.b16 %v460, %v459
      %v499 = vpack.c.b16 %v462, %v461
      %v500 = vpack.c.b16 %v464, %v463
      %v501 = vpack.c.b16 %v466, %v465
      %v502 = vpack.c.b16 %v468, %v467
      %v503 = vpack.c.b16 %v470, %v469
      %v504 = vpack.c.b16 %v472, %v471
      %v505 = vpack.c.b16 %v474, %v473
      %v506 = vpack.c.b16 %v476, %v475
      %v553 = vunpack.c.l.b16 %v341
      %v554 = vunpack.c.l.b16 %v342
      %v555 = vunpack.c.l.b16 %v343
      %v556 = vunpack.c.l.b16 %v344
      %v557 = vunpack.c.l.b16 %v345
      %v558 = vunpack.c.l.b16 %v346
      %v559 = vunpack.c.l.b16 %v347
      %v560 = vunpack.c.l.b16 %v348
      %v561 = vunpack.c.l.b16 %v349
      %v562 = vunpack.c.l.b16 %v350
      %v563 = vunpack.c.l.b16 %v351
      %v564 = vunpack.c.l.b16 %v352
      %v565 = vunpack.c.l.b16 %v353
      %v566 = vunpack.c.l.b16 %v354
      %v567 = vunpack.c.l.b16 %v355
      %v568 = vunpack.c.l.b16 %v356
      %v569 = vpack.c.b16 %v554, %v553
      %v570 = vpack.c.b16 %v556, %v555
      %v571 = vpack.c.b16 %v558, %v557
      %v572 = vpack.c.b16 %v560, %v559
      %v573 = vpack.c.b16 %v562, %v561
      %v574 = vpack.c.b16 %v564, %v563
      %v575 = vpack.c.b16 %v566, %v565
      %v576 = vpack.c.b16 %v568, %v567
      %585 = vmatpush.bf16.msra.mxu0 %v576
      %586 = vmatpush.bf16.msra.mxu0 %v575
      %587 = vmatpush.bf16.msra.mxu0 %v574
      %588 = vmatpush.bf16.msra.mxu0 %v573
      %589 = vmatpush.bf16.msra.mxu0 %v572
      %590 = vmatpush.bf16.msra.mxu0 %v571
      %591 = vmatpush.bf16.msra.mxu0 %v570
      %592 = vmatpush.bf16.msra.mxu0 %v569
      %593 = vmatmul.bf16.gmra.mxu0 %v477
      %v594 = vpop.f32.mrf.mxu0
      %v595 = vadd.f32 0.0, %v594
      %v596 = vpop.f32.mrf.mxu0
      %v597 = vadd.f32 0.0, %v596
      %598 = vmatmul.bf16.gmra.mxu0 %v478
      %v599 = vpop.f32.mrf.mxu0
      %v600 = vadd.f32 0.0, %v599
      %v601 = vpop.f32.mrf.mxu0
      %v602 = vadd.f32 0.0, %v601
      %603 = vmatmul.bf16.gmra.mxu0 %v479
      %v604 = vpop.f32.mrf.mxu0
      %v605 = vadd.f32 0.0, %v604
      %v606 = vpop.f32.mrf.mxu0
      %v607 = vadd.f32 0.0, %v606
      %608 = vmatmul.bf16.gmra.mxu0 %v480
      %v609 = vpop.f32.mrf.mxu0
      %v610 = vadd.f32 0.0, %v609
      %v611 = vpop.f32.mrf.mxu0
      %v612 = vadd.f32 0.0, %v611
      %613 = vmatmul.bf16.gmra.mxu0 %v481
      %v614 = vpop.f32.mrf.mxu0
      %v615 = vadd.f32 0.0, %v614
      %v616 = vpop.f32.mrf.mxu0
      %v617 = vadd.f32 0.0, %v616
      %618 = vmatmul.bf16.gmra.mxu0 %v482
      %v619 = vpop.f32.mrf.mxu0
      %v620 = vadd.f32 0.0, %v619
      %v621 = vpop.f32.mrf.mxu0
      %v622 = vadd.f32 0.0, %v621
      %623 = vmatmul.bf16.gmra.mxu0 %v483
      %v624 = vpop.f32.mrf.mxu0
      %v625 = vadd.f32 0.0, %v624
      %v626 = vpop.f32.mrf.mxu0
      %v627 = vadd.f32 0.0, %v626
      %628 = vmatmul.bf16.gmra.mxu0 %v484
      %v629 = vpop.f32.mrf.mxu0
      %v630 = vadd.f32 0.0, %v629
      %v631 = vpop.f32.mrf.mxu0
      %v632 = vadd.f32 0.0, %v631
      %633 = vmatmul.bf16.gmra.mxu0 %v485
      %v634 = vpop.f32.mrf.mxu0
      %v635 = vadd.f32 0.0, %v634
      %v636 = vpop.f32.mrf.mxu0
      %v637 = vadd.f32 0.0, %v636
      %638 = vmatmul.bf16.gmra.mxu0 %v486
      %v639 = vpop.f32.mrf.mxu0
      %v640 = vadd.f32 0.0, %v639
      %v641 = vpop.f32.mrf.mxu0
      %v642 = vadd.f32 0.0, %v641
      %643 = vmatmul.bf16.gmra.mxu0 %v487
      %v644 = vpop.f32.mrf.mxu0
      %v645 = vadd.f32 0.0, %v644
      %v646 = vpop.f32.mrf.mxu0
      %v647 = vadd.f32 0.0, %v646
      %648 = vmatmul.bf16.gmra.mxu0 %v488
      %v649 = vpop.f32.mrf.mxu0
      %v650 = vadd.f32 0.0, %v649
      %v651 = vpop.f32.mrf.mxu0
      %v652 = vadd.f32 0.0, %v651
      %653 = vmatmul.bf16.gmra.mxu0 %v489
      %v654 = vpop.f32.mrf.mxu0
      %v655 = vadd.f32 0.0, %v654
      %v656 = vpop.f32.mrf.mxu0
      %v657 = vadd.f32 0.0, %v656
      %658 = vmatmul.bf16.gmra.mxu0 %v490
      %v659 = vpop.f32.mrf.mxu0
      %v660 = vadd.f32 0.0, %v659
      %v661 = vpop.f32.mrf.mxu0
      %v662 = vadd.f32 0.0, %v661
      %663 = vmatmul.bf16.gmra.mxu0 %v491
      %v664 = vpop.f32.mrf.mxu0
      %v665 = vadd.f32 0.0, %v664
      %v666 = vpop.f32.mrf.mxu0
      %v667 = vadd.f32 0.0, %v666
      %668 = vmatmul.bf16.gmra.mxu0 %v492
      %v669 = vpop.f32.mrf.mxu0
      %v670 = vadd.f32 0.0, %v669
      %v671 = vpop.f32.mrf.mxu0
      %v672 = vadd.f32 0.0, %v671
      %673 = vmatmul.bf16.gmra.mxu0 %v493
      %v674 = vpop.f32.mrf.mxu0
      %v675 = vadd.f32 0.0, %v674
      %v676 = vpop.f32.mrf.mxu0
      %v677 = vadd.f32 0.0, %v676
      %678 = vmatmul.bf16.gmra.mxu0 %v494
      %v679 = vpop.f32.mrf.mxu0
      %v680 = vadd.f32 0.0, %v679
      %v681 = vpop.f32.mrf.mxu0
      %v682 = vadd.f32 0.0, %v681
      %683 = vmatmul.bf16.gmra.mxu0 %v495
      %v684 = vpop.f32.mrf.mxu0
      %v685 = vadd.f32 0.0, %v684
      %v686 = vpop.f32.mrf.mxu0
      %v687 = vadd.f32 0.0, %v686
      %688 = vmatmul.bf16.gmra.mxu0 %v496
      %v689 = vpop.f32.mrf.mxu0
      %v690 = vadd.f32 0.0, %v689
      %v691 = vpop.f32.mrf.mxu0
      %v692 = vadd.f32 0.0, %v691
      %693 = vmatmul.bf16.gmra.mxu0 %v497
      %v694 = vpop.f32.mrf.mxu0
      %v695 = vadd.f32 0.0, %v694
      %v696 = vpop.f32.mrf.mxu0
      %v697 = vadd.f32 0.0, %v696
      %698 = vmatmul.bf16.gmra.mxu0 %v498
      %v699 = vpop.f32.mrf.mxu0
      %v700 = vadd.f32 0.0, %v699
      %v701 = vpop.f32.mrf.mxu0
      %v702 = vadd.f32 0.0, %v701
      %703 = vmatmul.bf16.gmra.mxu0 %v499
      %v704 = vpop.f32.mrf.mxu0
      %v705 = vadd.f32 0.0, %v704
      %v706 = vpop.f32.mrf.mxu0
      %v707 = vadd.f32 0.0, %v706
      %708 = vmatmul.bf16.gmra.mxu0 %v500
      %v709 = vpop.f32.mrf.mxu0
      %v710 = vadd.f32 0.0, %v709
      %v711 = vpop.f32.mrf.mxu0
      %v712 = vadd.f32 0.0, %v711
      %713 = vmatmul.bf16.gmra.mxu0 %v501
      %v714 = vpop.f32.mrf.mxu0
      %v715 = vadd.f32 0.0, %v714
      %v716 = vpop.f32.mrf.mxu0
      %v717 = vadd.f32 0.0, %v716
      %718 = vmatmul.bf16.gmra.mxu0 %v502
      %v719 = vpop.f32.mrf.mxu0
      %v720 = vadd.f32 0.0, %v719
      %v721 = vpop.f32.mrf.mxu0
      %v722 = vadd.f32 0.0, %v721
      %723 = vmatmul.bf16.gmra.mxu0 %v503
      %v724 = vpop.f32.mrf.mxu0
      %v725 = vadd.f32 0.0, %v724
      %v726 = vpop.f32.mrf.mxu0
      %v727 = vadd.f32 0.0, %v726
      %728 = vmatmul.bf16.gmra.mxu0 %v504
      %v729 = vpop.f32.mrf.mxu0
      %v730 = vadd.f32 0.0, %v729
      %v731 = vpop.f32.mrf.mxu0
      %v732 = vadd.f32 0.0, %v731
      %733 = vmatmul.bf16.gmra.mxu0 %v505
      %v734 = vpop.f32.mrf.mxu0
      %v735 = vadd.f32 0.0, %v734
      %v736 = vpop.f32.mrf.mxu0
      %v737 = vadd.f32 0.0, %v736
      %738 = vmatmul.bf16.gmra.mxu0 %v506
      %v739 = vpop.f32.mrf.mxu0
      %v740 = vadd.f32 0.0, %v739
      %v741 = vpop.f32.mrf.mxu0
      %v742 = vadd.f32 0.0, %v741
      %743 = vdwg.mxu0
      %v804 = vunpack.c.l.b16 %v199
      %v805 = vunpack.c.l.b16 %v200
      %v806 = vunpack.c.l.b16 %v201
      %v807 = vunpack.c.l.b16 %v202
      %v808 = vunpack.c.l.b16 %v203
      %v809 = vunpack.c.l.b16 %v204
      %v810 = vunpack.c.l.b16 %v205
      %v811 = vunpack.c.l.b16 %v206
      %v812 = vunpack.c.l.b16 %v207
      %v813 = vunpack.c.l.b16 %v208
      %v814 = vunpack.c.l.b16 %v209
      %v815 = vunpack.c.l.b16 %v210
      %v816 = vunpack.c.l.b16 %v211
      %v817 = vunpack.c.l.b16 %v212
      %v818 = vunpack.c.l.b16 %v213
      %v819 = vunpack.c.l.b16 %v214
      %v820 = vunpack.c.l.b16 %v215
      %v821 = vunpack.c.l.b16 %v216
      %v822 = vunpack.c.l.b16 %v217
      %v823 = vunpack.c.l.b16 %v218
      %v824 = vunpack.c.l.b16 %v219
      %v825 = vunpack.c.l.b16 %v220
      %v826 = vunpack.c.l.b16 %v221
      %v827 = vunpack.c.l.b16 %v222
      %v828 = vunpack.c.l.b16 %v223
      %v829 = vunpack.c.l.b16 %v224
      %v830 = vunpack.c.l.b16 %v225
      %v831 = vunpack.c.l.b16 %v226
      %v832 = vunpack.c.l.b16 %v227
      %v833 = vunpack.c.l.b16 %v228
      %v834 = vunpack.c.l.b16 %v229
      %v835 = vunpack.c.l.b16 %v230
      %v836 = vunpack.c.l.b16 %v231
      %v837 = vunpack.c.l.b16 %v232
      %v838 = vunpack.c.l.b16 %v233
      %v839 = vunpack.c.l.b16 %v234
      %v840 = vunpack.c.l.b16 %v235
      %v841 = vunpack.c.l.b16 %v236
      %v842 = vunpack.c.l.b16 %v237
      %v843 = vunpack.c.l.b16 %v238
      %v844 = vunpack.c.l.b16 %v239
      %v845 = vunpack.c.l.b16 %v240
      %v846 = vunpack.c.l.b16 %v241
      %v847 = vunpack.c.l.b16 %v242
      %v848 = vunpack.c.l.b16 %v243
      %v849 = vunpack.c.l.b16 %v244
      %v850 = vunpack.c.l.b16 %v245
      %v851 = vunpack.c.l.b16 %v246
      %v852 = vunpack.c.l.b16 %v247
      %v853 = vunpack.c.l.b16 %v248
      %v854 = vunpack.c.l.b16 %v249
      %v855 = vunpack.c.l.b16 %v250
      %v856 = vunpack.c.l.b16 %v251
      %v857 = vunpack.c.l.b16 %v252
      %v858 = vunpack.c.l.b16 %v253
      %v859 = vunpack.c.l.b16 %v254
      %v860 = vunpack.c.l.b16 %v255
      %v861 = vunpack.c.l.b16 %v256
      %v862 = vunpack.c.l.b16 %v257
      %v863 = vunpack.c.l.b16 %v258
      %v864 = vpack.c.b16 %v805, %v804
      %v865 = vpack.c.b16 %v807, %v806
      %v866 = vpack.c.b16 %v809, %v808
      %v867 = vpack.c.b16 %v811, %v810
      %v868 = vpack.c.b16 %v813, %v812
      %v869 = vpack.c.b16 %v815, %v814
      %v870 = vpack.c.b16 %v817, %v816
      %v871 = vpack.c.b16 %v819, %v818
      %v872 = vpack.c.b16 %v821, %v820
      %v873 = vpack.c.b16 %v823, %v822
      %v874 = vpack.c.b16 %v825, %v824
      %v875 = vpack.c.b16 %v827, %v826
      %v876 = vpack.c.b16 %v829, %v828
      %v877 = vpack.c.b16 %v831, %v830
      %v878 = vpack.c.b16 %v833, %v832
      %v879 = vpack.c.b16 %v835, %v834
      %v880 = vpack.c.b16 %v837, %v836
      %v881 = vpack.c.b16 %v839, %v838
      %v882 = vpack.c.b16 %v841, %v840
      %v883 = vpack.c.b16 %v843, %v842
      %v884 = vpack.c.b16 %v845, %v844
      %v885 = vpack.c.b16 %v847, %v846
      %v886 = vpack.c.b16 %v849, %v848
      %v887 = vpack.c.b16 %v851, %v850
      %v888 = vpack.c.b16 %v853, %v852
      %v889 = vpack.c.b16 %v855, %v854
      %v890 = vpack.c.b16 %v857, %v856
      %v891 = vpack.c.b16 %v859, %v858
      %v892 = vpack.c.b16 %v861, %v860
      %v893 = vpack.c.b16 %v863, %v862
      %v940 = vunpack.c.l.b16 %v259
      %v941 = vunpack.c.l.b16 %v260
      %v942 = vunpack.c.l.b16 %v261
      %v943 = vunpack.c.l.b16 %v262
      %v944 = vunpack.c.l.b16 %v263
      %v945 = vunpack.c.l.b16 %v264
      %v946 = vunpack.c.l.b16 %v265
      %v947 = vunpack.c.l.b16 %v266
      %v948 = vunpack.c.l.b16 %v267
      %v949 = vunpack.c.l.b16 %v268
      %v950 = vunpack.c.l.b16 %v269
      %v951 = vunpack.c.l.b16 %v270
      %v952 = vunpack.c.l.b16 %v271
      %v953 = vunpack.c.l.b16 %v272
      %v954 = vunpack.c.l.b16 %v273
      %v955 = vunpack.c.l.b16 %v274
      %v956 = vpack.c.b16 %v941, %v940
      %v957 = vpack.c.b16 %v943, %v942
      %v958 = vpack.c.b16 %v945, %v944
      %v959 = vpack.c.b16 %v947, %v946
      %v960 = vpack.c.b16 %v949, %v948
      %v961 = vpack.c.b16 %v951, %v950
      %v962 = vpack.c.b16 %v953, %v952
      %v963 = vpack.c.b16 %v955, %v954
      %972 = vmatpush.bf16.msra.mxu0 %v963
      %973 = vmatpush.bf16.msra.mxu0 %v962
      %974 = vmatpush.bf16.msra.mxu0 %v961
      %975 = vmatpush.bf16.msra.mxu0 %v960
      %976 = vmatpush.bf16.msra.mxu0 %v959
      %977 = vmatpush.bf16.msra.mxu0 %v958
      %978 = vmatpush.bf16.msra.mxu0 %v957
      %979 = vmatpush.bf16.msra.mxu0 %v956
      %980 = vmatmul.bf16.gmra.mxu0 %v864
      %v981 = vpop.f32.mrf.mxu0
      %v982 = vadd.f32 %v595, %v981
      %v983 = vpop.f32.mrf.mxu0
      %v984 = vadd.f32 %v597, %v983
      %985 = vmatmul.bf16.gmra.mxu0 %v865
      %v986 = vpop.f32.mrf.mxu0
      %v987 = vadd.f32 %v600, %v986
      %v988 = vpop.f32.mrf.mxu0
      %v989 = vadd.f32 %v602, %v988
      %990 = vmatmul.bf16.gmra.mxu0 %v866
      %v991 = vpop.f32.mrf.mxu0
      %v992 = vadd.f32 %v605, %v991
      %v993 = vpop.f32.mrf.mxu0
      %v994 = vadd.f32 %v607, %v993
      %995 = vmatmul.bf16.gmra.mxu0 %v867
      %v996 = vpop.f32.mrf.mxu0
      %v997 = vadd.f32 %v610, %v996
      %v998 = vpop.f32.mrf.mxu0
      %v999 = vadd.f32 %v612, %v998
      %1000 = vmatmul.bf16.gmra.mxu0 %v868
      %v1001 = vpop.f32.mrf.mxu0
      %v1002 = vadd.f32 %v615, %v1001
      %v1003 = vpop.f32.mrf.mxu0
      %v1004 = vadd.f32 %v617, %v1003
      %1005 = vmatmul.bf16.gmra.mxu0 %v869
      %v1006 = vpop.f32.mrf.mxu0
      %v1007 = vadd.f32 %v620, %v1006
      %v1008 = vpop.f32.mrf.mxu0
      %v1009 = vadd.f32 %v622, %v1008
      %1010 = vmatmul.bf16.gmra.mxu0 %v870
      %v1011 = vpop.f32.mrf.mxu0
      %v1012 = vadd.f32 %v625, %v1011
      %v1013 = vpop.f32.mrf.mxu0
      %v1014 = vadd.f32 %v627, %v1013
      %1015 = vmatmul.bf16.gmra.mxu0 %v871
      %v1016 = vpop.f32.mrf.mxu0
      %v1017 = vadd.f32 %v630, %v1016
      %v1018 = vpop.f32.mrf.mxu0
      %v1019 = vadd.f32 %v632, %v1018
      %1020 = vmatmul.bf16.gmra.mxu0 %v872
      %v1021 = vpop.f32.mrf.mxu0
      %v1022 = vadd.f32 %v635, %v1021
      %v1023 = vpop.f32.mrf.mxu0
      %v1024 = vadd.f32 %v637, %v1023
      %1025 = vmatmul.bf16.gmra.mxu0 %v873
      %v1026 = vpop.f32.mrf.mxu0
      %v1027 = vadd.f32 %v640, %v1026
      %v1028 = vpop.f32.mrf.mxu0
      %v1029 = vadd.f32 %v642, %v1028
      %1030 = vmatmul.bf16.gmra.mxu0 %v874
      %v1031 = vpop.f32.mrf.mxu0
      %v1032 = vadd.f32 %v645, %v1031
      %v1033 = vpop.f32.mrf.mxu0
      %v1034 = vadd.f32 %v647, %v1033
      %1035 = vmatmul.bf16.gmra.mxu0 %v875
      %v1036 = vpop.f32.mrf.mxu0
      %v1037 = vadd.f32 %v650, %v1036
      %v1038 = vpop.f32.mrf.mxu0
      %v1039 = vadd.f32 %v652, %v1038
      %1040 = vmatmul.bf16.gmra.mxu0 %v876
      %v1041 = vpop.f32.mrf.mxu0
      %v1042 = vadd.f32 %v655, %v1041
      %v1043 = vpop.f32.mrf.mxu0
      %v1044 = vadd.f32 %v657, %v1043
      %1045 = vmatmul.bf16.gmra.mxu0 %v877
      %v1046 = vpop.f32.mrf.mxu0
      %v1047 = vadd.f32 %v660, %v1046
      %v1048 = vpop.f32.mrf.mxu0
      %v1049 = vadd.f32 %v662, %v1048
      %1050 = vmatmul.bf16.gmra.mxu0 %v878
      %v1051 = vpop.f32.mrf.mxu0
      %v1052 = vadd.f32 %v665, %v1051
      %v1053 = vpop.f32.mrf.mxu0
      %v1054 = vadd.f32 %v667, %v1053
      %1055 = vmatmul.bf16.gmra.mxu0 %v879
      %v1056 = vpop.f32.mrf.mxu0
      %v1057 = vadd.f32 %v670, %v1056
      %v1058 = vpop.f32.mrf.mxu0
      %v1059 = vadd.f32 %v672, %v1058
      %1060 = vmatmul.bf16.gmra.mxu0 %v880
      %v1061 = vpop.f32.mrf.mxu0
      %v1062 = vadd.f32 %v675, %v1061
      %v1063 = vpop.f32.mrf.mxu0
      %v1064 = vadd.f32 %v677, %v1063
      %1065 = vmatmul.bf16.gmra.mxu0 %v881
      %v1066 = vpop.f32.mrf.mxu0
      %v1067 = vadd.f32 %v680, %v1066
      %v1068 = vpop.f32.mrf.mxu0
      %v1069 = vadd.f32 %v682, %v1068
      %1070 = vmatmul.bf16.gmra.mxu0 %v882
      %v1071 = vpop.f32.mrf.mxu0
      %v1072 = vadd.f32 %v685, %v1071
      %v1073 = vpop.f32.mrf.mxu0
      %v1074 = vadd.f32 %v687, %v1073
      %1075 = vmatmul.bf16.gmra.mxu0 %v883
      %v1076 = vpop.f32.mrf.mxu0
      %v1077 = vadd.f32 %v690, %v1076
      %v1078 = vpop.f32.mrf.mxu0
      %v1079 = vadd.f32 %v692, %v1078
      %1080 = vmatmul.bf16.gmra.mxu0 %v884
      %v1081 = vpop.f32.mrf.mxu0
      %v1082 = vadd.f32 %v695, %v1081
      %v1083 = vpop.f32.mrf.mxu0
      %v1084 = vadd.f32 %v697, %v1083
      %1085 = vmatmul.bf16.gmra.mxu0 %v885
      %v1086 = vpop.f32.mrf.mxu0
      %v1087 = vadd.f32 %v700, %v1086
      %v1088 = vpop.f32.mrf.mxu0
      %v1089 = vadd.f32 %v702, %v1088
      %1090 = vmatmul.bf16.gmra.mxu0 %v886
      %v1091 = vpop.f32.mrf.mxu0
      %v1092 = vadd.f32 %v705, %v1091
      %v1093 = vpop.f32.mrf.mxu0
      %v1094 = vadd.f32 %v707, %v1093
      %1095 = vmatmul.bf16.gmra.mxu0 %v887
      %v1096 = vpop.f32.mrf.mxu0
      %v1097 = vadd.f32 %v710, %v1096
      %v1098 = vpop.f32.mrf.mxu0
      %v1099 = vadd.f32 %v712, %v1098
      %1100 = vmatmul.bf16.gmra.mxu0 %v888
      %v1101 = vpop.f32.mrf.mxu0
      %v1102 = vadd.f32 %v715, %v1101
      %v1103 = vpop.f32.mrf.mxu0
      %v1104 = vadd.f32 %v717, %v1103
      %1105 = vmatmul.bf16.gmra.mxu0 %v889
      %v1106 = vpop.f32.mrf.mxu0
      %v1107 = vadd.f32 %v720, %v1106
      %v1108 = vpop.f32.mrf.mxu0
      %v1109 = vadd.f32 %v722, %v1108
      %1110 = vmatmul.bf16.gmra.mxu0 %v890
      %v1111 = vpop.f32.mrf.mxu0
      %v1112 = vadd.f32 %v725, %v1111
      %v1113 = vpop.f32.mrf.mxu0
      %v1114 = vadd.f32 %v727, %v1113
      %1115 = vmatmul.bf16.gmra.mxu0 %v891
      %v1116 = vpop.f32.mrf.mxu0
      %v1117 = vadd.f32 %v730, %v1116
      %v1118 = vpop.f32.mrf.mxu0
      %v1119 = vadd.f32 %v732, %v1118
      %1120 = vmatmul.bf16.gmra.mxu0 %v892
      %v1121 = vpop.f32.mrf.mxu0
      %v1122 = vadd.f32 %v735, %v1121
      %v1123 = vpop.f32.mrf.mxu0
      %v1124 = vadd.f32 %v737, %v1123
      %1125 = vmatmul.bf16.gmra.mxu0 %v893
      %v1126 = vpop.f32.mrf.mxu0
      %v1127 = vadd.f32 %v740, %v1126
      %v1128 = vpop.f32.mrf.mxu0
      %v1129 = vadd.f32 %v742, %v1128
      %1130 = vdwg.mxu0
      %s1131 = sadd.s32 %s194, 48
      %s1132 = sshra.s32 %s1131, 3
      %s1133 = sand.u32 %s1131, 7
      %s1134 = smul.addr %s1132, 4
      %s1135 = scalar_lea.vmem %s183, %s1134
      %v1136 = vld [vmem:[%s1135] sm:$0xf]
      %v1137 = vld [vmem:[%s1135 + $0x4] sm:$0xf]
      %v1138 = vld [vmem:[%s1135 + $0x8] sm:$0xf]
      %v1139 = vld [vmem:[%s1135 + $0xc] sm:$0xf]
      %v1140 = vld [vmem:[%s1135 + $0x10] sm:$0xf]
      %v1141 = vld [vmem:[%s1135 + $0x14] sm:$0xf]
      %v1142 = vld [vmem:[%s1135 + $0x18] sm:$0xf]
      %v1143 = vld [vmem:[%s1135 + $0x1c] sm:$0xf]
      %v1144 = vld [vmem:[%s1135 + $0x20] sm:$0xf]
      %v1145 = vld [vmem:[%s1135 + $0x24] sm:$0xf]
      %v1146 = vld [vmem:[%s1135 + $0x28] sm:$0xf]
      %v1147 = vld [vmem:[%s1135 + $0x2c] sm:$0xf]
      %v1148 = vld [vmem:[%s1135 + $0x30] sm:$0xf]
      %v1149 = vld [vmem:[%s1135 + $0x34] sm:$0xf]
      %v1150 = vld [vmem:[%s1135 + $0x38] sm:$0xf]
      %v1151 = vld [vmem:[%s1135 + $0x3c] sm:$0xf]
      %v1152 = vld [vmem:[%s1135 + $0x40] sm:$0xf]
      %v1153 = vld [vmem:[%s1135 + $0x44] sm:$0xf]
      %v1154 = vld [vmem:[%s1135 + $0x48] sm:$0xf]
      %v1155 = vld [vmem:[%s1135 + $0x4c] sm:$0xf]
      %v1156 = vld [vmem:[%s1135 + $0x50] sm:$0xf]
      %v1157 = vld [vmem:[%s1135 + $0x54] sm:$0xf]
      %v1158 = vld [vmem:[%s1135 + $0x58] sm:$0xf]
      %v1159 = vld [vmem:[%s1135 + $0x5c] sm:$0xf]
      %v1160 = vld [vmem:[%s1135 + $0x60] sm:$0xf]
      %v1161 = vld [vmem:[%s1135 + $0x64] sm:$0xf]
      %v1162 = vld [vmem:[%s1135 + $0x68] sm:$0xf]
      %v1163 = vld [vmem:[%s1135 + $0x6c] sm:$0xf]
      %v1164 = vld [vmem:[%s1135 + $0x70] sm:$0xf]
      %v1165 = vld [vmem:[%s1135 + $0x74] sm:$0xf]
      %v1166 = vld [vmem:[%s1135 + $0x78] sm:$0xf]
      %v1167 = vld [vmem:[%s1135 + $0x7c] sm:$0xf]
      %v1168 = vld [vmem:[%s1135 + $0x80] sm:$0xf]
      %v1169 = vld [vmem:[%s1135 + $0x84] sm:$0xf]
      %v1170 = vld [vmem:[%s1135 + $0x88] sm:$0xf]
      %v1171 = vld [vmem:[%s1135 + $0x8c] sm:$0xf]
      %v1172 = vld [vmem:[%s1135 + $0x90] sm:$0xf]
      %v1173 = vld [vmem:[%s1135 + $0x94] sm:$0xf]
      %v1174 = vld [vmem:[%s1135 + $0x98] sm:$0xf]
      %v1175 = vld [vmem:[%s1135 + $0x9c] sm:$0xf]
      %v1176 = vld [vmem:[%s1135 + $0xa0] sm:$0xf]
      %v1177 = vld [vmem:[%s1135 + $0xa4] sm:$0xf]
      %v1178 = vld [vmem:[%s1135 + $0xa8] sm:$0xf]
      %v1179 = vld [vmem:[%s1135 + $0xac] sm:$0xf]
      %v1180 = vld [vmem:[%s1135 + $0xb0] sm:$0xf]
      %v1181 = vld [vmem:[%s1135 + $0xb4] sm:$0xf]
      %v1182 = vld [vmem:[%s1135 + $0xb8] sm:$0xf]
      %v1183 = vld [vmem:[%s1135 + $0xbc] sm:$0xf]
      %v1184 = vld [vmem:[%s1135 + $0xc0] sm:$0xf]
      %v1185 = vld [vmem:[%s1135 + $0xc4] sm:$0xf]
      %v1186 = vld [vmem:[%s1135 + $0xc8] sm:$0xf]
      %v1187 = vld [vmem:[%s1135 + $0xcc] sm:$0xf]
      %v1188 = vld [vmem:[%s1135 + $0xd0] sm:$0xf]
      %v1189 = vld [vmem:[%s1135 + $0xd4] sm:$0xf]
      %v1190 = vld [vmem:[%s1135 + $0xd8] sm:$0xf]
      %v1191 = vld [vmem:[%s1135 + $0xdc] sm:$0xf]
      %v1192 = vld [vmem:[%s1135 + $0xe0] sm:$0xf]
      %v1193 = vld [vmem:[%s1135 + $0xe4] sm:$0xf]
      %v1194 = vld [vmem:[%s1135 + $0xe8] sm:$0xf]
      %v1195 = vld [vmem:[%s1135 + $0xec] sm:$0xf]
      %s1196 = scalar_lea.vmem %s1, 128
      %v1197 = vld [vmem:[%s1196] sm:$0xf]
      %v1198 = vld [vmem:[%s1196 + $0x4] sm:$0xf]
      %v1199 = vld [vmem:[%s1196 + $0x8] sm:$0xf]
      %v1200 = vld [vmem:[%s1196 + $0xc] sm:$0xf]
      %v1201 = vld [vmem:[%s1196 + $0x10] sm:$0xf]
      %v1202 = vld [vmem:[%s1196 + $0x14] sm:$0xf]
      %v1203 = vld [vmem:[%s1196 + $0x18] sm:$0xf]
      %v1204 = vld [vmem:[%s1196 + $0x1c] sm:$0xf]
      %v1205 = vld [vmem:[%s1196 + $0x20] sm:$0xf]
      %v1206 = vld [vmem:[%s1196 + $0x24] sm:$0xf]
      %v1207 = vld [vmem:[%s1196 + $0x28] sm:$0xf]
      %v1208 = vld [vmem:[%s1196 + $0x2c] sm:$0xf]
      %v1209 = vld [vmem:[%s1196 + $0x30] sm:$0xf]
      %v1210 = vld [vmem:[%s1196 + $0x34] sm:$0xf]
      %v1211 = vld [vmem:[%s1196 + $0x38] sm:$0xf]
      %v1212 = vld [vmem:[%s1196 + $0x3c] sm:$0xf]
      %v1273 = vunpack.c.l.b16 %v1136
      %v1274 = vunpack.c.l.b16 %v1137
      %v1275 = vunpack.c.l.b16 %v1138
      %v1276 = vunpack.c.l.b16 %v1139
      %v1277 = vunpack.c.l.b16 %v1140
      %v1278 = vunpack.c.l.b16 %v1141
      %v1279 = vunpack.c.l.b16 %v1142
      %v1280 = vunpack.c.l.b16 %v1143
      %v1281 = vunpack.c.l.b16 %v1144
      %v1282 = vunpack.c.l.b16 %v1145
      %v1283 = vunpack.c.l.b16 %v1146
      %v1284 = vunpack.c.l.b16 %v1147
      %v1285 = vunpack.c.l.b16 %v1148
      %v1286 = vunpack.c.l.b16 %v1149
      %v1287 = vunpack.c.l.b16 %v1150
      %v1288 = vunpack.c.l.b16 %v1151
      %v1289 = vunpack.c.l.b16 %v1152
      %v1290 = vunpack.c.l.b16 %v1153
      %v1291 = vunpack.c.l.b16 %v1154
      %v1292 = vunpack.c.l.b16 %v1155
      %v1293 = vunpack.c.l.b16 %v1156
      %v1294 = vunpack.c.l.b16 %v1157
      %v1295 = vunpack.c.l.b16 %v1158
      %v1296 = vunpack.c.l.b16 %v1159
      %v1297 = vunpack.c.l.b16 %v1160
      %v1298 = vunpack.c.l.b16 %v1161
      %v1299 = vunpack.c.l.b16 %v1162
      %v1300 = vunpack.c.l.b16 %v1163
      %v1301 = vunpack.c.l.b16 %v1164
      %v1302 = vunpack.c.l.b16 %v1165
      %v1303 = vunpack.c.l.b16 %v1166
      %v1304 = vunpack.c.l.b16 %v1167
      %v1305 = vunpack.c.l.b16 %v1168
      %v1306 = vunpack.c.l.b16 %v1169
      %v1307 = vunpack.c.l.b16 %v1170
      %v1308 = vunpack.c.l.b16 %v1171
      %v1309 = vunpack.c.l.b16 %v1172
      %v1310 = vunpack.c.l.b16 %v1173
      %v1311 = vunpack.c.l.b16 %v1174
      %v1312 = vunpack.c.l.b16 %v1175
      %v1313 = vunpack.c.l.b16 %v1176
      %v1314 = vunpack.c.l.b16 %v1177
      %v1315 = vunpack.c.l.b16 %v1178
      %v1316 = vunpack.c.l.b16 %v1179
      %v1317 = vunpack.c.l.b16 %v1180
      %v1318 = vunpack.c.l.b16 %v1181
      %v1319 = vunpack.c.l.b16 %v1182
      %v1320 = vunpack.c.l.b16 %v1183
      %v1321 = vunpack.c.l.b16 %v1184
      %v1322 = vunpack.c.l.b16 %v1185
      %v1323 = vunpack.c.l.b16 %v1186
      %v1324 = vunpack.c.l.b16 %v1187
      %v1325 = vunpack.c.l.b16 %v1188
      %v1326 = vunpack.c.l.b16 %v1189
      %v1327 = vunpack.c.l.b16 %v1190
      %v1328 = vunpack.c.l.b16 %v1191
      %v1329 = vunpack.c.l.b16 %v1192
      %v1330 = vunpack.c.l.b16 %v1193
      %v1331 = vunpack.c.l.b16 %v1194
      %v1332 = vunpack.c.l.b16 %v1195
      %v1333 = vpack.c.b16 %v1274, %v1273
      %v1334 = vpack.c.b16 %v1276, %v1275
      %v1335 = vpack.c.b16 %v1278, %v1277
      %v1336 = vpack.c.b16 %v1280, %v1279
      %v1337 = vpack.c.b16 %v1282, %v1281
      %v1338 = vpack.c.b16 %v1284, %v1283
      %v1339 = vpack.c.b16 %v1286, %v1285
      %v1340 = vpack.c.b16 %v1288, %v1287
      %v1341 = vpack.c.b16 %v1290, %v1289
      %v1342 = vpack.c.b16 %v1292, %v1291
      %v1343 = vpack.c.b16 %v1294, %v1293
      %v1344 = vpack.c.b16 %v1296, %v1295
      %v1345 = vpack.c.b16 %v1298, %v1297
      %v1346 = vpack.c.b16 %v1300, %v1299
      %v1347 = vpack.c.b16 %v1302, %v1301
      %v1348 = vpack.c.b16 %v1304, %v1303
      %v1349 = vpack.c.b16 %v1306, %v1305
      %v1350 = vpack.c.b16 %v1308, %v1307
      %v1351 = vpack.c.b16 %v1310, %v1309
      %v1352 = vpack.c.b16 %v1312, %v1311
      %v1353 = vpack.c.b16 %v1314, %v1313
      %v1354 = vpack.c.b16 %v1316, %v1315
      %v1355 = vpack.c.b16 %v1318, %v1317
      %v1356 = vpack.c.b16 %v1320, %v1319
      %v1357 = vpack.c.b16 %v1322, %v1321
      %v1358 = vpack.c.b16 %v1324, %v1323
      %v1359 = vpack.c.b16 %v1326, %v1325
      %v1360 = vpack.c.b16 %v1328, %v1327
      %v1361 = vpack.c.b16 %v1330, %v1329
      %v1362 = vpack.c.b16 %v1332, %v1331
      %v1409 = vunpack.c.l.b16 %v1197
      %v1410 = vunpack.c.l.b16 %v1198
      %v1411 = vunpack.c.l.b16 %v1199
      %v1412 = vunpack.c.l.b16 %v1200
      %v1413 = vunpack.c.l.b16 %v1201
      %v1414 = vunpack.c.l.b16 %v1202
      %v1415 = vunpack.c.l.b16 %v1203
      %v1416 = vunpack.c.l.b16 %v1204
      %v1417 = vunpack.c.l.b16 %v1205
      %v1418 = vunpack.c.l.b16 %v1206
      %v1419 = vunpack.c.l.b16 %v1207
      %v1420 = vunpack.c.l.b16 %v1208
      %v1421 = vunpack.c.l.b16 %v1209
      %v1422 = vunpack.c.l.b16 %v1210
      %v1423 = vunpack.c.l.b16 %v1211
      %v1424 = vunpack.c.l.b16 %v1212
      %v1425 = vpack.c.b16 %v1410, %v1409
      %v1426 = vpack.c.b16 %v1412, %v1411
      %v1427 = vpack.c.b16 %v1414, %v1413
      %v1428 = vpack.c.b16 %v1416, %v1415
      %v1429 = vpack.c.b16 %v1418, %v1417
      %v1430 = vpack.c.b16 %v1420, %v1419
      %v1431 = vpack.c.b16 %v1422, %v1421
      %v1432 = vpack.c.b16 %v1424, %v1423
      %1441 = vmatpush.bf16.msra.mxu0 %v1432
      %1442 = vmatpush.bf16.msra.mxu0 %v1431
      %1443 = vmatpush.bf16.msra.mxu0 %v1430
      %1444 = vmatpush.bf16.msra.mxu0 %v1429
      %1445 = vmatpush.bf16.msra.mxu0 %v1428
      %1446 = vmatpush.bf16.msra.mxu0 %v1427
      %1447 = vmatpush.bf16.msra.mxu0 %v1426
      %1448 = vmatpush.bf16.msra.mxu0 %v1425
      %1449 = vmatmul.bf16.gmra.mxu0 %v1333
      %v1450 = vpop.f32.mrf.mxu0
      %v1451 = vadd.f32 0.0, %v1450
      %v1452 = vpop.f32.mrf.mxu0
      %v1453 = vadd.f32 0.0, %v1452
      %1454 = vmatmul.bf16.gmra.mxu0 %v1334
      %v1455 = vpop.f32.mrf.mxu0
      %v1456 = vadd.f32 0.0, %v1455
      %v1457 = vpop.f32.mrf.mxu0
      %v1458 = vadd.f32 0.0, %v1457
      %1459 = vmatmul.bf16.gmra.mxu0 %v1335
      %v1460 = vpop.f32.mrf.mxu0
      %v1461 = vadd.f32 0.0, %v1460
      %v1462 = vpop.f32.mrf.mxu0
      %v1463 = vadd.f32 0.0, %v1462
      %1464 = vmatmul.bf16.gmra.mxu0 %v1336
      %v1465 = vpop.f32.mrf.mxu0
      %v1466 = vadd.f32 0.0, %v1465
      %v1467 = vpop.f32.mrf.mxu0
      %v1468 = vadd.f32 0.0, %v1467
      %1469 = vmatmul.bf16.gmra.mxu0 %v1337
      %v1470 = vpop.f32.mrf.mxu0
      %v1471 = vadd.f32 0.0, %v1470
      %v1472 = vpop.f32.mrf.mxu0
      %v1473 = vadd.f32 0.0, %v1472
      %1474 = vmatmul.bf16.gmra.mxu0 %v1338
      %v1475 = vpop.f32.mrf.mxu0
      %v1476 = vadd.f32 0.0, %v1475
      %v1477 = vpop.f32.mrf.mxu0
      %v1478 = vadd.f32 0.0, %v1477
      %1479 = vmatmul.bf16.gmra.mxu0 %v1339
      %v1480 = vpop.f32.mrf.mxu0
      %v1481 = vadd.f32 0.0, %v1480
      %v1482 = vpop.f32.mrf.mxu0
      %v1483 = vadd.f32 0.0, %v1482
      %1484 = vmatmul.bf16.gmra.mxu0 %v1340
      %v1485 = vpop.f32.mrf.mxu0
      %v1486 = vadd.f32 0.0, %v1485
      %v1487 = vpop.f32.mrf.mxu0
      %v1488 = vadd.f32 0.0, %v1487
      %1489 = vmatmul.bf16.gmra.mxu0 %v1341
      %v1490 = vpop.f32.mrf.mxu0
      %v1491 = vadd.f32 0.0, %v1490
      %v1492 = vpop.f32.mrf.mxu0
      %v1493 = vadd.f32 0.0, %v1492
      %1494 = vmatmul.bf16.gmra.mxu0 %v1342
      %v1495 = vpop.f32.mrf.mxu0
      %v1496 = vadd.f32 0.0, %v1495
      %v1497 = vpop.f32.mrf.mxu0
      %v1498 = vadd.f32 0.0, %v1497
      %1499 = vmatmul.bf16.gmra.mxu0 %v1343
      %v1500 = vpop.f32.mrf.mxu0
      %v1501 = vadd.f32 0.0, %v1500
      %v1502 = vpop.f32.mrf.mxu0
      %v1503 = vadd.f32 0.0, %v1502
      %1504 = vmatmul.bf16.gmra.mxu0 %v1344
      %v1505 = vpop.f32.mrf.mxu0
      %v1506 = vadd.f32 0.0, %v1505
      %v1507 = vpop.f32.mrf.mxu0
      %v1508 = vadd.f32 0.0, %v1507
      %1509 = vmatmul.bf16.gmra.mxu0 %v1345
      %v1510 = vpop.f32.mrf.mxu0
      %v1511 = vadd.f32 0.0, %v1510
      %v1512 = vpop.f32.mrf.mxu0
      %v1513 = vadd.f32 0.0, %v1512
      %1514 = vmatmul.bf16.gmra.mxu0 %v1346
      %v1515 = vpop.f32.mrf.mxu0
      %v1516 = vadd.f32 0.0, %v1515
      %v1517 = vpop.f32.mrf.mxu0
      %v1518 = vadd.f32 0.0, %v1517
      %1519 = vmatmul.bf16.gmra.mxu0 %v1347
      %v1520 = vpop.f32.mrf.mxu0
      %v1521 = vadd.f32 0.0, %v1520
      %v1522 = vpop.f32.mrf.mxu0
      %v1523 = vadd.f32 0.0, %v1522
      %1524 = vmatmul.bf16.gmra.mxu0 %v1348
      %v1525 = vpop.f32.mrf.mxu0
      %v1526 = vadd.f32 0.0, %v1525
      %v1527 = vpop.f32.mrf.mxu0
      %v1528 = vadd.f32 0.0, %v1527
      %1529 = vmatmul.bf16.gmra.mxu0 %v1349
      %v1530 = vpop.f32.mrf.mxu0
      %v1531 = vadd.f32 0.0, %v1530
      %v1532 = vpop.f32.mrf.mxu0
      %v1533 = vadd.f32 0.0, %v1532
      %1534 = vmatmul.bf16.gmra.mxu0 %v1350
      %v1535 = vpop.f32.mrf.mxu0
      %v1536 = vadd.f32 0.0, %v1535
      %v1537 = vpop.f32.mrf.mxu0
      %v1538 = vadd.f32 0.0, %v1537
      %1539 = vmatmul.bf16.gmra.mxu0 %v1351
      %v1540 = vpop.f32.mrf.mxu0
      %v1541 = vadd.f32 0.0, %v1540
      %v1542 = vpop.f32.mrf.mxu0
      %v1543 = vadd.f32 0.0, %v1542
      %1544 = vmatmul.bf16.gmra.mxu0 %v1352
      %v1545 = vpop.f32.mrf.mxu0
      %v1546 = vadd.f32 0.0, %v1545
      %v1547 = vpop.f32.mrf.mxu0
      %v1548 = vadd.f32 0.0, %v1547
      %1549 = vmatmul.bf16.gmra.mxu0 %v1353
      %v1550 = vpop.f32.mrf.mxu0
      %v1551 = vadd.f32 0.0, %v1550
      %v1552 = vpop.f32.mrf.mxu0
      %v1553 = vadd.f32 0.0, %v1552
      %1554 = vmatmul.bf16.gmra.mxu0 %v1354
      %v1555 = vpop.f32.mrf.mxu0
      %v1556 = vadd.f32 0.0, %v1555
      %v1557 = vpop.f32.mrf.mxu0
      %v1558 = vadd.f32 0.0, %v1557
      %1559 = vmatmul.bf16.gmra.mxu0 %v1355
      %v1560 = vpop.f32.mrf.mxu0
      %v1561 = vadd.f32 0.0, %v1560
      %v1562 = vpop.f32.mrf.mxu0
      %v1563 = vadd.f32 0.0, %v1562
      %1564 = vmatmul.bf16.gmra.mxu0 %v1356
      %v1565 = vpop.f32.mrf.mxu0
      %v1566 = vadd.f32 0.0, %v1565
      %v1567 = vpop.f32.mrf.mxu0
      %v1568 = vadd.f32 0.0, %v1567
      %1569 = vmatmul.bf16.gmra.mxu0 %v1357
      %v1570 = vpop.f32.mrf.mxu0
      %v1571 = vadd.f32 0.0, %v1570
      %v1572 = vpop.f32.mrf.mxu0
      %v1573 = vadd.f32 0.0, %v1572
      %1574 = vmatmul.bf16.gmra.mxu0 %v1358
      %v1575 = vpop.f32.mrf.mxu0
      %v1576 = vadd.f32 0.0, %v1575
      %v1577 = vpop.f32.mrf.mxu0
      %v1578 = vadd.f32 0.0, %v1577
      %1579 = vmatmul.bf16.gmra.mxu0 %v1359
      %v1580 = vpop.f32.mrf.mxu0
      %v1581 = vadd.f32 0.0, %v1580
      %v1582 = vpop.f32.mrf.mxu0
      %v1583 = vadd.f32 0.0, %v1582
      %1584 = vmatmul.bf16.gmra.mxu0 %v1360
      %v1585 = vpop.f32.mrf.mxu0
      %v1586 = vadd.f32 0.0, %v1585
      %v1587 = vpop.f32.mrf.mxu0
      %v1588 = vadd.f32 0.0, %v1587
      %1589 = vmatmul.bf16.gmra.mxu0 %v1361
      %v1590 = vpop.f32.mrf.mxu0
      %v1591 = vadd.f32 0.0, %v1590
      %v1592 = vpop.f32.mrf.mxu0
      %v1593 = vadd.f32 0.0, %v1592
      %1594 = vmatmul.bf16.gmra.mxu0 %v1362
      %v1595 = vpop.f32.mrf.mxu0
      %v1596 = vadd.f32 0.0, %v1595
      %v1597 = vpop.f32.mrf.mxu0
      %v1598 = vadd.f32 0.0, %v1597
      %1599 = vdwg.mxu0
      %v1600 = vadd.f32 %v982, %v1451
      %v1601 = vadd.f32 %v984, %v1453
      %v1602 = vadd.f32 %v987, %v1456
      %v1603 = vadd.f32 %v989, %v1458
      %v1604 = vadd.f32 %v992, %v1461
      %v1605 = vadd.f32 %v994, %v1463
      %v1606 = vadd.f32 %v997, %v1466
      %v1607 = vadd.f32 %v999, %v1468
      %v1608 = vadd.f32 %v1002, %v1471
      %v1609 = vadd.f32 %v1004, %v1473
      %v1610 = vadd.f32 %v1007, %v1476
      %v1611 = vadd.f32 %v1009, %v1478
      %v1612 = vadd.f32 %v1012, %v1481
      %v1613 = vadd.f32 %v1014, %v1483
      %v1614 = vadd.f32 %v1017, %v1486
      %v1615 = vadd.f32 %v1019, %v1488
      %v1616 = vadd.f32 %v1022, %v1491
      %v1617 = vadd.f32 %v1024, %v1493
      %v1618 = vadd.f32 %v1027, %v1496
      %v1619 = vadd.f32 %v1029, %v1498
      %v1620 = vadd.f32 %v1032, %v1501
      %v1621 = vadd.f32 %v1034, %v1503
      %v1622 = vadd.f32 %v1037, %v1506
      %v1623 = vadd.f32 %v1039, %v1508
      %v1624 = vadd.f32 %v1042, %v1511
      %v1625 = vadd.f32 %v1044, %v1513
      %v1626 = vadd.f32 %v1047, %v1516
      %v1627 = vadd.f32 %v1049, %v1518
      %v1628 = vadd.f32 %v1052, %v1521
      %v1629 = vadd.f32 %v1054, %v1523
      %v1630 = vadd.f32 %v1057, %v1526
      %v1631 = vadd.f32 %v1059, %v1528
      %v1632 = vadd.f32 %v1062, %v1531
      %v1633 = vadd.f32 %v1064, %v1533
      %v1634 = vadd.f32 %v1067, %v1536
      %v1635 = vadd.f32 %v1069, %v1538
      %v1636 = vadd.f32 %v1072, %v1541
      %v1637 = vadd.f32 %v1074, %v1543
      %v1638 = vadd.f32 %v1077, %v1546
      %v1639 = vadd.f32 %v1079, %v1548
      %v1640 = vadd.f32 %v1082, %v1551
      %v1641 = vadd.f32 %v1084, %v1553
      %v1642 = vadd.f32 %v1087, %v1556
      %v1643 = vadd.f32 %v1089, %v1558
      %v1644 = vadd.f32 %v1092, %v1561
      %v1645 = vadd.f32 %v1094, %v1563
      %v1646 = vadd.f32 %v1097, %v1566
      %v1647 = vadd.f32 %v1099, %v1568
      %v1648 = vadd.f32 %v1102, %v1571
      %v1649 = vadd.f32 %v1104, %v1573
      %v1650 = vadd.f32 %v1107, %v1576
      %v1651 = vadd.f32 %v1109, %v1578
      %v1652 = vadd.f32 %v1112, %v1581
      %v1653 = vadd.f32 %v1114, %v1583
      %v1654 = vadd.f32 %v1117, %v1586
      %v1655 = vadd.f32 %v1119, %v1588
      %v1656 = vadd.f32 %v1122, %v1591
      %v1657 = vadd.f32 %v1124, %v1593
      %v1658 = vadd.f32 %v1127, %v1596
      %v1659 = vadd.f32 %v1129, %v1598
      %v1660 = vld [vmem:[%s2] sm:$0x1]
      %v1661 = vperm.slane %v1660, 0
      %v1662 = vmul.f32 %v1600, %v1661
      %v1663 = vmul.f32 %v1601, %v1661
      %v1664 = vmul.f32 %v1602, %v1661
      %v1665 = vmul.f32 %v1603, %v1661
      %v1666 = vmul.f32 %v1604, %v1661
      %v1667 = vmul.f32 %v1605, %v1661
      %v1668 = vmul.f32 %v1606, %v1661
      %v1669 = vmul.f32 %v1607, %v1661
      %v1670 = vmul.f32 %v1608, %v1661
      %v1671 = vmul.f32 %v1609, %v1661
      %v1672 = vmul.f32 %v1610, %v1661
      %v1673 = vmul.f32 %v1611, %v1661
      %v1674 = vmul.f32 %v1612, %v1661
      %v1675 = vmul.f32 %v1613, %v1661
      %v1676 = vmul.f32 %v1614, %v1661
      %v1677 = vmul.f32 %v1615, %v1661
      %v1678 = vmul.f32 %v1616, %v1661
      %v1679 = vmul.f32 %v1617, %v1661
      %v1680 = vmul.f32 %v1618, %v1661
      %v1681 = vmul.f32 %v1619, %v1661
      %v1682 = vmul.f32 %v1620, %v1661
      %v1683 = vmul.f32 %v1621, %v1661
      %v1684 = vmul.f32 %v1622, %v1661
      %v1685 = vmul.f32 %v1623, %v1661
      %v1686 = vmul.f32 %v1624, %v1661
      %v1687 = vmul.f32 %v1625, %v1661
      %v1688 = vmul.f32 %v1626, %v1661
      %v1689 = vmul.f32 %v1627, %v1661
      %v1690 = vmul.f32 %v1628, %v1661
      %v1691 = vmul.f32 %v1629, %v1661
      %v1692 = vmul.f32 %v1630, %v1661
      %v1693 = vmul.f32 %v1631, %v1661
      %v1694 = vmul.f32 %v1632, %v1661
      %v1695 = vmul.f32 %v1633, %v1661
      %v1696 = vmul.f32 %v1634, %v1661
      %v1697 = vmul.f32 %v1635, %v1661
      %v1698 = vmul.f32 %v1636, %v1661
      %v1699 = vmul.f32 %v1637, %v1661
      %v1700 = vmul.f32 %v1638, %v1661
      %v1701 = vmul.f32 %v1639, %v1661
      %v1702 = vmul.f32 %v1640, %v1661
      %v1703 = vmul.f32 %v1641, %v1661
      %v1704 = vmul.f32 %v1642, %v1661
      %v1705 = vmul.f32 %v1643, %v1661
      %v1706 = vmul.f32 %v1644, %v1661
      %v1707 = vmul.f32 %v1645, %v1661
      %v1708 = vmul.f32 %v1646, %v1661
      %v1709 = vmul.f32 %v1647, %v1661
      %v1710 = vmul.f32 %v1648, %v1661
      %v1711 = vmul.f32 %v1649, %v1661
      %v1712 = vmul.f32 %v1650, %v1661
      %v1713 = vmul.f32 %v1651, %v1661
      %v1714 = vmul.f32 %v1652, %v1661
      %v1715 = vmul.f32 %v1653, %v1661
      %v1716 = vmul.f32 %v1654, %v1661
      %v1717 = vmul.f32 %v1655, %v1661
      %v1718 = vmul.f32 %v1656, %v1661
      %v1719 = vmul.f32 %v1657, %v1661
      %v1720 = vmul.f32 %v1658, %v1661
      %v1721 = vmul.f32 %v1659, %v1661
      %v1722 = vld [vmem:[%s2 + $0x1] sm:$0x1]
      %v1723 = vperm.slane %v1722, 0
      %v1724 = vadd.f32 %v1662, %v1723
      %v1725 = vadd.f32 %v1663, %v1723
      %v1726 = vadd.f32 %v1664, %v1723
      %v1727 = vadd.f32 %v1665, %v1723
      %v1728 = vadd.f32 %v1666, %v1723
      %v1729 = vadd.f32 %v1667, %v1723
      %v1730 = vadd.f32 %v1668, %v1723
      %v1731 = vadd.f32 %v1669, %v1723
      %v1732 = vadd.f32 %v1670, %v1723
      %v1733 = vadd.f32 %v1671, %v1723
      %v1734 = vadd.f32 %v1672, %v1723
      %v1735 = vadd.f32 %v1673, %v1723
      %v1736 = vadd.f32 %v1674, %v1723
      %v1737 = vadd.f32 %v1675, %v1723
      %v1738 = vadd.f32 %v1676, %v1723
      %v1739 = vadd.f32 %v1677, %v1723
      %v1740 = vadd.f32 %v1678, %v1723
      %v1741 = vadd.f32 %v1679, %v1723
      %v1742 = vadd.f32 %v1680, %v1723
      %v1743 = vadd.f32 %v1681, %v1723
      %v1744 = vadd.f32 %v1682, %v1723
      %v1745 = vadd.f32 %v1683, %v1723
      %v1746 = vadd.f32 %v1684, %v1723
      %v1747 = vadd.f32 %v1685, %v1723
      %v1748 = vadd.f32 %v1686, %v1723
      %v1749 = vadd.f32 %v1687, %v1723
      %v1750 = vadd.f32 %v1688, %v1723
      %v1751 = vadd.f32 %v1689, %v1723
      %v1752 = vadd.f32 %v1690, %v1723
      %v1753 = vadd.f32 %v1691, %v1723
      %v1754 = vadd.f32 %v1692, %v1723
      %v1755 = vadd.f32 %v1693, %v1723
      %v1756 = vadd.f32 %v1694, %v1723
      %v1757 = vadd.f32 %v1695, %v1723
      %v1758 = vadd.f32 %v1696, %v1723
      %v1759 = vadd.f32 %v1697, %v1723
      %v1760 = vadd.f32 %v1698, %v1723
      %v1761 = vadd.f32 %v1699, %v1723
      %v1762 = vadd.f32 %v1700, %v1723
      %v1763 = vadd.f32 %v1701, %v1723
      %v1764 = vadd.f32 %v1702, %v1723
      %v1765 = vadd.f32 %v1703, %v1723
      %v1766 = vadd.f32 %v1704, %v1723
      %v1767 = vadd.f32 %v1705, %v1723
      %v1768 = vadd.f32 %v1706, %v1723
      %v1769 = vadd.f32 %v1707, %v1723
      %v1770 = vadd.f32 %v1708, %v1723
      %v1771 = vadd.f32 %v1709, %v1723
      %v1772 = vadd.f32 %v1710, %v1723
      %v1773 = vadd.f32 %v1711, %v1723
      %v1774 = vadd.f32 %v1712, %v1723
      %v1775 = vadd.f32 %v1713, %v1723
      %v1776 = vadd.f32 %v1714, %v1723
      %v1777 = vadd.f32 %v1715, %v1723
      %v1778 = vadd.f32 %v1716, %v1723
      %v1779 = vadd.f32 %v1717, %v1723
      %v1780 = vadd.f32 %v1718, %v1723
      %v1781 = vadd.f32 %v1719, %v1723
      %v1782 = vadd.f32 %v1720, %v1723
      %v1783 = vadd.f32 %v1721, %v1723
      %v1784 = vtanh.pop %v1724
      %v1785 = vtanh.pop %v1725
      %v1786 = vtanh.pop %v1726
      %v1787 = vtanh.pop %v1727
      %v1788 = vtanh.pop %v1728
      %v1789 = vtanh.pop %v1729
      %v1790 = vtanh.pop %v1730
      %v1791 = vtanh.pop %v1731
      %v1792 = vtanh.pop %v1732
      %v1793 = vtanh.pop %v1733
      %v1794 = vtanh.pop %v1734
      %v1795 = vtanh.pop %v1735
      %v1796 = vtanh.pop %v1736
      %v1797 = vtanh.pop %v1737
      %v1798 = vtanh.pop %v1738
      %v1799 = vtanh.pop %v1739
      %v1800 = vtanh.pop %v1740
      %v1801 = vtanh.pop %v1741
      %v1802 = vtanh.pop %v1742
      %v1803 = vtanh.pop %v1743
      %v1804 = vtanh.pop %v1744
      %v1805 = vtanh.pop %v1745
      %v1806 = vtanh.pop %v1746
      %v1807 = vtanh.pop %v1747
      %v1808 = vtanh.pop %v1748
      %v1809 = vtanh.pop %v1749
      %v1810 = vtanh.pop %v1750
      %v1811 = vtanh.pop %v1751
      %v1812 = vtanh.pop %v1752
      %v1813 = vtanh.pop %v1753
      %v1814 = vtanh.pop %v1754
      %v1815 = vtanh.pop %v1755
      %v1816 = vtanh.pop %v1756
      %v1817 = vtanh.pop %v1757
      %v1818 = vtanh.pop %v1758
      %v1819 = vtanh.pop %v1759
      %v1820 = vtanh.pop %v1760
      %v1821 = vtanh.pop %v1761
      %v1822 = vtanh.pop %v1762
      %v1823 = vtanh.pop %v1763
      %v1824 = vtanh.pop %v1764
      %v1825 = vtanh.pop %v1765
      %v1826 = vtanh.pop %v1766
      %v1827 = vtanh.pop %v1767
      %v1828 = vtanh.pop %v1768
      %v1829 = vtanh.pop %v1769
      %v1830 = vtanh.pop %v1770
      %v1831 = vtanh.pop %v1771
      %v1832 = vtanh.pop %v1772
      %v1833 = vtanh.pop %v1773
      %v1834 = vtanh.pop %v1774
      %v1835 = vtanh.pop %v1775
      %v1836 = vtanh.pop %v1776
      %v1837 = vtanh.pop %v1777
      %v1838 = vtanh.pop %v1778
      %v1839 = vtanh.pop %v1779
      %v1840 = vtanh.pop %v1780
      %v1841 = vtanh.pop %v1781
      %v1842 = vtanh.pop %v1782
      %v1843 = vtanh.pop %v1783
      %v1844 = vpack.c.bf16 %v1784, %v1784
      %v1845 = vpack.c.bf16 %v1785, %v1785
      %v1846 = vpack.c.bf16 %v1786, %v1786
      %v1847 = vpack.c.bf16 %v1787, %v1787
      %v1848 = vpack.c.bf16 %v1788, %v1788
      %v1849 = vpack.c.bf16 %v1789, %v1789
      %v1850 = vpack.c.bf16 %v1790, %v1790
      %v1851 = vpack.c.bf16 %v1791, %v1791
      %v1852 = vpack.c.bf16 %v1792, %v1792
      %v1853 = vpack.c.bf16 %v1793, %v1793
      %v1854 = vpack.c.bf16 %v1794, %v1794
      %v1855 = vpack.c.bf16 %v1795, %v1795
      %v1856 = vpack.c.bf16 %v1796, %v1796
      %v1857 = vpack.c.bf16 %v1797, %v1797
      %v1858 = vpack.c.bf16 %v1798, %v1798
      %v1859 = vpack.c.bf16 %v1799, %v1799
      %v1860 = vpack.c.bf16 %v1800, %v1800
      %v1861 = vpack.c.bf16 %v1801, %v1801
      %v1862 = vpack.c.bf16 %v1802, %v1802
      %v1863 = vpack.c.bf16 %v1803, %v1803
      %v1864 = vpack.c.bf16 %v1804, %v1804
      %v1865 = vpack.c.bf16 %v1805, %v1805
      %v1866 = vpack.c.bf16 %v1806, %v1806
      %v1867 = vpack.c.bf16 %v1807, %v1807
      %v1868 = vpack.c.bf16 %v1808, %v1808
      %v1869 = vpack.c.bf16 %v1809, %v1809
      %v1870 = vpack.c.bf16 %v1810, %v1810
      %v1871 = vpack.c.bf16 %v1811, %v1811
      %v1872 = vpack.c.bf16 %v1812, %v1812
      %v1873 = vpack.c.bf16 %v1813, %v1813
      %v1874 = vpack.c.bf16 %v1814, %v1814
      %v1875 = vpack.c.bf16 %v1815, %v1815
      %v1876 = vpack.c.bf16 %v1816, %v1816
      %v1877 = vpack.c.bf16 %v1817, %v1817
      %v1878 = vpack.c.bf16 %v1818, %v1818
      %v1879 = vpack.c.bf16 %v1819, %v1819
      %v1880 = vpack.c.bf16 %v1820, %v1820
      %v1881 = vpack.c.bf16 %v1821, %v1821
      %v1882 = vpack.c.bf16 %v1822, %v1822
      %v1883 = vpack.c.bf16 %v1823, %v1823
      %v1884 = vpack.c.bf16 %v1824, %v1824
      %v1885 = vpack.c.bf16 %v1825, %v1825
      %v1886 = vpack.c.bf16 %v1826, %v1826
      %v1887 = vpack.c.bf16 %v1827, %v1827
      %v1888 = vpack.c.bf16 %v1828, %v1828
      %v1889 = vpack.c.bf16 %v1829, %v1829
      %v1890 = vpack.c.bf16 %v1830, %v1830
      %v1891 = vpack.c.bf16 %v1831, %v1831
      %v1892 = vpack.c.bf16 %v1832, %v1832
      %v1893 = vpack.c.bf16 %v1833, %v1833
      %v1894 = vpack.c.bf16 %v1834, %v1834
      %v1895 = vpack.c.bf16 %v1835, %v1835
      %v1896 = vpack.c.bf16 %v1836, %v1836
      %v1897 = vpack.c.bf16 %v1837, %v1837
      %v1898 = vpack.c.bf16 %v1838, %v1838
      %v1899 = vpack.c.bf16 %v1839, %v1839
      %v1900 = vpack.c.bf16 %v1840, %v1840
      %v1901 = vpack.c.bf16 %v1841, %v1841
      %v1902 = vpack.c.bf16 %v1842, %v1842
      %v1903 = vpack.c.bf16 %v1843, %v1843
      %1904 = vst [vmem:[%s192] sm:$0xf] %v1844
      %1905 = vst [vmem:[%s192 + $0x4] sm:$0xf] %v1845
      %1906 = vst [vmem:[%s192 + $0x8] sm:$0xf] %v1846
      %1907 = vst [vmem:[%s192 + $0xc] sm:$0xf] %v1847
      %1908 = vst [vmem:[%s192 + $0x10] sm:$0xf] %v1848
      %1909 = vst [vmem:[%s192 + $0x14] sm:$0xf] %v1849
      %1910 = vst [vmem:[%s192 + $0x18] sm:$0xf] %v1850
      %1911 = vst [vmem:[%s192 + $0x1c] sm:$0xf] %v1851
      %1912 = vst [vmem:[%s192 + $0x20] sm:$0xf] %v1852
      %1913 = vst [vmem:[%s192 + $0x24] sm:$0xf] %v1853
      %1914 = vst [vmem:[%s192 + $0x28] sm:$0xf] %v1854
      %1915 = vst [vmem:[%s192 + $0x2c] sm:$0xf] %v1855
      %1916 = vst [vmem:[%s192 + $0x30] sm:$0xf] %v1856
      %1917 = vst [vmem:[%s192 + $0x34] sm:$0xf] %v1857
      %1918 = vst [vmem:[%s192 + $0x38] sm:$0xf] %v1858
      %1919 = vst [vmem:[%s192 + $0x3c] sm:$0xf] %v1859
      %1920 = vst [vmem:[%s192 + $0x40] sm:$0xf] %v1860
      %1921 = vst [vmem:[%s192 + $0x44] sm:$0xf] %v1861
      %1922 = vst [vmem:[%s192 + $0x48] sm:$0xf] %v1862
      %1923 = vst [vmem:[%s192 + $0x4c] sm:$0xf] %v1863
      %1924 = vst [vmem:[%s192 + $0x50] sm:$0xf] %v1864
      %1925 = vst [vmem:[%s192 + $0x54] sm:$0xf] %v1865
      %1926 = vst [vmem:[%s192 + $0x58] sm:$0xf] %v1866
      %1927 = vst [vmem:[%s192 + $0x5c] sm:$0xf] %v1867
      %1928 = vst [vmem:[%s192 + $0x60] sm:$0xf] %v1868
      %1929 = vst [vmem:[%s192 + $0x64] sm:$0xf] %v1869
      %1930 = vst [vmem:[%s192 + $0x68] sm:$0xf] %v1870
      %1931 = vst [vmem:[%s192 + $0x6c] sm:$0xf] %v1871
      %1932 = vst [vmem:[%s192 + $0x70] sm:$0xf] %v1872
      %1933 = vst [vmem:[%s192 + $0x74] sm:$0xf] %v1873
      %1934 = vst [vmem:[%s192 + $0x78] sm:$0xf] %v1874
      %1935 = vst [vmem:[%s192 + $0x7c] sm:$0xf] %v1875
      %1936 = vst [vmem:[%s192 + $0x80] sm:$0xf] %v1876
      %1937 = vst [vmem:[%s192 + $0x84] sm:$0xf] %v1877
      %1938 = vst [vmem:[%s192 + $0x88] sm:$0xf] %v1878
      %1939 = vst [vmem:[%s192 + $0x8c] sm:$0xf] %v1879
      %1940 = vst [vmem:[%s192 + $0x90] sm:$0xf] %v1880
      %1941 = vst [vmem:[%s192 + $0x94] sm:$0xf] %v1881
      %1942 = vst [vmem:[%s192 + $0x98] sm:$0xf] %v1882
      %1943 = vst [vmem:[%s192 + $0x9c] sm:$0xf] %v1883
      %1944 = vst [vmem:[%s192 + $0xa0] sm:$0xf] %v1884
      %1945 = vst [vmem:[%s192 + $0xa4] sm:$0xf] %v1885
      %1946 = vst [vmem:[%s192 + $0xa8] sm:$0xf] %v1886
      %1947 = vst [vmem:[%s192 + $0xac] sm:$0xf] %v1887
      %1948 = vst [vmem:[%s192 + $0xb0] sm:$0xf] %v1888
      %1949 = vst [vmem:[%s192 + $0xb4] sm:$0xf] %v1889
      %1950 = vst [vmem:[%s192 + $0xb8] sm:$0xf] %v1890
      %1951 = vst [vmem:[%s192 + $0xbc] sm:$0xf] %v1891
      %1952 = vst [vmem:[%s192 + $0xc0] sm:$0xf] %v1892
      %1953 = vst [vmem:[%s192 + $0xc4] sm:$0xf] %v1893
      %1954 = vst [vmem:[%s192 + $0xc8] sm:$0xf] %v1894
      %1955 = vst [vmem:[%s192 + $0xcc] sm:$0xf] %v1895
      %1956 = vst [vmem:[%s192 + $0xd0] sm:$0xf] %v1896
      %1957 = vst [vmem:[%s192 + $0xd4] sm:$0xf] %v1897
      %1958 = vst [vmem:[%s192 + $0xd8] sm:$0xf] %v1898
      %1959 = vst [vmem:[%s192 + $0xdc] sm:$0xf] %v1899
      %1960 = vst [vmem:[%s192 + $0xe0] sm:$0xf] %v1900
      %1961 = vst [vmem:[%s192 + $0xe4] sm:$0xf] %v1901
      %1962 = vst [vmem:[%s192 + $0xe8] sm:$0xf] %v1902
      %1963 = vst [vmem:[%s192 + $0xec] sm:$0xf] %v1903
      %s1964 = smul.u32 60, %s19
      %p1965 = scmp.lt.s32.totalorder %s18, 1
      %s1966 = scalar_select %p1965, %s18, 1
      %p1967 = scmp.lt.s32.totalorder %s1964, 59
      %s1968 = scalar_select %p1967, %s1964, 59
      %s1969 = smul.addr %s1966, 60
      %s1970 = sadd.s32 %s1968, %s1969
      %s1971 = smul.addr %s1970, 4
      %s1972 = scalar_lea.vmem %s3, %s1971
      // Predicated region
      $region33: #{generator_forward.5} parent=31 // pred_check
        %p1973 = pneg %p114
      $region34: #{generator_forward.5} parent=31 // pred_check_branch
        %1975 = sbr.rel (%p1973) target = $region36
      $region35: #{generator_forward.5} parent=31 // pred_region
        %s1976 = smul.u32 60, %s19
      $region36: #{generator_forward.5} parent=31 // pred_fallthru
        _
    $region32: #{generator_forward.5} parent=5 // pred_fallthru
      _
    %p1977 = scmp.le.s32.totalorder 2, %s9
    // Predicated region
    $region37: #{generator_forward.5} parent=5 // pred_check
      %p1978 = pneg %p1977
    $region38: #{generator_forward.5} parent=5 // pred_check_branch
      %1980 = sbr.rel (%p1978) target = $region40
    $region39: #{generator_forward.5} parent=5 // pred_region
      %s1981 = ssub.s32 %s9, 2
      // Predicated region
      $region41: #{generator_forward.5} parent=39 // pred_check
        %p1982 = pneg %p120
      $region42: #{generator_forward.5} parent=39 // pred_check_branch
        %1984 = sbr.rel (%p1982) target = $region44
      $region43: #{generator_forward.5} parent=39 // pred_region
        %s1985 = smul.u32 60, %s21
        %p1986 = scmp.lt.s32.totalorder %s20, 1
        %s1987 = scalar_select %p1986, %s20, 1
        %p1988 = scmp.lt.s32.totalorder %s1985, 59
        %s1989 = scalar_select %p1988, %s1985, 59
        %s1990 = smul.addr %s1987, 60
        %s1991 = sadd.s32 %s1989, %s1990
        %s1992 = smul.addr %s1991, 4
        %s1993 = scalar_lea.vmem %s3, %s1992
      $region44: #{generator_forward.5} parent=39 // pred_fallthru
        _
    $region40: #{generator_forward.5} parent=5 // pred_fallthru
      _
  $region6: #{generator_forward.5} parent=0 // loop_footer
    %s13 = sadd.s32 1, %s9
  $region7: #{generator_forward.5} parent=0 // loop_footer_branch
    %8 = sbr.rel target = $region3
  $region8: #{generator_forward.5} parent=0 // loop_exit
    _

</llo_original>
